<compile_context>
chip_gen: v5e
topology: v5e:2x2
jax: 0.10.0
libtpu: 0.0.40
codegen_flags: <defaults>
</compile_context>

<pallas_src>
import functools
import math

import jax
import jax.numpy as jnp
from jax.experimental import pallas as pl
from jax.experimental.pallas import tpu as pltpu


def _rms_norm(x, g, eps=1e-5):
    # x: (T, D) f32, g: (1, D) f32
    ms = jnp.mean(x * x, axis=-1, keepdims=True)
    return g * (x * jax.lax.rsqrt(ms + eps))


def encoder_kernel(
    xq_ref,      # (1, TS, D) f32   query-row tile (residual path)
    xf_ref,      # (1, S, D)  bf16  full sequence (K/V source), fetched once/row
    wq_ref,      # (D, Dm)    bf16  1/sqrt(dh) pre-folded
    bq_ref,      # (1, Dm)    f32   1/sqrt(dh) pre-folded
    wkv_ref,     # (D, 2*Dm)  bf16  [Wk | Wv]
    bkv_ref,     # (1, 2*Dm)  f32
    wo_ref,      # (Dm, D)    bf16
    bo_ref,      # (1, D)     f32
    g1_ref,      # (1, D)     f32
    w13_ref,     # (D, 2*Dh)  bf16  [w1 | w3]
    w2_ref,      # (Dh, D)    bf16
    g2_ref,      # (1, D)     f32
    o_ref,       # (1, TS, D)
    k_sc,        # (H, S, dh) bf16  scratch: per-batch-row K cache
    v_sc,        # (H, S, dh) bf16  scratch: per-batch-row V cache
    *, head_num, dim_head, kv_chunk,
):
    f32, bf16 = jnp.float32, jnp.bfloat16
    H, dh = head_num, dim_head
    Dm = H * dh
    S = xf_ref.shape[1]
    TS = xq_ref.shape[1]
    Dh = w2_ref.shape[0]
    TK = kv_chunk
    n_kc = S // TK

    # ---- K/V projection + head split: once per batch row -------------------
    # (the seq grid axis is "arbitrary", so s runs 0..n_qt-1 sequentially per
    #  batch row and the scratch caches persist across those iterations)
    @pl.when(pl.program_id(1) == 0)
    def _compute_kv():
        xf = xf_ref[0]                                                   # (S, D) bf16
        kv = (jnp.dot(xf, wkv_ref[...], preferred_element_type=f32)
              + bkv_ref[...]).astype(bf16)                               # (S, 2*Dm)
        # Static lane slices into head-major scratch, done once per row
        # (128-aligned -> cheap when dh is a multiple of 128 in real configs).
        for h in range(H):
            k_sc[h] = kv[:, h * dh:(h + 1) * dh]
            v_sc[h] = kv[:, Dm + h * dh:Dm + (h + 1) * dh]

    # ---- Q projection (softmax scale already folded into wq/bq) ------------
    xq = xq_ref[0]                                                       # (TS, D) f32
    q = jnp.dot(xq.astype(bf16), wq_ref[...],
                preferred_element_type=f32) + bq_ref[...]                # (TS, Dm)
    q3 = jnp.stack([q[:, h * dh:(h + 1) * dh] for h in range(H)],
                   axis=0).astype(bf16)                                  # (H, TS, dh)

    # ---- K-chunked online softmax (flash-style running m / l / acc) --------
    def attn_step(kc, vc, m, l, acc):
        s = jnp.einsum("hqd,hkd->hqk", q3, kc,
                       preferred_element_type=f32)                       # (H, TS, TK)
        m_new = jnp.maximum(m, jnp.max(s, axis=-1, keepdims=True))
        alpha = jnp.exp(m - m_new)
        # TODO(synk): on v6e/v7x a bf16 exp (bf16 EUP) would ~halve EUP time.
        p = jnp.exp(s - m_new)
        l_new = alpha * l + jnp.sum(p, axis=-1, keepdims=True)
        acc_new = alpha * acc + jnp.einsum("hqk,hkd->hqd", p.astype(bf16), vc,
                                           preferred_element_type=f32)
        return m_new, l_new, acc_new

    m0 = jnp.full((H, TS, 1), -jnp.inf, f32)
    l0 = jnp.zeros((H, TS, 1), f32)
    a0 = jnp.zeros((H, TS, dh), f32)
    if n_kc == 1:
        _, l_f, acc = attn_step(k_sc[...], v_sc[...], m0, l0, a0)
    else:
        def body(c, carry):
            start = pl.multiple_of(c * TK, TK)
            kc = k_sc[:, pl.ds(start, TK), :]
            vc = v_sc[:, pl.ds(start, TK), :]
            return attn_step(kc, vc, *carry)
        _, l_f, acc = jax.lax.fori_loop(0, n_kc, body, (m0, l0, a0))

    ctx = acc * pl.reciprocal(l_f, approx=True)                          # (H, TS, dh)

    # ---- Output projection: concat heads along lanes, one Dm-wide matmul ----
    ctx_c = jnp.concatenate([ctx[h] for h in range(H)], axis=-1).astype(bf16)
    d0 = jnp.dot(ctx_c, wo_ref[...], preferred_element_type=f32) + bo_ref[...]

    # ---- residual + RMSNorm 1 (f32) -----------------------------------------
    d1 = _rms_norm(xq + d0, g1_ref[...])

    # ---- SwiGLU FFN: fused w1|w3 matmul, elementwise math in f32 -------------
    h13 = jnp.dot(d1.astype(bf16), w13_ref[...], preferred_element_type=f32)
    h1 = h13[:, :Dh]
    h3 = h13[:, Dh:]
    hmid = (h1 * jax.nn.sigmoid(h1)) * h3
    d2 = jnp.dot(hmid.astype(bf16), w2_ref[...], preferred_element_type=f32)

    # ---- residual + RMSNorm 2 (f32) -----------------------------------------
    o_ref[0] = _rms_norm(d1 + d2, g2_ref[...]).astype(o_ref.dtype)


def encoder_forward(x, params, *, head_num, dim_head, seq_tile=None, kv_chunk=None):
    B, S, D = x.shape
    H, dh = head_num, dim_head
    Dm = H * dh
    (wq, bq, wk, bk, wv, bv, wo, bo, g1, w1, w3, w2, g2) = params
    Dh = w2.shape[0]

    f32, bf16 = jnp.float32, jnp.bfloat16
    scale = 1.0 / math.sqrt(dh)

    # Wrapper-side weight prep: fused K|V and w1|w3 weights, bf16 MXU operands,
    # softmax scale folded into the Q projection weight + bias.
    wq_b = (wq * scale).astype(bf16)                          # (D, Dm)
    bq_f = (bq * scale).astype(f32)                           # (1, Dm)
    wkv_b = jnp.concatenate([wk, wv], axis=1).astype(bf16)    # (D, 2*Dm)
    bkv_f = jnp.concatenate([bk, bv], axis=1).astype(f32)     # (1, 2*Dm)
    wo_b = wo.astype(bf16)                                    # (Dm, D)
    bo_f = bo.astype(f32)
    g1_f = g1.astype(f32)
    w13_b = jnp.concatenate([w1, w3], axis=1).astype(bf16)    # (D, 2*Dh)
    w2_b = w2.astype(bf16)                                    # (Dh, D)
    g2_f = g2.astype(f32)

    xf_b = x.astype(bf16)      # bf16 K/V source, cast once in the wrapper

    if seq_tile is None:
        seq_tile = min(S, 128)   # sized so the working set fits 64 MiB-class VMEM
    TS = seq_tile
    assert S % TS == 0, "sequence length must be divisible by the seq tile"
    n_qt = S // TS

    if kv_chunk is None:
        kv_chunk = S
        for c in (512, 256, 128):
            if S % c == 0:
                kv_chunk = c
                break
    assert S % kv_chunk == 0, "sequence length must be divisible by the kv chunk"

    grid = (B, n_qt)

    weight_ops = (wq_b, bq_f, wkv_b, bkv_f, wo_b, bo_f, g1_f, w13_b, w2_b, g2_f)
    weight_bytes = sum(int(a.size) * a.dtype.itemsize for a in weight_ops)

    # Physical-VMEM-aware cap (~85% leaves compiler-internal scratch headroom:
    # ~109 MiB on v5e/v6e, ~54 MiB on v7x).
    try:
        vmem_cap = int(pltpu.get_tpu_info().vmem_capacity_bytes * 0.85)
    except Exception:
        vmem_cap = 48 * 1024 * 1024

    flops = 2 * B * S * (
        D * Dm              # Q projection
        + D * 2 * Dm        # K/V projection (once per batch row)
        + 2 * H * S * dh    # scores + PV
        + Dm * D            # output projection
        + D * 2 * Dh        # w1 | w3
        + Dh * D            # w2
    )
    transcendentals = B * (H * S * S + S * Dh + 4 * S)
    bytes_accessed = int(
        x.size * x.dtype.itemsize        # query tiles, read once
        + xf_b.size * 2                  # bf16 K/V source, fetched once per row
        + x.size * x.dtype.itemsize      # output, written once
        + weight_bytes                   # weights, fetched once total
    )

    kernel = functools.partial(encoder_kernel, head_num=H, dim_head=dh,
                               kv_chunk=kv_chunk)
    operands = (x, xf_b, wq_b, bq_f, wkv_b, bkv_f, wo_b, bo_f,
                g1_f, w13_b, w2_b, g2_f)

    def run(single_buffer_consts):
        def const_spec(arr):
            nd = arr.ndim
            imap = lambda b, s, _nd=nd: (0,) * _nd
            if single_buffer_consts:
                # Block index never changes -> one buffer, no double-buffer waste.
                return pl.BlockSpec(arr.shape, imap, pipeline_mode=pl.Buffered(1))
            return pl.BlockSpec(arr.shape, imap)

        in_specs = [
            pl.BlockSpec((1, TS, D), lambda b, s: (b, s, 0)),   # f32 query tile
            pl.BlockSpec((1, S, D), lambda b, s: (b, 0, 0)),    # bf16 K/V source
            const_spec(wq_b), const_spec(bq_f),
            const_spec(wkv_b), const_spec(bkv_f),
            const_spec(wo_b), const_spec(bo_f),
            const_spec(g1_f),
            const_spec(w13_b), const_spec(w2_b),
            const_spec(g2_f),
        ]
        out_spec = pl.BlockSpec((1, TS, D), lambda b, s: (b, s, 0))

        wfac = 1 if single_buffer_consts else 2
        vmem_est = (
            wfac * weight_bytes
            + 2 * (TS * D * 4) * 2          # xq tile + output tile (double-buffered)
            + 2 * (S * D * 2)               # bf16 K/V source (double-buffered)
            + 2 * (H * S * dh * 2)          # K/V scratch caches
            + 4 * (3 * TS * Dm              # q / q3 / concat-heads ctx
                   + 2 * H * TS * kv_chunk  # score + prob chunk
                   + 2 * H * TS * dh        # running acc / ctx
                   + S * 2 * Dm             # K/V projection value (s == 0)
                   + 2 * TS * 2 * Dh        # h13 + hmid
                   + 6 * TS * D)            # d0/d1/d2/residual/output math
            + (4 << 20)                     # headroom
        )
        vmem_limit = int(min(max(vmem_est, 16 * 1024 * 1024), vmem_cap))

        return pl.pallas_call(
            kernel,
            out_shape=jax.ShapeDtypeStruct((B, S, D), x.dtype),
            grid_spec=pltpu.PrefetchScalarGridSpec(
                num_scalar_prefetch=0,
                grid=grid,
                in_specs=in_specs,
                out_specs=out_spec,
                scratch_shapes=[
                    pltpu.VMEM((H, S, dh), bf16),   # K cache (per batch row)
                    pltpu.VMEM((H, S, dh), bf16),   # V cache (per batch row)
                ],
            ),
            compiler_params=pltpu.CompilerParams(
                # Seq axis MUST be "arbitrary": the K/V scratch written at s==0
                # is reused by later s iterations of the same batch row.
                dimension_semantics=("parallel", "arbitrary"),
                vmem_limit_bytes=vmem_limit,
            ),
            cost_estimate=pl.CostEstimate(
                flops=int(flops),
                transcendentals=int(transcendentals),
                bytes_accessed=bytes_accessed,
            ),
        )(*operands)

    try:
        return run(True)
    except Exception:
        # Fallback for jax builds that reject pipeline_mode=pl.Buffered(1).
        return run(False)


def encoder_reference(x, params, *, head_num, dim_head):
    """Pure-JAX f32 reference mirroring the PyTorch module semantics."""
    (wq, bq, wk, bk, wv, bv, wo, bo, g1, w1, w3, w2, g2) = params
    B, S, D = x.shape
    dh = dim_head

    def rms(v, g, eps=1e-5):
        return g[0] * (v * jax.lax.rsqrt(jnp.mean(v * v, -1, keepdims=True) + eps))

    q = (x @ wq + bq[0]).reshape(B, S, head_num, dh).transpose(0, 2, 1, 3)
    k = (x @ wk + bk[0]).reshape(B, S, head_num, dh).transpose(0, 2, 1, 3)
    v = (x @ wv + bv[0]).reshape(B, S, head_num, dh).transpose(0, 2, 1, 3)
    s0 = jnp.einsum("bhqd,bhkd->bhqk", q, k) / math.sqrt(dh)
    s1 = jnp.einsum("bhqk,bhkd->bhqd", jax.nn.softmax(s0, -1), v)
    s1 = s1.transpose(0, 2, 1, 3).reshape(B, S, head_num * dh)
    d0 = s1 @ wo + bo[0]
    d1 = rms(x + d0, g1)
    d2 = (jax.nn.silu(d1 @ w1) * (d1 @ w3)) @ w2
    return rms(d1 + d2, g2)


if __name__ == "__main__":
    # Small shapes consistent with Encoder(dim_emb, dim_head, head_num)
    B, S = 2, 8
    dim_emb, dim_head, head_num = 32, 8, 4
    dim_mid = dim_head * head_num          # 32
    dim_hidden = 4 * dim_emb               # 128

    key = jax.random.PRNGKey(0)
    ks = jax.random.split(key, 16)

    def lin_w(k, din, dout):
        return jax.random.normal(k, (din, dout), jnp.float32) / math.sqrt(din)

    x = jax.random.normal(ks[0], (B, S, dim_emb), jnp.float32)

    params = (
        lin_w(ks[1], dim_emb, dim_mid),                                   # Wq
        jax.random.normal(ks[2], (1, dim_mid), jnp.float32) * 0.02,       # bq
        lin_w(ks[3], dim_emb, dim_mid),                                   # Wk
        jax.random.normal(ks[4], (1, dim_mid), jnp.float32) * 0.02,       # bk
        lin_w(ks[5], dim_emb, dim_mid),                                   # Wv
        jax.random.normal(ks[6], (1, dim_mid), jnp.float32) * 0.02,       # bv
        lin_w(ks[7], dim_mid, dim_emb),                                   # Wo
        jax.random.normal(ks[8], (1, dim_emb), jnp.float32) * 0.02,       # bo
        jnp.ones((1, dim_emb), jnp.float32),                              # rms_norm1 weight
        lin_w(ks[9], dim_emb, dim_hidden),                                # ffn w1
        lin_w(ks[10], dim_emb, dim_hidden),                               # ffn w3
        lin_w(ks[11], dim_hidden, dim_emb),                               # ffn w2
        jnp.ones((1, dim_emb), jnp.float32),                              # rms_norm2 weight
    )

    out = encoder_forward(x, params, head_num=head_num, dim_head=dim_head)
    out = jax.block_until_ready(out)

    ref = encoder_reference(x, params, head_num=head_num, dim_head=dim_head)
    assert out.shape == (B, S, dim_emb)
    # bf16 MXU operands + approx reciprocal intentionally trade a little
    # accuracy; compare against the f32 reference with a loosened tolerance.
    assert jnp.allclose(out, ref, atol=5e-2, rtol=5e-2), "mismatch vs reference"

    print("KERNEL_OK")
</pallas_src>

<mosaic_0001>
module attributes {stable_mosaic.version = 11 : i64} {
  func.func @encoder_kernel(%arg0: i32, %arg1: i32, %arg2: memref<1x8x32xf32, #tpu.memory_space<vmem>>, %arg3: memref<1x8x32xbf16, #tpu.memory_space<vmem>>, %arg4: memref<32x32xbf16, #tpu.memory_space<vmem>>, %arg5: memref<1x32xf32, #tpu.memory_space<vmem>>, %arg6: memref<32x64xbf16, #tpu.memory_space<vmem>>, %arg7: memref<1x64xf32, #tpu.memory_space<vmem>>, %arg8: memref<32x32xbf16, #tpu.memory_space<vmem>>, %arg9: memref<1x32xf32, #tpu.memory_space<vmem>>, %arg10: memref<1x32xf32, #tpu.memory_space<vmem>>, %arg11: memref<32x256xbf16, #tpu.memory_space<vmem>>, %arg12: memref<128x32xbf16, #tpu.memory_space<vmem>>, %arg13: memref<1x32xf32, #tpu.memory_space<vmem>>, %arg14: memref<1x8x32xf32, #tpu.memory_space<vmem>>, %arg15: memref<4x8x8xbf16, #tpu.memory_space<vmem>>, %arg16: memref<4x8x8xbf16, #tpu.memory_space<vmem>>) attributes {dimension_semantics = [#tpu.dimension_semantics<parallel>, #tpu.dimension_semantics<arbitrary>], iteration_bounds = array<i64: 2, 1>, scalar_prefetch = 0 : i64, scratch_operands = 2 : i64, tpu.core_type = #tpu.core_type<tc>, window_params = [{transform_indices = @transform_0, window_bounds = array<i64: 1, 8, 32>}, {transform_indices = @transform_1, window_bounds = array<i64: 1, 8, 32>}, {pipeline_mode = #tpu.pipeline_mode<synchronous>, transform_indices = @transform_2, window_bounds = array<i64: 32, 32>}, {pipeline_mode = #tpu.pipeline_mode<synchronous>, transform_indices = @transform_3, window_bounds = array<i64: 1, 32>}, {pipeline_mode = #tpu.pipeline_mode<synchronous>, transform_indices = @transform_4, window_bounds = array<i64: 32, 64>}, {pipeline_mode = #tpu.pipeline_mode<synchronous>, transform_indices = @transform_5, window_bounds = array<i64: 1, 64>}, {pipeline_mode = #tpu.pipeline_mode<synchronous>, transform_indices = @transform_6, window_bounds = array<i64: 32, 32>}, {pipeline_mode = #tpu.pipeline_mode<synchronous>, transform_indices = @transform_7, window_bounds = array<i64: 1, 32>}, {pipeline_mode = #tpu.pipeline_mode<synchronous>, transform_indices = @transform_8, window_bounds = array<i64: 1, 32>}, {pipeline_mode = #tpu.pipeline_mode<synchronous>, transform_indices = @transform_9, window_bounds = array<i64: 32, 256>}, {pipeline_mode = #tpu.pipeline_mode<synchronous>, transform_indices = @transform_10, window_bounds = array<i64: 128, 32>}, {pipeline_mode = #tpu.pipeline_mode<synchronous>, transform_indices = @transform_11, window_bounds = array<i64: 1, 32>}, {transform_indices = @transform_12, window_bounds = array<i64: 1, 8, 32>}]} {
    %c0_i32 = arith.constant 0 : i32
    %0 = arith.cmpi eq, %arg1, %c0_i32 : i32
    %1 = arith.extui %0 : i1 to i32
    %c0_i32_0 = arith.constant 0 : i32
    %2 = arith.cmpi ne, %1, %c0_i32_0 : i32
    scf.if %2 {
      %c0_45 = arith.constant 0 : index
      %c0_46 = arith.constant 0 : index
      %c0_47 = arith.constant 0 : index
      %108 = vector.load %arg3[%c0_45, %c0_46, %c0_47] : memref<1x8x32xbf16, #tpu.memory_space<vmem>>, vector<1x8x32xbf16>
      %109 = vector.shape_cast %108 : vector<1x8x32xbf16> to vector<8x32xbf16>
      %c0_48 = arith.constant 0 : index
      %c0_49 = arith.constant 0 : index
      %110 = vector.load %arg6[%c0_48, %c0_49] : memref<32x64xbf16, #tpu.memory_space<vmem>>, vector<32x64xbf16>
      %cst_50 = arith.constant dense<0.000000e+00> : vector<8x64xf32>
      %111 = tpu.matmul %109, %110, %cst_50 {dimension_numbers = #tpu.dot_dimension_numbers<[1], [0], [0], [1], [0, 0, 1, 1], [], []>} : vector<8x32xbf16>, vector<32x64xbf16>, vector<8x64xf32> -> vector<8x64xf32>
      %c0_51 = arith.constant 0 : index
      %c0_52 = arith.constant 0 : index
      %112 = vector.load %arg7[%c0_51, %c0_52] : memref<1x64xf32, #tpu.memory_space<vmem>>, vector<1x64xf32>
      %113 = vector.broadcast %112 : vector<1x64xf32> to vector<8x64xf32>
      %114 = arith.addf %111, %113 : vector<8x64xf32>
      %115 = arith.truncf %114 : vector<8x64xf32> to vector<8x64xbf16>
      %116 = vector.extract_strided_slice %115 {offsets = [0, 0], sizes = [8, 8], strides = [1, 1]} : vector<8x64xbf16> to vector<8x8xbf16>
      %c0_53 = arith.constant 0 : index
      %c0_54 = arith.constant 0 : index
      %c0_55 = arith.constant 0 : index
      %117 = vector.load %arg15[%c0_53, %c0_54, %c0_55] : memref<4x8x8xbf16, #tpu.memory_space<vmem>>, vector<1x8x8xbf16>
      %118 = vector.shape_cast %117 : vector<1x8x8xbf16> to vector<8x8xbf16>
      %119 = vector.shape_cast %116 : vector<8x8xbf16> to vector<1x8x8xbf16>
      tpu.vector_store %arg15[%c0_53, %c0_54, %c0_55], %119 {strides = array<i32>} : memref<4x8x8xbf16, #tpu.memory_space<vmem>>, vector<1x8x8xbf16>,
      %120 = vector.extract_strided_slice %115 {offsets = [0, 32], sizes = [8, 8], strides = [1, 1]} : vector<8x64xbf16> to vector<8x8xbf16>
      %c0_56 = arith.constant 0 : index
      %c0_57 = arith.constant 0 : index
      %c0_58 = arith.constant 0 : index
      %121 = vector.load %arg16[%c0_56, %c0_57, %c0_58] : memref<4x8x8xbf16, #tpu.memory_space<vmem>>, vector<1x8x8xbf16>
      %122 = vector.shape_cast %121 : vector<1x8x8xbf16> to vector<8x8xbf16>
      %123 = vector.shape_cast %120 : vector<8x8xbf16> to vector<1x8x8xbf16>
      tpu.vector_store %arg16[%c0_56, %c0_57, %c0_58], %123 {strides = array<i32>} : memref<4x8x8xbf16, #tpu.memory_space<vmem>>, vector<1x8x8xbf16>,
      %124 = vector.extract_strided_slice %115 {offsets = [0, 8], sizes = [8, 8], strides = [1, 1]} : vector<8x64xbf16> to vector<8x8xbf16>
      %c1 = arith.constant 1 : index
      %c0_59 = arith.constant 0 : index
      %c0_60 = arith.constant 0 : index
      %125 = vector.load %arg15[%c1, %c0_59, %c0_60] : memref<4x8x8xbf16, #tpu.memory_space<vmem>>, vector<1x8x8xbf16>
      %126 = vector.shape_cast %125 : vector<1x8x8xbf16> to vector<8x8xbf16>
      %127 = vector.shape_cast %124 : vector<8x8xbf16> to vector<1x8x8xbf16>
      tpu.vector_store %arg15[%c1, %c0_59, %c0_60], %127 {strides = array<i32>} : memref<4x8x8xbf16, #tpu.memory_space<vmem>>, vector<1x8x8xbf16>,
      %128 = vector.extract_strided_slice %115 {offsets = [0, 40], sizes = [8, 8], strides = [1, 1]} : vector<8x64xbf16> to vector<8x8xbf16>
      %c1_61 = arith.constant 1 : index
      %c0_62 = arith.constant 0 : index
      %c0_63 = arith.constant 0 : index
      %129 = vector.load %arg16[%c1_61, %c0_62, %c0_63] : memref<4x8x8xbf16, #tpu.memory_space<vmem>>, vector<1x8x8xbf16>
      %130 = vector.shape_cast %129 : vector<1x8x8xbf16> to vector<8x8xbf16>
      %131 = vector.shape_cast %128 : vector<8x8xbf16> to vector<1x8x8xbf16>
      tpu.vector_store %arg16[%c1_61, %c0_62, %c0_63], %131 {strides = array<i32>} : memref<4x8x8xbf16, #tpu.memory_space<vmem>>, vector<1x8x8xbf16>,
      %132 = vector.extract_strided_slice %115 {offsets = [0, 16], sizes = [8, 8], strides = [1, 1]} : vector<8x64xbf16> to vector<8x8xbf16>
      %c2 = arith.constant 2 : index
      %c0_64 = arith.constant 0 : index
      %c0_65 = arith.constant 0 : index
      %133 = vector.load %arg15[%c2, %c0_64, %c0_65] : memref<4x8x8xbf16, #tpu.memory_space<vmem>>, vector<1x8x8xbf16>
      %134 = vector.shape_cast %133 : vector<1x8x8xbf16> to vector<8x8xbf16>
      %135 = vector.shape_cast %132 : vector<8x8xbf16> to vector<1x8x8xbf16>
      tpu.vector_store %arg15[%c2, %c0_64, %c0_65], %135 {strides = array<i32>} : memref<4x8x8xbf16, #tpu.memory_space<vmem>>, vector<1x8x8xbf16>,
      %136 = vector.extract_strided_slice %115 {offsets = [0, 48], sizes = [8, 8], strides = [1, 1]} : vector<8x64xbf16> to vector<8x8xbf16>
      %c2_66 = arith.constant 2 : index
      %c0_67 = arith.constant 0 : index
      %c0_68 = arith.constant 0 : index
      %137 = vector.load %arg16[%c2_66, %c0_67, %c0_68] : memref<4x8x8xbf16, #tpu.memory_space<vmem>>, vector<1x8x8xbf16>
      %138 = vector.shape_cast %137 : vector<1x8x8xbf16> to vector<8x8xbf16>
      %139 = vector.shape_cast %136 : vector<8x8xbf16> to vector<1x8x8xbf16>
      tpu.vector_store %arg16[%c2_66, %c0_67, %c0_68], %139 {strides = array<i32>} : memref<4x8x8xbf16, #tpu.memory_space<vmem>>, vector<1x8x8xbf16>,
      %140 = vector.extract_strided_slice %115 {offsets = [0, 24], sizes = [8, 8], strides = [1, 1]} : vector<8x64xbf16> to vector<8x8xbf16>
      %c3 = arith.constant 3 : index
      %c0_69 = arith.constant 0 : index
      %c0_70 = arith.constant 0 : index
      %141 = vector.load %arg15[%c3, %c0_69, %c0_70] : memref<4x8x8xbf16, #tpu.memory_space<vmem>>, vector<1x8x8xbf16>
      %142 = vector.shape_cast %141 : vector<1x8x8xbf16> to vector<8x8xbf16>
      %143 = vector.shape_cast %140 : vector<8x8xbf16> to vector<1x8x8xbf16>
      tpu.vector_store %arg15[%c3, %c0_69, %c0_70], %143 {strides = array<i32>} : memref<4x8x8xbf16, #tpu.memory_space<vmem>>, vector<1x8x8xbf16>,
      %144 = vector.extract_strided_slice %115 {offsets = [0, 56], sizes = [8, 8], strides = [1, 1]} : vector<8x64xbf16> to vector<8x8xbf16>
      %c3_71 = arith.constant 3 : index
      %c0_72 = arith.constant 0 : index
      %c0_73 = arith.constant 0 : index
      %145 = vector.load %arg16[%c3_71, %c0_72, %c0_73] : memref<4x8x8xbf16, #tpu.memory_space<vmem>>, vector<1x8x8xbf16>
      %146 = vector.shape_cast %145 : vector<1x8x8xbf16> to vector<8x8xbf16>
      %147 = vector.shape_cast %144 : vector<8x8xbf16> to vector<1x8x8xbf16>
      tpu.vector_store %arg16[%c3_71, %c0_72, %c0_73], %147 {strides = array<i32>} : memref<4x8x8xbf16, #tpu.memory_space<vmem>>, vector<1x8x8xbf16>,
    } else {
    }
    %c0 = arith.constant 0 : index
    %c0_1 = arith.constant 0 : index
    %c0_2 = arith.constant 0 : index
    %3 = vector.load %arg2[%c0, %c0_1, %c0_2] : memref<1x8x32xf32, #tpu.memory_space<vmem>>, vector<1x8x32xf32>
    %4 = vector.shape_cast %3 : vector<1x8x32xf32> to vector<8x32xf32>
    %5 = arith.truncf %4 : vector<8x32xf32> to vector<8x32xbf16>
    %c0_3 = arith.constant 0 : index
    %c0_4 = arith.constant 0 : index
    %6 = vector.load %arg4[%c0_3, %c0_4] : memref<32x32xbf16, #tpu.memory_space<vmem>>, vector<32x32xbf16>
    %cst = arith.constant dense<0.000000e+00> : vector<8x32xf32>
    %7 = tpu.matmul %5, %6, %cst {dimension_numbers = #tpu.dot_dimension_numbers<[1], [0], [0], [1], [0, 0, 1, 1], [], []>} : vector<8x32xbf16>, vector<32x32xbf16>, vector<8x32xf32> -> vector<8x32xf32>
    %c0_5 = arith.constant 0 : index
    %c0_6 = arith.constant 0 : index
    %8 = vector.load %arg5[%c0_5, %c0_6] : memref<1x32xf32, #tpu.memory_space<vmem>>, vector<1x32xf32>
    %9 = vector.broadcast %8 : vector<1x32xf32> to vector<8x32xf32>
    %10 = arith.addf %7, %9 : vector<8x32xf32>
    %11 = vector.extract_strided_slice %10 {offsets = [0, 0], sizes = [8, 8], strides = [1, 1]} : vector<8x32xf32> to vector<8x8xf32>
    %12 = vector.extract_strided_slice %10 {offsets = [0, 8], sizes = [8, 8], strides = [1, 1]} : vector<8x32xf32> to vector<8x8xf32>
    %13 = vector.extract_strided_slice %10 {offsets = [0, 16], sizes = [8, 8], strides = [1, 1]} : vector<8x32xf32> to vector<8x8xf32>
    %14 = vector.extract_strided_slice %10 {offsets = [0, 24], sizes = [8, 8], strides = [1, 1]} : vector<8x32xf32> to vector<8x8xf32>
    %15 = vector.shape_cast %11 : vector<8x8xf32> to vector<1x8x8xf32>
    %16 = vector.shape_cast %12 : vector<8x8xf32> to vector<1x8x8xf32>
    %17 = vector.shape_cast %13 : vector<8x8xf32> to vector<1x8x8xf32>
    %18 = vector.shape_cast %14 : vector<8x8xf32> to vector<1x8x8xf32>
    %19 = tpu.concatenate %15, %16, %17, %18 in 0 : vector<1x8x8xf32>, vector<1x8x8xf32>, vector<1x8x8xf32>, vector<1x8x8xf32> -> vector<4x8x8xf32>
    %20 = arith.truncf %19 : vector<4x8x8xf32> to vector<4x8x8xbf16>
    %cst_7 = arith.constant 0xFF800000 : f32
    %21 = vector.broadcast %cst_7 : f32 to vector<4x8x1xf32>
    %cst_8 = arith.constant 0.000000e+00 : f32
    %22 = vector.broadcast %cst_8 : f32 to vector<4x8x1xf32>
    %cst_9 = arith.constant 0.000000e+00 : f32
    %23 = vector.broadcast %cst_9 : f32 to vector<4x8x8xf32>
    %c0_10 = arith.constant 0 : index
    %c0_11 = arith.constant 0 : index
    %c0_12 = arith.constant 0 : index
    %24 = vector.load %arg15[%c0_10, %c0_11, %c0_12] : memref<4x8x8xbf16, #tpu.memory_space<vmem>>, vector<4x8x8xbf16>
    %c0_13 = arith.constant 0 : index
    %c0_14 = arith.constant 0 : index
    %c0_15 = arith.constant 0 : index
    %25 = vector.load %arg16[%c0_13, %c0_14, %c0_15] : memref<4x8x8xbf16, #tpu.memory_space<vmem>>, vector<4x8x8xbf16>
    "tpu.trace_start"() <{level = 10 : i32, message = "hqd,hkd->hqk"}> : () -> ()
    %cst_16 = arith.constant dense<0.000000e+00> : vector<4x8x8xf32>
    %26 = tpu.matmul %20, %24, %cst_16 {dimension_numbers = #tpu.dot_dimension_numbers<[2], [2], [1], [1], [0, 0, 0, 1, 1, 1], [0], [0]>} : vector<4x8x8xbf16>, vector<4x8x8xbf16>, vector<4x8x8xf32> -> vector<4x8x8xf32>
    "tpu.trace_stop"() : () -> ()
    %cst_17 = arith.constant dense<0xFF800000> : vector<4x8xf32>
    %27 = vector.multi_reduction <maximumf>, %26, %cst_17 [2] : vector<4x8x8xf32> to vector<4x8xf32>
    %28 = vector.shape_cast %27 : vector<4x8xf32> to vector<4x8x1xf32>
    %29 = arith.maximumf %21, %28 : vector<4x8x1xf32>
    %30 = arith.subf %21, %29 : vector<4x8x1xf32>
    %31 = math.exp %30 : vector<4x8x1xf32>
    %32 = vector.broadcast %29 : vector<4x8x1xf32> to vector<4x8x8xf32>
    %33 = arith.subf %26, %32 : vector<4x8x8xf32>
    %34 = math.exp %33 : vector<4x8x8xf32>
    %35 = arith.mulf %31, %22 : vector<4x8x1xf32>
    %cst_18 = arith.constant dense<0.000000e+00> : vector<4x8xf32>
    %36 = vector.multi_reduction <add>, %34, %cst_18 [2] : vector<4x8x8xf32> to vector<4x8xf32>
    %37 = vector.shape_cast %36 : vector<4x8xf32> to vector<4x8x1xf32>
    %38 = arith.addf %35, %37 : vector<4x8x1xf32>
    %39 = vector.broadcast %31 : vector<4x8x1xf32> to vector<4x8x8xf32>
    %40 = arith.mulf %39, %23 : vector<4x8x8xf32>
    %41 = arith.truncf %34 : vector<4x8x8xf32> to vector<4x8x8xbf16>
    "tpu.trace_start"() <{level = 10 : i32, message = "hqk,hkd->hqd"}> : () -> ()
    %cst_19 = arith.constant dense<0.000000e+00> : vector<4x8x8xf32>
    %42 = tpu.matmul %41, %25, %cst_19 {dimension_numbers = #tpu.dot_dimension_numbers<[2], [1], [1], [2], [0, 0, 0, 1, 1, 2], [0], [0]>} : vector<4x8x8xbf16>, vector<4x8x8xbf16>, vector<4x8x8xf32> -> vector<4x8x8xf32>
    "tpu.trace_stop"() : () -> ()
    %43 = arith.addf %40, %42 : vector<4x8x8xf32>
    %44 = tpu.reciprocal %38 {approx = true} : vector<4x8x1xf32> -> vector<4x8x1xf32>
    %45 = vector.broadcast %44 : vector<4x8x1xf32> to vector<4x8x8xf32>
    %46 = arith.mulf %43, %45 : vector<4x8x8xf32>
    %47 = vector.extract_strided_slice %46 {offsets = [0, 0, 0], sizes = [1, 8, 8], strides = [1, 1, 1]} : vector<4x8x8xf32> to vector<1x8x8xf32>
    %48 = vector.shape_cast %47 : vector<1x8x8xf32> to vector<8x8xf32>
    %49 = vector.extract_strided_slice %46 {offsets = [1, 0, 0], sizes = [1, 8, 8], strides = [1, 1, 1]} : vector<4x8x8xf32> to vector<1x8x8xf32>
    %50 = vector.shape_cast %49 : vector<1x8x8xf32> to vector<8x8xf32>
    %51 = vector.extract_strided_slice %46 {offsets = [2, 0, 0], sizes = [1, 8, 8], strides = [1, 1, 1]} : vector<4x8x8xf32> to vector<1x8x8xf32>
    %52 = vector.shape_cast %51 : vector<1x8x8xf32> to vector<8x8xf32>
    %53 = vector.extract_strided_slice %46 {offsets = [3, 0, 0], sizes = [1, 8, 8], strides = [1, 1, 1]} : vector<4x8x8xf32> to vector<1x8x8xf32>
    %54 = vector.shape_cast %53 : vector<1x8x8xf32> to vector<8x8xf32>
    %55 = tpu.concatenate %48, %50, %52, %54 in 1 : vector<8x8xf32>, vector<8x8xf32>, vector<8x8xf32>, vector<8x8xf32> -> vector<8x32xf32>
    %56 = arith.truncf %55 : vector<8x32xf32> to vector<8x32xbf16>
    %c0_20 = arith.constant 0 : index
    %c0_21 = arith.constant 0 : index
    %57 = vector.load %arg8[%c0_20, %c0_21] : memref<32x32xbf16, #tpu.memory_space<vmem>>, vector<32x32xbf16>
    %cst_22 = arith.constant dense<0.000000e+00> : vector<8x32xf32>
    %58 = tpu.matmul %56, %57, %cst_22 {dimension_numbers = #tpu.dot_dimension_numbers<[1], [0], [0], [1], [0, 0, 1, 1], [], []>} : vector<8x32xbf16>, vector<32x32xbf16>, vector<8x32xf32> -> vector<8x32xf32>
    %c0_23 = arith.constant 0 : index
    %c0_24 = arith.constant 0 : index
    %59 = vector.load %arg9[%c0_23, %c0_24] : memref<1x32xf32, #tpu.memory_space<vmem>>, vector<1x32xf32>
    %60 = vector.broadcast %59 : vector<1x32xf32> to vector<8x32xf32>
    %61 = arith.addf %58, %60 : vector<8x32xf32>
    %62 = arith.addf %4, %61 : vector<8x32xf32>
    %c0_25 = arith.constant 0 : index
    %c0_26 = arith.constant 0 : index
    %63 = vector.load %arg10[%c0_25, %c0_26] : memref<1x32xf32, #tpu.memory_space<vmem>>, vector<1x32xf32>
    %64 = arith.mulf %62, %62 : vector<8x32xf32>
    %cst_27 = arith.constant dense<0.000000e+00> : vector<8xf32>
    %65 = vector.multi_reduction <add>, %64, %cst_27 [1] : vector<8x32xf32> to vector<8xf32>
    %66 = vector.shape_cast %65 : vector<8xf32> to vector<8x1xf32>
    %cst_28 = arith.constant 3.200000e+01 : f32
    %67 = vector.broadcast %cst_28 : f32 to vector<8x1xf32>
    %68 = arith.divf %66, %67 : vector<8x1xf32>
    %cst_29 = arith.constant 9.99999974E-6 : f32
    %69 = vector.broadcast %cst_29 : f32 to vector<8x1xf32>
    %70 = arith.addf %68, %69 : vector<8x1xf32>
    %71 = math.rsqrt %70 : vector<8x1xf32>
    %72 = vector.broadcast %71 : vector<8x1xf32> to vector<8x32xf32>
    %73 = arith.mulf %62, %72 : vector<8x32xf32>
    %74 = vector.broadcast %63 : vector<1x32xf32> to vector<8x32xf32>
    %75 = arith.mulf %74, %73 : vector<8x32xf32>
    %76 = arith.truncf %75 : vector<8x32xf32> to vector<8x32xbf16>
    %c0_30 = arith.constant 0 : index
    %c0_31 = arith.constant 0 : index
    %77 = vector.load %arg11[%c0_30, %c0_31] : memref<32x256xbf16, #tpu.memory_space<vmem>>, vector<32x256xbf16>
    %cst_32 = arith.constant dense<0.000000e+00> : vector<8x256xf32>
    %78 = tpu.matmul %76, %77, %cst_32 {dimension_numbers = #tpu.dot_dimension_numbers<[1], [0], [0], [1], [0, 0, 1, 1], [], []>} : vector<8x32xbf16>, vector<32x256xbf16>, vector<8x256xf32> -> vector<8x256xf32>
    %79 = vector.extract_strided_slice %78 {offsets = [0, 0], sizes = [8, 128], strides = [1, 1]} : vector<8x256xf32> to vector<8x128xf32>
    %80 = vector.extract_strided_slice %78 {offsets = [0, 128], sizes = [8, 128], strides = [1, 1]} : vector<8x256xf32> to vector<8x128xf32>
    %81 = arith.negf %79 : vector<8x128xf32>
    %82 = math.exp %81 : vector<8x128xf32>
    %cst_33 = arith.constant 1.000000e+00 : f32
    %83 = vector.broadcast %cst_33 : f32 to vector<8x128xf32>
    %84 = arith.addf %83, %82 : vector<8x128xf32>
    %85 = arith.divf %83, %84 : vector<8x128xf32>
    %86 = arith.mulf %79, %85 : vector<8x128xf32>
    %87 = arith.mulf %86, %80 : vector<8x128xf32>
    %88 = arith.truncf %87 : vector<8x128xf32> to vector<8x128xbf16>
    %c0_34 = arith.constant 0 : index
    %c0_35 = arith.constant 0 : index
    %89 = vector.load %arg12[%c0_34, %c0_35] : memref<128x32xbf16, #tpu.memory_space<vmem>>, vector<128x32xbf16>
    %cst_36 = arith.constant dense<0.000000e+00> : vector<8x32xf32>
    %90 = tpu.matmul %88, %89, %cst_36 {dimension_numbers = #tpu.dot_dimension_numbers<[1], [0], [0], [1], [0, 0, 1, 1], [], []>} : vector<8x128xbf16>, vector<128x32xbf16>, vector<8x32xf32> -> vector<8x32xf32>
    %91 = arith.addf %75, %90 : vector<8x32xf32>
    %c0_37 = arith.constant 0 : index
    %c0_38 = arith.constant 0 : index
    %92 = vector.load %arg13[%c0_37, %c0_38] : memref<1x32xf32, #tpu.memory_space<vmem>>, vector<1x32xf32>
    %93 = arith.mulf %91, %91 : vector<8x32xf32>
    %cst_39 = arith.constant dense<0.000000e+00> : vector<8xf32>
    %94 = vector.multi_reduction <add>, %93, %cst_39 [1] : vector<8x32xf32> to vector<8xf32>
    %95 = vector.shape_cast %94 : vector<8xf32> to vector<8x1xf32>
    %cst_40 = arith.constant 3.200000e+01 : f32
    %96 = vector.broadcast %cst_40 : f32 to vector<8x1xf32>
    %97 = arith.divf %95, %96 : vector<8x1xf32>
    %cst_41 = arith.constant 9.99999974E-6 : f32
    %98 = vector.broadcast %cst_41 : f32 to vector<8x1xf32>
    %99 = arith.addf %97, %98 : vector<8x1xf32>
    %100 = math.rsqrt %99 : vector<8x1xf32>
    %101 = vector.broadcast %100 : vector<8x1xf32> to vector<8x32xf32>
    %102 = arith.mulf %91, %101 : vector<8x32xf32>
    %103 = vector.broadcast %92 : vector<1x32xf32> to vector<8x32xf32>
    %104 = arith.mulf %103, %102 : vector<8x32xf32>
    %c0_42 = arith.constant 0 : index
    %c0_43 = arith.constant 0 : index
    %c0_44 = arith.constant 0 : index
    %105 = vector.load %arg14[%c0_42, %c0_43, %c0_44] : memref<1x8x32xf32, #tpu.memory_space<vmem>>, vector<1x8x32xf32>
    %106 = vector.shape_cast %105 : vector<1x8x32xf32> to vector<8x32xf32>
    %107 = vector.shape_cast %104 : vector<8x32xf32> to vector<1x8x32xf32>
    tpu.vector_store %arg14[%c0_42, %c0_43, %c0_44], %107 {strides = array<i32>} : memref<1x8x32xf32, #tpu.memory_space<vmem>>, vector<1x8x32xf32>,
    return
  }
  func.func @transform_0(%arg0: i32, %arg1: i32) -> (i32, i32, i32) {
    %c0_i32 = arith.constant 0 : i32
    %c0_i32_0 = arith.constant 0 : i32
    return %arg0, %arg1, %c0_i32 : i32, i32, i32
  }
  func.func @transform_1(%arg0: i32, %arg1: i32) -> (i32, i32, i32) {
    %c0_i32 = arith.constant 0 : i32
    %c0_i32_0 = arith.constant 0 : i32
    %c0_i32_1 = arith.constant 0 : i32
    return %arg0, %c0_i32, %c0_i32_0 : i32, i32, i32
  }
  func.func @transform_2(%arg0: i32, %arg1: i32) -> (i32, i32) {
    %c0_i32 = arith.constant 0 : i32
    %c0_i32_0 = arith.constant 0 : i32
    %c0_i32_1 = arith.constant 0 : i32
    return %c0_i32, %c0_i32_0 : i32, i32
  }
  func.func @transform_3(%arg0: i32, %arg1: i32) -> (i32, i32) {
    %c0_i32 = arith.constant 0 : i32
    %c0_i32_0 = arith.constant 0 : i32
    %c0_i32_1 = arith.constant 0 : i32
    return %c0_i32, %c0_i32_0 : i32, i32
  }
  func.func @transform_4(%arg0: i32, %arg1: i32) -> (i32, i32) {
    %c0_i32 = arith.constant 0 : i32
    %c0_i32_0 = arith.constant 0 : i32
    %c0_i32_1 = arith.constant 0 : i32
    return %c0_i32, %c0_i32_0 : i32, i32
  }
  func.func @transform_5(%arg0: i32, %arg1: i32) -> (i32, i32) {
    %c0_i32 = arith.constant 0 : i32
    %c0_i32_0 = arith.constant 0 : i32
    %c0_i32_1 = arith.constant 0 : i32
    return %c0_i32, %c0_i32_0 : i32, i32
  }
  func.func @transform_6(%arg0: i32, %arg1: i32) -> (i32, i32) {
    %c0_i32 = arith.constant 0 : i32
    %c0_i32_0 = arith.constant 0 : i32
    %c0_i32_1 = arith.constant 0 : i32
    return %c0_i32, %c0_i32_0 : i32, i32
  }
  func.func @transform_7(%arg0: i32, %arg1: i32) -> (i32, i32) {
    %c0_i32 = arith.constant 0 : i32
    %c0_i32_0 = arith.constant 0 : i32
    %c0_i32_1 = arith.constant 0 : i32
    return %c0_i32, %c0_i32_0 : i32, i32
  }
  func.func @transform_8(%arg0: i32, %arg1: i32) -> (i32, i32) {
    %c0_i32 = arith.constant 0 : i32
    %c0_i32_0 = arith.constant 0 : i32
    %c0_i32_1 = arith.constant 0 : i32
    return %c0_i32, %c0_i32_0 : i32, i32
  }
  func.func @transform_9(%arg0: i32, %arg1: i32) -> (i32, i32) {
    %c0_i32 = arith.constant 0 : i32
    %c0_i32_0 = arith.constant 0 : i32
    %c0_i32_1 = arith.constant 0 : i32
    return %c0_i32, %c0_i32_0 : i32, i32
  }
  func.func @transform_10(%arg0: i32, %arg1: i32) -> (i32, i32) {
    %c0_i32 = arith.constant 0 : i32
    %c0_i32_0 = arith.constant 0 : i32
    %c0_i32_1 = arith.constant 0 : i32
    return %c0_i32, %c0_i32_0 : i32, i32
  }
  func.func @transform_11(%arg0: i32, %arg1: i32) -> (i32, i32) {
    %c0_i32 = arith.constant 0 : i32
    %c0_i32_0 = arith.constant 0 : i32
    %c0_i32_1 = arith.constant 0 : i32
    return %c0_i32, %c0_i32_0 : i32, i32
  }
  func.func @transform_12(%arg0: i32, %arg1: i32) -> (i32, i32, i32) {
    %c0_i32 = arith.constant 0 : i32
    %c0_i32_0 = arith.constant 0 : i32
    return %arg0, %arg1, %c0_i32 : i32, i32, i32
  }
}

module attributes {stable_mosaic.version = 11 : i64} {
  func.func @encoder_kernel(%arg0: i32, %arg1: i32, %arg2: memref<1x8x32xf32, #tpu.memory_space<vmem>>, %arg3: memref<1x8x32xbf16, #tpu.memory_space<vmem>>, %arg4: memref<32x32xbf16, #tpu.memory_space<vmem>>, %arg5: memref<1x32xf32, #tpu.memory_space<vmem>>, %arg6: memref<32x64xbf16, #tpu.memory_space<vmem>>, %arg7: memref<1x64xf32, #tpu.memory_space<vmem>>, %arg8: memref<32x32xbf16, #tpu.memory_space<vmem>>, %arg9: memref<1x32xf32, #tpu.memory_space<vmem>>, %arg10: memref<1x32xf32, #tpu.memory_space<vmem>>, %arg11: memref<32x256xbf16, #tpu.memory_space<vmem>>, %arg12: memref<128x32xbf16, #tpu.memory_space<vmem>>, %arg13: memref<1x32xf32, #tpu.memory_space<vmem>>, %arg14: memref<1x8x32xf32, #tpu.memory_space<vmem>>, %arg15: memref<4x8x8xbf16, #tpu.memory_space<vmem>>, %arg16: memref<4x8x8xbf16, #tpu.memory_space<vmem>>) attributes {dimension_semantics = [#tpu.dimension_semantics<parallel>, #tpu.dimension_semantics<arbitrary>], iteration_bounds = array<i64: 2, 1>, scalar_prefetch = 0 : i64, scratch_operands = 2 : i64, tpu.core_type = #tpu.core_type<tc>, window_params = [{transform_indices = @transform_0, window_bounds = array<i64: 1, 8, 32>}, {transform_indices = @transform_1, window_bounds = array<i64: 1, 8, 32>}, {pipeline_mode = #tpu.pipeline_mode<synchronous>, transform_indices = @transform_2, window_bounds = array<i64: 32, 32>}, {pipeline_mode = #tpu.pipeline_mode<synchronous>, transform_indices = @transform_3, window_bounds = array<i64: 1, 32>}, {pipeline_mode = #tpu.pipeline_mode<synchronous>, transform_indices = @transform_4, window_bounds = array<i64: 32, 64>}, {pipeline_mode = #tpu.pipeline_mode<synchronous>, transform_indices = @transform_5, window_bounds = array<i64: 1, 64>}, {pipeline_mode = #tpu.pipeline_mode<synchronous>, transform_indices = @transform_6, window_bounds = array<i64: 32, 32>}, {pipeline_mode = #tpu.pipeline_mode<synchronous>, transform_indices = @transform_7, window_bounds = array<i64: 1, 32>}, {pipeline_mode = #tpu.pipeline_mode<synchronous>, transform_indices = @transform_8, window_bounds = array<i64: 1, 32>}, {pipeline_mode = #tpu.pipeline_mode<synchronous>, transform_indices = @transform_9, window_bounds = array<i64: 32, 256>}, {pipeline_mode = #tpu.pipeline_mode<synchronous>, transform_indices = @transform_10, window_bounds = array<i64: 128, 32>}, {pipeline_mode = #tpu.pipeline_mode<synchronous>, transform_indices = @transform_11, window_bounds = array<i64: 1, 32>}, {transform_indices = @transform_12, window_bounds = array<i64: 1, 8, 32>}]} {
    %c0_i32 = arith.constant 0 : i32
    %0 = arith.cmpi eq, %arg1, %c0_i32 : i32
    %1 = arith.extui %0 : i1 to i32
    %c0_i32_0 = arith.constant 0 : i32
    %2 = arith.cmpi ne, %1, %c0_i32_0 : i32
    scf.if %2 {
      %c0_45 = arith.constant 0 : index
      %c0_46 = arith.constant 0 : index
      %c0_47 = arith.constant 0 : index
      %108 = vector.load %arg3[%c0_45, %c0_46, %c0_47] : memref<1x8x32xbf16, #tpu.memory_space<vmem>>, vector<1x8x32xbf16>
      %109 = vector.shape_cast %108 : vector<1x8x32xbf16> to vector<8x32xbf16>
      %c0_48 = arith.constant 0 : index
      %c0_49 = arith.constant 0 : index
      %110 = vector.load %arg6[%c0_48, %c0_49] : memref<32x64xbf16, #tpu.memory_space<vmem>>, vector<32x64xbf16>
      %cst_50 = arith.constant dense<0.000000e+00> : vector<8x64xf32>
      %111 = tpu.matmul %109, %110, %cst_50 {dimension_numbers = #tpu.dot_dimension_numbers<[1], [0], [0], [1], [0, 0, 1, 1], [], []>} : vector<8x32xbf16>, vector<32x64xbf16>, vector<8x64xf32> -> vector<8x64xf32>
      %c0_51 = arith.constant 0 : index
      %c0_52 = arith.constant 0 : index
      %112 = vector.load %arg7[%c0_51, %c0_52] : memref<1x64xf32, #tpu.memory_space<vmem>>, vector<1x64xf32>
      %113 = vector.broadcast %112 : vector<1x64xf32> to vector<8x64xf32>
      %114 = arith.addf %111, %113 : vector<8x64xf32>
      %115 = arith.truncf %114 : vector<8x64xf32> to vector<8x64xbf16>
      %116 = vector.extract_strided_slice %115 {offsets = [0, 0], sizes = [8, 8], strides = [1, 1]} : vector<8x64xbf16> to vector<8x8xbf16>
      %c0_53 = arith.constant 0 : index
      %c0_54 = arith.constant 0 : index
      %c0_55 = arith.constant 0 : index
      %117 = vector.load %arg15[%c0_53, %c0_54, %c0_55] : memref<4x8x8xbf16, #tpu.memory_space<vmem>>, vector<1x8x8xbf16>
      %118 = vector.shape_cast %117 : vector<1x8x8xbf16> to vector<8x8xbf16>
      %119 = vector.shape_cast %116 : vector<8x8xbf16> to vector<1x8x8xbf16>
      tpu.vector_store %arg15[%c0_53, %c0_54, %c0_55], %119 {strides = array<i32>} : memref<4x8x8xbf16, #tpu.memory_space<vmem>>, vector<1x8x8xbf16>,
      %120 = vector.extract_strided_slice %115 {offsets = [0, 32], sizes = [8, 8], strides = [1, 1]} : vector<8x64xbf16> to vector<8x8xbf16>
      %c0_56 = arith.constant 0 : index
      %c0_57 = arith.constant 0 : index
      %c0_58 = arith.constant 0 : index
      %121 = vector.load %arg16[%c0_56, %c0_57, %c0_58] : memref<4x8x8xbf16, #tpu.memory_space<vmem>>, vector<1x8x8xbf16>
      %122 = vector.shape_cast %121 : vector<1x8x8xbf16> to vector<8x8xbf16>
      %123 = vector.shape_cast %120 : vector<8x8xbf16> to vector<1x8x8xbf16>
      tpu.vector_store %arg16[%c0_56, %c0_57, %c0_58], %123 {strides = array<i32>} : memref<4x8x8xbf16, #tpu.memory_space<vmem>>, vector<1x8x8xbf16>,
      %124 = vector.extract_strided_slice %115 {offsets = [0, 8], sizes = [8, 8], strides = [1, 1]} : vector<8x64xbf16> to vector<8x8xbf16>
      %c1 = arith.constant 1 : index
      %c0_59 = arith.constant 0 : index
      %c0_60 = arith.constant 0 : index
      %125 = vector.load %arg15[%c1, %c0_59, %c0_60] : memref<4x8x8xbf16, #tpu.memory_space<vmem>>, vector<1x8x8xbf16>
      %126 = vector.shape_cast %125 : vector<1x8x8xbf16> to vector<8x8xbf16>
      %127 = vector.shape_cast %124 : vector<8x8xbf16> to vector<1x8x8xbf16>
      tpu.vector_store %arg15[%c1, %c0_59, %c0_60], %127 {strides = array<i32>} : memref<4x8x8xbf16, #tpu.memory_space<vmem>>, vector<1x8x8xbf16>,
      %128 = vector.extract_strided_slice %115 {offsets = [0, 40], sizes = [8, 8], strides = [1, 1]} : vector<8x64xbf16> to vector<8x8xbf16>
      %c1_61 = arith.constant 1 : index
      %c0_62 = arith.constant 0 : index
      %c0_63 = arith.constant 0 : index
      %129 = vector.load %arg16[%c1_61, %c0_62, %c0_63] : memref<4x8x8xbf16, #tpu.memory_space<vmem>>, vector<1x8x8xbf16>
      %130 = vector.shape_cast %129 : vector<1x8x8xbf16> to vector<8x8xbf16>
      %131 = vector.shape_cast %128 : vector<8x8xbf16> to vector<1x8x8xbf16>
      tpu.vector_store %arg16[%c1_61, %c0_62, %c0_63], %131 {strides = array<i32>} : memref<4x8x8xbf16, #tpu.memory_space<vmem>>, vector<1x8x8xbf16>,
      %132 = vector.extract_strided_slice %115 {offsets = [0, 16], sizes = [8, 8], strides = [1, 1]} : vector<8x64xbf16> to vector<8x8xbf16>
      %c2 = arith.constant 2 : index
      %c0_64 = arith.constant 0 : index
      %c0_65 = arith.constant 0 : index
      %133 = vector.load %arg15[%c2, %c0_64, %c0_65] : memref<4x8x8xbf16, #tpu.memory_space<vmem>>, vector<1x8x8xbf16>
      %134 = vector.shape_cast %133 : vector<1x8x8xbf16> to vector<8x8xbf16>
      %135 = vector.shape_cast %132 : vector<8x8xbf16> to vector<1x8x8xbf16>
      tpu.vector_store %arg15[%c2, %c0_64, %c0_65], %135 {strides = array<i32>} : memref<4x8x8xbf16, #tpu.memory_space<vmem>>, vector<1x8x8xbf16>,
      %136 = vector.extract_strided_slice %115 {offsets = [0, 48], sizes = [8, 8], strides = [1, 1]} : vector<8x64xbf16> to vector<8x8xbf16>
      %c2_66 = arith.constant 2 : index
      %c0_67 = arith.constant 0 : index
      %c0_68 = arith.constant 0 : index
      %137 = vector.load %arg16[%c2_66, %c0_67, %c0_68] : memref<4x8x8xbf16, #tpu.memory_space<vmem>>, vector<1x8x8xbf16>
      %138 = vector.shape_cast %137 : vector<1x8x8xbf16> to vector<8x8xbf16>
      %139 = vector.shape_cast %136 : vector<8x8xbf16> to vector<1x8x8xbf16>
      tpu.vector_store %arg16[%c2_66, %c0_67, %c0_68], %139 {strides = array<i32>} : memref<4x8x8xbf16, #tpu.memory_space<vmem>>, vector<1x8x8xbf16>,
      %140 = vector.extract_strided_slice %115 {offsets = [0, 24], sizes = [8, 8], strides = [1, 1]} : vector<8x64xbf16> to vector<8x8xbf16>
      %c3 = arith.constant 3 : index
      %c0_69 = arith.constant 0 : index
      %c0_70 = arith.constant 0 : index
      %141 = vector.load %arg15[%c3, %c0_69, %c0_70] : memref<4x8x8xbf16, #tpu.memory_space<vmem>>, vector<1x8x8xbf16>
      %142 = vector.shape_cast %141 : vector<1x8x8xbf16> to vector<8x8xbf16>
      %143 = vector.shape_cast %140 : vector<8x8xbf16> to vector<1x8x8xbf16>
      tpu.vector_store %arg15[%c3, %c0_69, %c0_70], %143 {strides = array<i32>} : memref<4x8x8xbf16, #tpu.memory_space<vmem>>, vector<1x8x8xbf16>,
      %144 = vector.extract_strided_slice %115 {offsets = [0, 56], sizes = [8, 8], strides = [1, 1]} : vector<8x64xbf16> to vector<8x8xbf16>
      %c3_71 = arith.constant 3 : index
      %c0_72 = arith.constant 0 : index
      %c0_73 = arith.constant 0 : index
      %145 = vector.load %arg16[%c3_71, %c0_72, %c0_73] : memref<4x8x8xbf16, #tpu.memory_space<vmem>>, vector<1x8x8xbf16>
      %146 = vector.shape_cast %145 : vector<1x8x8xbf16> to vector<8x8xbf16>
      %147 = vector.shape_cast %144 : vector<8x8xbf16> to vector<1x8x8xbf16>
      tpu.vector_store %arg16[%c3_71, %c0_72, %c0_73], %147 {strides = array<i32>} : memref<4x8x8xbf16, #tpu.memory_space<vmem>>, vector<1x8x8xbf16>,
    } else {
    }
    %c0 = arith.constant 0 : index
    %c0_1 = arith.constant 0 : index
    %c0_2 = arith.constant 0 : index
    %3 = vector.load %arg2[%c0, %c0_1, %c0_2] : memref<1x8x32xf32, #tpu.memory_space<vmem>>, vector<1x8x32xf32>
    %4 = vector.shape_cast %3 : vector<1x8x32xf32> to vector<8x32xf32>
    %5 = arith.truncf %4 : vector<8x32xf32> to vector<8x32xbf16>
    %c0_3 = arith.constant 0 : index
    %c0_4 = arith.constant 0 : index
    %6 = vector.load %arg4[%c0_3, %c0_4] : memref<32x32xbf16, #tpu.memory_space<vmem>>, vector<32x32xbf16>
    %cst = arith.constant dense<0.000000e+00> : vector<8x32xf32>
    %7 = tpu.matmul %5, %6, %cst {dimension_numbers = #tpu.dot_dimension_numbers<[1], [0], [0], [1], [0, 0, 1, 1], [], []>} : vector<8x32xbf16>, vector<32x32xbf16>, vector<8x32xf32> -> vector<8x32xf32>
    %c0_5 = arith.constant 0 : index
    %c0_6 = arith.constant 0 : index
    %8 = vector.load %arg5[%c0_5, %c0_6] : memref<1x32xf32, #tpu.memory_space<vmem>>, vector<1x32xf32>
    %9 = vector.broadcast %8 : vector<1x32xf32> to vector<8x32xf32>
    %10 = arith.addf %7, %9 : vector<8x32xf32>
    %11 = vector.extract_strided_slice %10 {offsets = [0, 0], sizes = [8, 8], strides = [1, 1]} : vector<8x32xf32> to vector<8x8xf32>
    %12 = vector.extract_strided_slice %10 {offsets = [0, 8], sizes = [8, 8], strides = [1, 1]} : vector<8x32xf32> to vector<8x8xf32>
    %13 = vector.extract_strided_slice %10 {offsets = [0, 16], sizes = [8, 8], strides = [1, 1]} : vector<8x32xf32> to vector<8x8xf32>
    %14 = vector.extract_strided_slice %10 {offsets = [0, 24], sizes = [8, 8], strides = [1, 1]} : vector<8x32xf32> to vector<8x8xf32>
    %15 = vector.shape_cast %11 : vector<8x8xf32> to vector<1x8x8xf32>
    %16 = vector.shape_cast %12 : vector<8x8xf32> to vector<1x8x8xf32>
    %17 = vector.shape_cast %13 : vector<8x8xf32> to vector<1x8x8xf32>
    %18 = vector.shape_cast %14 : vector<8x8xf32> to vector<1x8x8xf32>
    %19 = tpu.concatenate %15, %16, %17, %18 in 0 : vector<1x8x8xf32>, vector<1x8x8xf32>, vector<1x8x8xf32>, vector<1x8x8xf32> -> vector<4x8x8xf32>
    %20 = arith.truncf %19 : vector<4x8x8xf32> to vector<4x8x8xbf16>
    %cst_7 = arith.constant 0xFF800000 : f32
    %21 = vector.broadcast %cst_7 : f32 to vector<4x8x1xf32>
    %cst_8 = arith.constant 0.000000e+00 : f32
    %22 = vector.broadcast %cst_8 : f32 to vector<4x8x1xf32>
    %cst_9 = arith.constant 0.000000e+00 : f32
    %23 = vector.broadcast %cst_9 : f32 to vector<4x8x8xf32>
    %c0_10 = arith.constant 0 : index
    %c0_11 = arith.constant 0 : index
    %c0_12 = arith.constant 0 : index
    %24 = vector.load %arg15[%c0_10, %c0_11, %c0_12] : memref<4x8x8xbf16, #tpu.memory_space<vmem>>, vector<4x8x8xbf16>
    %c0_13 = arith.constant 0 : index
    %c0_14 = arith.constant 0 : index
    %c0_15 = arith.constant 0 : index
    %25 = vector.load %arg16[%c0_13, %c0_14, %c0_15] : memref<4x8x8xbf16, #tpu.memory_space<vmem>>, vector<4x8x8xbf16>
    "tpu.trace_start"() <{level = 10 : i32, message = "hqd,hkd->hqk"}> : () -> ()
    %cst_16 = arith.constant dense<0.000000e+00> : vector<4x8x8xf32>
    %26 = tpu.matmul %20, %24, %cst_16 {dimension_numbers = #tpu.dot_dimension_numbers<[2], [2], [1], [1], [0, 0, 0, 1, 1, 1], [0], [0]>} : vector<4x8x8xbf16>, vector<4x8x8xbf16>, vector<4x8x8xf32> -> vector<4x8x8xf32>
    "tpu.trace_stop"() : () -> ()
    %cst_17 = arith.constant dense<0xFF800000> : vector<4x8xf32>
    %27 = vector.multi_reduction <maximumf>, %26, %cst_17 [2] : vector<4x8x8xf32> to vector<4x8xf32>
    %28 = vector.shape_cast %27 : vector<4x8xf32> to vector<4x8x1xf32>
    %29 = arith.maximumf %21, %28 : vector<4x8x1xf32>
    %30 = arith.subf %21, %29 : vector<4x8x1xf32>
    %31 = math.exp %30 : vector<4x8x1xf32>
    %32 = vector.broadcast %29 : vector<4x8x1xf32> to vector<4x8x8xf32>
    %33 = arith.subf %26, %32 : vector<4x8x8xf32>
    %34 = math.exp %33 : vector<4x8x8xf32>
    %35 = arith.mulf %31, %22 : vector<4x8x1xf32>
    %cst_18 = arith.constant dense<0.000000e+00> : vector<4x8xf32>
    %36 = vector.multi_reduction <add>, %34, %cst_18 [2] : vector<4x8x8xf32> to vector<4x8xf32>
    %37 = vector.shape_cast %36 : vector<4x8xf32> to vector<4x8x1xf32>
    %38 = arith.addf %35, %37 : vector<4x8x1xf32>
    %39 = vector.broadcast %31 : vector<4x8x1xf32> to vector<4x8x8xf32>
    %40 = arith.mulf %39, %23 : vector<4x8x8xf32>
    %41 = arith.truncf %34 : vector<4x8x8xf32> to vector<4x8x8xbf16>
    "tpu.trace_start"() <{level = 10 : i32, message = "hqk,hkd->hqd"}> : () -> ()
    %cst_19 = arith.constant dense<0.000000e+00> : vector<4x8x8xf32>
    %42 = tpu.matmul %41, %25, %cst_19 {dimension_numbers = #tpu.dot_dimension_numbers<[2], [1], [1], [2], [0, 0, 0, 1, 1, 2], [0], [0]>} : vector<4x8x8xbf16>, vector<4x8x8xbf16>, vector<4x8x8xf32> -> vector<4x8x8xf32>
    "tpu.trace_stop"() : () -> ()
    %43 = arith.addf %40, %42 : vector<4x8x8xf32>
    %44 = tpu.reciprocal %38 {approx = true} : vector<4x8x1xf32> -> vector<4x8x1xf32>
    %45 = vector.broadcast %44 : vector<4x8x1xf32> to vector<4x8x8xf32>
    %46 = arith.mulf %43, %45 : vector<4x8x8xf32>
    %47 = vector.extract_strided_slice %46 {offsets = [0, 0, 0], sizes = [1, 8, 8], strides = [1, 1, 1]} : vector<4x8x8xf32> to vector<1x8x8xf32>
    %48 = vector.shape_cast %47 : vector<1x8x8xf32> to vector<8x8xf32>
    %49 = vector.extract_strided_slice %46 {offsets = [1, 0, 0], sizes = [1, 8, 8], strides = [1, 1, 1]} : vector<4x8x8xf32> to vector<1x8x8xf32>
    %50 = vector.shape_cast %49 : vector<1x8x8xf32> to vector<8x8xf32>
    %51 = vector.extract_strided_slice %46 {offsets = [2, 0, 0], sizes = [1, 8, 8], strides = [1, 1, 1]} : vector<4x8x8xf32> to vector<1x8x8xf32>
    %52 = vector.shape_cast %51 : vector<1x8x8xf32> to vector<8x8xf32>
    %53 = vector.extract_strided_slice %46 {offsets = [3, 0, 0], sizes = [1, 8, 8], strides = [1, 1, 1]} : vector<4x8x8xf32> to vector<1x8x8xf32>
    %54 = vector.shape_cast %53 : vector<1x8x8xf32> to vector<8x8xf32>
    %55 = tpu.concatenate %48, %50, %52, %54 in 1 : vector<8x8xf32>, vector<8x8xf32>, vector<8x8xf32>, vector<8x8xf32> -> vector<8x32xf32>
    %56 = arith.truncf %55 : vector<8x32xf32> to vector<8x32xbf16>
    %c0_20 = arith.constant 0 : index
    %c0_21 = arith.constant 0 : index
    %57 = vector.load %arg8[%c0_20, %c0_21] : memref<32x32xbf16, #tpu.memory_space<vmem>>, vector<32x32xbf16>
    %cst_22 = arith.constant dense<0.000000e+00> : vector<8x32xf32>
    %58 = tpu.matmul %56, %57, %cst_22 {dimension_numbers = #tpu.dot_dimension_numbers<[1], [0], [0], [1], [0, 0, 1, 1], [], []>} : vector<8x32xbf16>, vector<32x32xbf16>, vector<8x32xf32> -> vector<8x32xf32>
    %c0_23 = arith.constant 0 : index
    %c0_24 = arith.constant 0 : index
    %59 = vector.load %arg9[%c0_23, %c0_24] : memref<1x32xf32, #tpu.memory_space<vmem>>, vector<1x32xf32>
    %60 = vector.broadcast %59 : vector<1x32xf32> to vector<8x32xf32>
    %61 = arith.addf %58, %60 : vector<8x32xf32>
    %62 = arith.addf %4, %61 : vector<8x32xf32>
    %c0_25 = arith.constant 0 : index
    %c0_26 = arith.constant 0 : index
    %63 = vector.load %arg10[%c0_25, %c0_26] : memref<1x32xf32, #tpu.memory_space<vmem>>, vector<1x32xf32>
    %64 = arith.mulf %62, %62 : vector<8x32xf32>
    %cst_27 = arith.constant dense<0.000000e+00> : vector<8xf32>
    %65 = vector.multi_reduction <add>, %64, %cst_27 [1] : vector<8x32xf32> to vector<8xf32>
    %66 = vector.shape_cast %65 : vector<8xf32> to vector<8x1xf32>
    %cst_28 = arith.constant 3.200000e+01 : f32
    %67 = vector.broadcast %cst_28 : f32 to vector<8x1xf32>
    %68 = arith.divf %66, %67 : vector<8x1xf32>
    %cst_29 = arith.constant 9.99999974E-6 : f32
    %69 = vector.broadcast %cst_29 : f32 to vector<8x1xf32>
    %70 = arith.addf %68, %69 : vector<8x1xf32>
    %71 = math.rsqrt %70 : vector<8x1xf32>
    %72 = vector.broadcast %71 : vector<8x1xf32> to vector<8x32xf32>
    %73 = arith.mulf %62, %72 : vector<8x32xf32>
    %74 = vector.broadcast %63 : vector<1x32xf32> to vector<8x32xf32>
    %75 = arith.mulf %74, %73 : vector<8x32xf32>
    %76 = arith.truncf %75 : vector<8x32xf32> to vector<8x32xbf16>
    %c0_30 = arith.constant 0 : index
    %c0_31 = arith.constant 0 : index
    %77 = vector.load %arg11[%c0_30, %c0_31] : memref<32x256xbf16, #tpu.memory_space<vmem>>, vector<32x256xbf16>
    %cst_32 = arith.constant dense<0.000000e+00> : vector<8x256xf32>
    %78 = tpu.matmul %76, %77, %cst_32 {dimension_numbers = #tpu.dot_dimension_numbers<[1], [0], [0], [1], [0, 0, 1, 1], [], []>} : vector<8x32xbf16>, vector<32x256xbf16>, vector<8x256xf32> -> vector<8x256xf32>
    %79 = vector.extract_strided_slice %78 {offsets = [0, 0], sizes = [8, 128], strides = [1, 1]} : vector<8x256xf32> to vector<8x128xf32>
    %80 = vector.extract_strided_slice %78 {offsets = [0, 128], sizes = [8, 128], strides = [1, 1]} : vector<8x256xf32> to vector<8x128xf32>
    %81 = arith.negf %79 : vector<8x128xf32>
    %82 = math.exp %81 : vector<8x128xf32>
    %cst_33 = arith.constant 1.000000e+00 : f32
    %83 = vector.broadcast %cst_33 : f32 to vector<8x128xf32>
    %84 = arith.addf %83, %82 : vector<8x128xf32>
    %85 = arith.divf %83, %84 : vector<8x128xf32>
    %86 = arith.mulf %79, %85 : vector<8x128xf32>
    %87 = arith.mulf %86, %80 : vector<8x128xf32>
    %88 = arith.truncf %87 : vector<8x128xf32> to vector<8x128xbf16>
    %c0_34 = arith.constant 0 : index
    %c0_35 = arith.constant 0 : index
    %89 = vector.load %arg12[%c0_34, %c0_35] : memref<128x32xbf16, #tpu.memory_space<vmem>>, vector<128x32xbf16>
    %cst_36 = arith.constant dense<0.000000e+00> : vector<8x32xf32>
    %90 = tpu.matmul %88, %89, %cst_36 {dimension_numbers = #tpu.dot_dimension_numbers<[1], [0], [0], [1], [0, 0, 1, 1], [], []>} : vector<8x128xbf16>, vector<128x32xbf16>, vector<8x32xf32> -> vector<8x32xf32>
    %91 = arith.addf %75, %90 : vector<8x32xf32>
    %c0_37 = arith.constant 0 : index
    %c0_38 = arith.constant 0 : index
    %92 = vector.load %arg13[%c0_37, %c0_38] : memref<1x32xf32, #tpu.memory_space<vmem>>, vector<1x32xf32>
    %93 = arith.mulf %91, %91 : vector<8x32xf32>
    %cst_39 = arith.constant dense<0.000000e+00> : vector<8xf32>
    %94 = vector.multi_reduction <add>, %93, %cst_39 [1] : vector<8x32xf32> to vector<8xf32>
    %95 = vector.shape_cast %94 : vector<8xf32> to vector<8x1xf32>
    %cst_40 = arith.constant 3.200000e+01 : f32
    %96 = vector.broadcast %cst_40 : f32 to vector<8x1xf32>
    %97 = arith.divf %95, %96 : vector<8x1xf32>
    %cst_41 = arith.constant 9.99999974E-6 : f32
    %98 = vector.broadcast %cst_41 : f32 to vector<8x1xf32>
    %99 = arith.addf %97, %98 : vector<8x1xf32>
    %100 = math.rsqrt %99 : vector<8x1xf32>
    %101 = vector.broadcast %100 : vector<8x1xf32> to vector<8x32xf32>
    %102 = arith.mulf %91, %101 : vector<8x32xf32>
    %103 = vector.broadcast %92 : vector<1x32xf32> to vector<8x32xf32>
    %104 = arith.mulf %103, %102 : vector<8x32xf32>
    %c0_42 = arith.constant 0 : index
    %c0_43 = arith.constant 0 : index
    %c0_44 = arith.constant 0 : index
    %105 = vector.load %arg14[%c0_42, %c0_43, %c0_44] : memref<1x8x32xf32, #tpu.memory_space<vmem>>, vector<1x8x32xf32>
    %106 = vector.shape_cast %105 : vector<1x8x32xf32> to vector<8x32xf32>
    %107 = vector.shape_cast %104 : vector<8x32xf32> to vector<1x8x32xf32>
    tpu.vector_store %arg14[%c0_42, %c0_43, %c0_44], %107 {strides = array<i32>} : memref<1x8x32xf32, #tpu.memory_space<vmem>>, vector<1x8x32xf32>,
    return
  }
  func.func @transform_0(%arg0: i32, %arg1: i32) -> (i32, i32, i32) {
    %c0_i32 = arith.constant 0 : i32
    %c0_i32_0 = arith.constant 0 : i32
    return %arg0, %arg1, %c0_i32 : i32, i32, i32
  }
  func.func @transform_1(%arg0: i32, %arg1: i32) -> (i32, i32, i32) {
    %c0_i32 = arith.constant 0 : i32
    %c0_i32_0 = arith.constant 0 : i32
    %c0_i32_1 = arith.constant 0 : i32
    return %arg0, %c0_i32, %c0_i32_0 : i32, i32, i32
  }
  func.func @transform_2(%arg0: i32, %arg1: i32) -> (i32, i32) {
    %c0_i32 = arith.constant 0 : i32
    %c0_i32_0 = arith.constant 0 : i32
    %c0_i32_1 = arith.constant 0 : i32
    return %c0_i32, %c0_i32_0 : i32, i32
  }
  func.func @transform_3(%arg0: i32, %arg1: i32) -> (i32, i32) {
    %c0_i32 = arith.constant 0 : i32
    %c0_i32_0 = arith.constant 0 : i32
    %c0_i32_1 = arith.constant 0 : i32
    return %c0_i32, %c0_i32_0 : i32, i32
  }
  func.func @transform_4(%arg0: i32, %arg1: i32) -> (i32, i32) {
    %c0_i32 = arith.constant 0 : i32
    %c0_i32_0 = arith.constant 0 : i32
    %c0_i32_1 = arith.constant 0 : i32
    return %c0_i32, %c0_i32_0 : i32, i32
  }
  func.func @transform_5(%arg0: i32, %arg1: i32) -> (i32, i32) {
    %c0_i32 = arith.constant 0 : i32
    %c0_i32_0 = arith.constant 0 : i32
    %c0_i32_1 = arith.constant 0 : i32
    return %c0_i32, %c0_i32_0 : i32, i32
  }
  func.func @transform_6(%arg0: i32, %arg1: i32) -> (i32, i32) {
    %c0_i32 = arith.constant 0 : i32
    %c0_i32_0 = arith.constant 0 : i32
    %c0_i32_1 = arith.constant 0 : i32
    return %c0_i32, %c0_i32_0 : i32, i32
  }
  func.func @transform_7(%arg0: i32, %arg1: i32) -> (i32, i32) {
    %c0_i32 = arith.constant 0 : i32
    %c0_i32_0 = arith.constant 0 : i32
    %c0_i32_1 = arith.constant 0 : i32
    return %c0_i32, %c0_i32_0 : i32, i32
  }
  func.func @transform_8(%arg0: i32, %arg1: i32) -> (i32, i32) {
    %c0_i32 = arith.constant 0 : i32
    %c0_i32_0 = arith.constant 0 : i32
    %c0_i32_1 = arith.constant 0 : i32
    return %c0_i32, %c0_i32_0 : i32, i32
  }
  func.func @transform_9(%arg0: i32, %arg1: i32) -> (i32, i32) {
    %c0_i32 = arith.constant 0 : i32
    %c0_i32_0 = arith.constant 0 : i32
    %c0_i32_1 = arith.constant 0 : i32
    return %c0_i32, %c0_i32_0 : i32, i32
  }
  func.func @transform_10(%arg0: i32, %arg1: i32) -> (i32, i32) {
    %c0_i32 = arith.constant 0 : i32
    %c0_i32_0 = arith.constant 0 : i32
    %c0_i32_1 = arith.constant 0 : i32
    return %c0_i32, %c0_i32_0 : i32, i32
  }
  func.func @transform_11(%arg0: i32, %arg1: i32) -> (i32, i32) {
    %c0_i32 = arith.constant 0 : i32
    %c0_i32_0 = arith.constant 0 : i32
    %c0_i32_1 = arith.constant 0 : i32
    return %c0_i32, %c0_i32_0 : i32, i32
  }
  func.func @transform_12(%arg0: i32, %arg1: i32) -> (i32, i32, i32) {
    %c0_i32 = arith.constant 0 : i32
    %c0_i32_0 = arith.constant 0 : i32
    return %arg0, %arg1, %c0_i32 : i32, i32, i32
  }
}

</mosaic_0001>

<llo_original>
// kernel: tpu_custom_call.1
$region0: #{tpu_custom_call.1}
  #allocation0 [shape = 'u32[]', space=smem, size = 0x4, offset = 0x4, fixed_abs, tag = 'smem constant byte address 0x4 - core index']
  #allocation1 [shape = 'u32[72,128]{1,0:T(1,128)}', space=vmem, size = 0x9000, scoped, tag = 'internal scratch']
  #allocation2 [shape = 'bf16[4,8,8]{2,1,0:T(8,128)(2,1)}', space=vmem, size = 0x2000, scoped, tag = 'scratch operand']
  #allocation3 [shape = 'bf16[4,8,8]{2,1,0:T(8,128)(2,1)}', space=vmem, size = 0x2000, scoped, tag = 'scratch operand']
  %s0 = inlined_call_operand.vmem [shape: f32[2,8,32], index: 0, kind: input, shape index: {}]
  %s1 = inlined_call_operand.hbm [shape: bf16[2,8,32], index: 1, kind: input, shape index: {}]
  %s2 = inlined_call_operand.vmem [shape: bf16[32,32], index: 2, kind: input, shape index: {}]
  %s3 = inlined_call_operand.vmem [shape: f32[1,32], index: 3, kind: input, shape index: {}]
  %s4 = inlined_call_operand.vmem [shape: bf16[32,64], index: 4, kind: input, shape index: {}]
  %s5 = inlined_call_operand.vmem [shape: f32[1,64], index: 5, kind: input, shape index: {}]
  %s6 = inlined_call_operand.hbm [shape: bf16[32,32], index: 6, kind: input, shape index: {}]
  %s7 = inlined_call_operand.vmem [shape: f32[1,32], index: 7, kind: input, shape index: {}]
  %s8 = inlined_call_operand.vmem [shape: f32[1,32], index: 8, kind: input, shape index: {}]
  %s9 = inlined_call_operand.vmem [shape: bf16[32,256], index: 9, kind: input, shape index: {}]
  %s10 = inlined_call_operand.vmem [shape: bf16[128,32], index: 10, kind: input, shape index: {}]
  %s11 = inlined_call_operand.vmem [shape: f32[1,32], index: 11, kind: input, shape index: {}]
  %s12 = inlined_call_operand.hbm [shape: f32[2,8,32], index: 12, kind: output, shape index: {}]
  %s13 = sld [smem:[#allocation0]]
  $region93: #{tpu_custom_call.1} parent=0
    _
  %s15 = ssub.s32 1, %s13
  %s16 = scalar_select 0, %s15, %s13
  $region1: #{tpu_custom_call.1} parent=0
    #allocation4 [shape = 'u8[4096]{0}', space=vmem, size = 0x1000, scoped, tag = 'input window, operand 1']
    #allocation5 [shape = 's32[2]{0}', space=sflag, size = 0x8, scoped, tag = 'scoped memory for tpu_custom_call.1']
    #allocation6 [shape = 's32[2]{0}', space=sflag, size = 0x8, scoped, tag = 'scoped memory for tpu_custom_call.1']
    #allocation7 [shape = 'u8[8192]{0}', space=vmem, size = 0x2000, scoped, tag = 'input window, operand 6, single buffered']
    #allocation8 [shape = 's32[1]{0}', space=sflag, size = 0x4, scoped, tag = 'scoped memory for tpu_custom_call.1']
    #allocation9 [shape = 'u8[8192]{0}', space=vmem, size = 0x2000, scoped, tag = 'output window, operand 0']
    %17 = vsyncpa [#allocation5], 0
    %s18 = scalar_lea.sflag [#allocation5], 1
    %19 = vsyncpa %s18, 0
    %20 = vsyncpa [#allocation8], 0
    %21 = vsyncpa [#allocation6], 0
    %s22 = scalar_lea.sflag [#allocation6], 1
    %23 = vsyncpa %s22, 0
    loop: start=0, step=1, limit=4
    $region2: #{tpu_custom_call.1} parent=1 // loop_pre_header
      _
    $region3: #{tpu_custom_call.1} parent=1 // loop_header
      %s25 = sphi 0, %s29
      %p26 = scmp.ge.s32.totalorder %s25, 4
      %s32 = sphi 0, %s44
      %s33 = sphi 0, %s40
      %s34 = sphi 0, %s32
      %s35 = sphi 0, %s33
      %s36 = sphi 0, %s34
      %s37 = sphi 0, %s35
      %s49 = sphi 0, %s51
      %s52 = sphi 0, %s49
      %s53 = sphi 0, %s52
      %s69 = sphi 0, %s53
      %s75 = sphi 0, %s77
      %s78 = sphi 0, %s75
      %s79 = sphi 0, %s78
      %s95 = sphi 0, %s79
      %s99 = sphi 0, %s99
      %s101 = sphi 0, %s99
      %s102 = sphi 0, %s101
      %s116 = sphi 0, %s102
      %s120 = sphi 0, %s120
      %s122 = sphi 0, %s120
      %s123 = sphi 0, %s122
      %s137 = sphi 0, %s123
      %s141 = sphi 0, %s141
      %s143 = sphi 0, %s141
      %s144 = sphi 0, %s143
      %s158 = sphi 0, %s144
      %s162 = sphi 0, %s162
      %s164 = sphi 0, %s162
      %s165 = sphi 0, %s164
      %s179 = sphi 0, %s165
      %s183 = sphi 0, %s183
      %s185 = sphi 0, %s183
      %s186 = sphi 0, %s185
      %s200 = sphi 0, %s186
      %s204 = sphi 0, %s204
      %s206 = sphi 0, %s204
      %s207 = sphi 0, %s206
      %s221 = sphi 0, %s207
      %s225 = sphi 0, %s225
      %s227 = sphi 0, %s225
      %s228 = sphi 0, %s227
      %s242 = sphi 0, %s228
      %s246 = sphi 0, %s246
      %s248 = sphi 0, %s246
      %s249 = sphi 0, %s248
      %s263 = sphi 0, %s249
      %s267 = sphi 0, %s267
      %s269 = sphi 0, %s267
      %s270 = sphi 0, %s269
      %s284 = sphi 0, %s270
      %s288 = sphi 0, %s288
      %s290 = sphi 0, %s288
      %s291 = sphi 0, %s290
      %s305 = sphi 0, %s291
      %s313 = sphi 0, %s315
      %s316 = sphi 0, %s313
      %s317 = sphi 0, %s316
      %s333 = sphi 0, %s317
    $region4: #{tpu_custom_call.1} parent=1 // loop_header_branch
      %28 = sbr.rel (%p26) target = $region8
    $region5: #{tpu_custom_call.1} parent=1 // loop_body
      %s30 = ssub.s32 %s25, 1
      %s31 = ssub.s32 %s25, 2
      %s38 = sadd.s32 1, %s33
      %p39 = scmp.ge.s32.totalorder %s38, 1
      %s40 = scalar_select %p39, 0, %s38
      %s41 = sadd.s32 1, %s32
      %s42 = scalar_select %p39, %s41, %s32
      %p43 = scmp.ge.s32.totalorder %s42, 2
      %s44 = scalar_select %p43, 0, %s42
      %s45 = ssub.s32 %s32, %s44
      %s46 = ssub.s32 %s33, %s40
      %s47 = sor.u32 %s45, %s46
      %p48 = scmp.eq.s32.totalorder %s47, 0
      %s50 = sadd.s32 %s49, 1
      %s51 = scalar_select %p48, %s49, %s50
      %p54 = pneg %p48
      %p55 = scmp.eq.s32.totalorder %s25, 1
      %p56 = por %p54, %p55
      %p57 = scmp.ne.s32.totalorder %s49, %s52
      %p58 = scmp.eq.s32.totalorder %s25, 0
      %p59 = por %p57, %p58
      %p60 = scmp.ne.s32.totalorder %s49, %s52
      %p61 = scmp.eq.s32.totalorder %s30, 1
      %p62 = por %p60, %p61
      %p63 = scmp.ne.s32.totalorder %s52, %s53
      %p64 = scmp.eq.s32.totalorder %s30, 0
      %p65 = por %p63, %p64
      %p66 = scmp.ne.s32.totalorder %s52, %s53
      %p67 = scmp.eq.s32.totalorder %s31, 1
      %p68 = por %p66, %p67
      %p70 = scmp.ne.s32.totalorder %s53, %s69
      %p71 = scmp.eq.s32.totalorder %s31, 0
      %p72 = por %p70, %p71
      %s73 = ssub.s32 %s32, %s44
      %p74 = scmp.eq.s32.totalorder %s73, 0
      %s76 = sadd.s32 %s75, 1
      %s77 = scalar_select %p74, %s75, %s76
      %p80 = pneg %p74
      %p81 = scmp.eq.s32.totalorder %s25, 1
      %p82 = por %p80, %p81
      %p83 = scmp.ne.s32.totalorder %s75, %s78
      %p84 = scmp.eq.s32.totalorder %s25, 0
      %p85 = por %p83, %p84
      %p86 = scmp.ne.s32.totalorder %s75, %s78
      %p87 = scmp.eq.s32.totalorder %s30, 1
      %p88 = por %p86, %p87
      %p89 = scmp.ne.s32.totalorder %s78, %s79
      %p90 = scmp.eq.s32.totalorder %s30, 0
      %p91 = por %p89, %p90
      %p92 = scmp.ne.s32.totalorder %s78, %s79
      %p93 = scmp.eq.s32.totalorder %s31, 1
      %p94 = por %p92, %p93
      %p96 = scmp.ne.s32.totalorder %s79, %s95
      %p97 = scmp.eq.s32.totalorder %s31, 0
      %p98 = por %p96, %p97
      %s100 = sadd.s32 %s99, 1
      %p103 = scmp.eq.s32.totalorder %s25, 1
      %p104 = scmp.ne.s32.totalorder %s99, %s101
      %p105 = scmp.eq.s32.totalorder %s25, 0
      %p106 = por %p104, %p105
      %p107 = scmp.ne.s32.totalorder %s99, %s101
      %p108 = scmp.eq.s32.totalorder %s30, 1
      %p109 = por %p107, %p108
      %p110 = scmp.ne.s32.totalorder %s101, %s102
      %p111 = scmp.eq.s32.totalorder %s30, 0
      %p112 = por %p110, %p111
      %p113 = scmp.ne.s32.totalorder %s101, %s102
      %p114 = scmp.eq.s32.totalorder %s31, 1
      %p115 = por %p113, %p114
      %p117 = scmp.ne.s32.totalorder %s102, %s116
      %p118 = scmp.eq.s32.totalorder %s31, 0
      %p119 = por %p117, %p118
      %s121 = sadd.s32 %s120, 1
      %p124 = scmp.eq.s32.totalorder %s25, 1
      %p125 = scmp.ne.s32.totalorder %s120, %s122
      %p126 = scmp.eq.s32.totalorder %s25, 0
      %p127 = por %p125, %p126
      %p128 = scmp.ne.s32.totalorder %s120, %s122
      %p129 = scmp.eq.s32.totalorder %s30, 1
      %p130 = por %p128, %p129
      %p131 = scmp.ne.s32.totalorder %s122, %s123
      %p132 = scmp.eq.s32.totalorder %s30, 0
      %p133 = por %p131, %p132
      %p134 = scmp.ne.s32.totalorder %s122, %s123
      %p135 = scmp.eq.s32.totalorder %s31, 1
      %p136 = por %p134, %p135
      %p138 = scmp.ne.s32.totalorder %s123, %s137
      %p139 = scmp.eq.s32.totalorder %s31, 0
      %p140 = por %p138, %p139
      %s142 = sadd.s32 %s141, 1
      %p145 = scmp.eq.s32.totalorder %s25, 1
      %p146 = scmp.ne.s32.totalorder %s141, %s143
      %p147 = scmp.eq.s32.totalorder %s25, 0
      %p148 = por %p146, %p147
      %p149 = scmp.ne.s32.totalorder %s141, %s143
      %p150 = scmp.eq.s32.totalorder %s30, 1
      %p151 = por %p149, %p150
      %p152 = scmp.ne.s32.totalorder %s143, %s144
      %p153 = scmp.eq.s32.totalorder %s30, 0
      %p154 = por %p152, %p153
      %p155 = scmp.ne.s32.totalorder %s143, %s144
      %p156 = scmp.eq.s32.totalorder %s31, 1
      %p157 = por %p155, %p156
      %p159 = scmp.ne.s32.totalorder %s144, %s158
      %p160 = scmp.eq.s32.totalorder %s31, 0
      %p161 = por %p159, %p160
      %s163 = sadd.s32 %s162, 1
      %p166 = scmp.eq.s32.totalorder %s25, 1
      %p167 = scmp.ne.s32.totalorder %s162, %s164
      %p168 = scmp.eq.s32.totalorder %s25, 0
      %p169 = por %p167, %p168
      %p170 = scmp.ne.s32.totalorder %s162, %s164
      %p171 = scmp.eq.s32.totalorder %s30, 1
      %p172 = por %p170, %p171
      %p173 = scmp.ne.s32.totalorder %s164, %s165
      %p174 = scmp.eq.s32.totalorder %s30, 0
      %p175 = por %p173, %p174
      %p176 = scmp.ne.s32.totalorder %s164, %s165
      %p177 = scmp.eq.s32.totalorder %s31, 1
      %p178 = por %p176, %p177
      %p180 = scmp.ne.s32.totalorder %s165, %s179
      %p181 = scmp.eq.s32.totalorder %s31, 0
      %p182 = por %p180, %p181
      %s184 = sadd.s32 %s183, 1
      %p187 = scmp.eq.s32.totalorder %s25, 1
      %p188 = scmp.ne.s32.totalorder %s183, %s185
      %p189 = scmp.eq.s32.totalorder %s25, 0
      %p190 = por %p188, %p189
      %p191 = scmp.ne.s32.totalorder %s183, %s185
      %p192 = scmp.eq.s32.totalorder %s30, 1
      %p193 = por %p191, %p192
      %p194 = scmp.ne.s32.totalorder %s185, %s186
      %p195 = scmp.eq.s32.totalorder %s30, 0
      %p196 = por %p194, %p195
      %p197 = scmp.ne.s32.totalorder %s185, %s186
      %p198 = scmp.eq.s32.totalorder %s31, 1
      %p199 = por %p197, %p198
      %p201 = scmp.ne.s32.totalorder %s186, %s200
      %p202 = scmp.eq.s32.totalorder %s31, 0
      %p203 = por %p201, %p202
      %s205 = sadd.s32 %s204, 1
      %p208 = scmp.eq.s32.totalorder %s25, 1
      %p209 = scmp.ne.s32.totalorder %s204, %s206
      %p210 = scmp.eq.s32.totalorder %s25, 0
      %p211 = por %p209, %p210
      %p212 = scmp.ne.s32.totalorder %s204, %s206
      %p213 = scmp.eq.s32.totalorder %s30, 1
      %p214 = por %p212, %p213
      %p215 = scmp.ne.s32.totalorder %s206, %s207
      %p216 = scmp.eq.s32.totalorder %s30, 0
      %p217 = por %p215, %p216
      %p218 = scmp.ne.s32.totalorder %s206, %s207
      %p219 = scmp.eq.s32.totalorder %s31, 1
      %p220 = por %p218, %p219
      %p222 = scmp.ne.s32.totalorder %s207, %s221
      %p223 = scmp.eq.s32.totalorder %s31, 0
      %p224 = por %p222, %p223
      %s226 = sadd.s32 %s225, 1
      %p229 = scmp.eq.s32.totalorder %s25, 1
      %p230 = scmp.ne.s32.totalorder %s225, %s227
      %p231 = scmp.eq.s32.totalorder %s25, 0
      %p232 = por %p230, %p231
      %p233 = scmp.ne.s32.totalorder %s225, %s227
      %p234 = scmp.eq.s32.totalorder %s30, 1
      %p235 = por %p233, %p234
      %p236 = scmp.ne.s32.totalorder %s227, %s228
      %p237 = scmp.eq.s32.totalorder %s30, 0
      %p238 = por %p236, %p237
      %p239 = scmp.ne.s32.totalorder %s227, %s228
      %p240 = scmp.eq.s32.totalorder %s31, 1
      %p241 = por %p239, %p240
      %p243 = scmp.ne.s32.totalorder %s228, %s242
      %p244 = scmp.eq.s32.totalorder %s31, 0
      %p245 = por %p243, %p244
      %s247 = sadd.s32 %s246, 1
      %p250 = scmp.eq.s32.totalorder %s25, 1
      %p251 = scmp.ne.s32.totalorder %s246, %s248
      %p252 = scmp.eq.s32.totalorder %s25, 0
      %p253 = por %p251, %p252
      %p254 = scmp.ne.s32.totalorder %s246, %s248
      %p255 = scmp.eq.s32.totalorder %s30, 1
      %p256 = por %p254, %p255
      %p257 = scmp.ne.s32.totalorder %s248, %s249
      %p258 = scmp.eq.s32.totalorder %s30, 0
      %p259 = por %p257, %p258
      %p260 = scmp.ne.s32.totalorder %s248, %s249
      %p261 = scmp.eq.s32.totalorder %s31, 1
      %p262 = por %p260, %p261
      %p264 = scmp.ne.s32.totalorder %s249, %s263
      %p265 = scmp.eq.s32.totalorder %s31, 0
      %p266 = por %p264, %p265
      %s268 = sadd.s32 %s267, 1
      %p271 = scmp.eq.s32.totalorder %s25, 1
      %p272 = scmp.ne.s32.totalorder %s267, %s269
      %p273 = scmp.eq.s32.totalorder %s25, 0
      %p274 = por %p272, %p273
      %p275 = scmp.ne.s32.totalorder %s267, %s269
      %p276 = scmp.eq.s32.totalorder %s30, 1
      %p277 = por %p275, %p276
      %p278 = scmp.ne.s32.totalorder %s269, %s270
      %p279 = scmp.eq.s32.totalorder %s30, 0
      %p280 = por %p278, %p279
      %p281 = scmp.ne.s32.totalorder %s269, %s270
      %p282 = scmp.eq.s32.totalorder %s31, 1
      %p283 = por %p281, %p282
      %p285 = scmp.ne.s32.totalorder %s270, %s284
      %p286 = scmp.eq.s32.totalorder %s31, 0
      %p287 = por %p285, %p286
      %s289 = sadd.s32 %s288, 1
      %p292 = scmp.eq.s32.totalorder %s25, 1
      %p293 = scmp.ne.s32.totalorder %s288, %s290
      %p294 = scmp.eq.s32.totalorder %s25, 0
      %p295 = por %p293, %p294
      %p296 = scmp.ne.s32.totalorder %s288, %s290
      %p297 = scmp.eq.s32.totalorder %s30, 1
      %p298 = por %p296, %p297
      %p299 = scmp.ne.s32.totalorder %s290, %s291
      %p300 = scmp.eq.s32.totalorder %s30, 0
      %p301 = por %p299, %p300
      %p302 = scmp.ne.s32.totalorder %s290, %s291
      %p303 = scmp.eq.s32.totalorder %s31, 1
      %p304 = por %p302, %p303
      %p306 = scmp.ne.s32.totalorder %s291, %s305
      %p307 = scmp.eq.s32.totalorder %s31, 0
      %p308 = por %p306, %p307
      %s309 = ssub.s32 %s32, %s44
      %s310 = ssub.s32 %s33, %s40
      %s311 = sor.u32 %s309, %s310
      %p312 = scmp.eq.s32.totalorder %s311, 0
      %s314 = sadd.s32 %s313, 1
      %s315 = scalar_select %p312, %s313, %s314
      %p318 = pneg %p312
      %p319 = scmp.eq.s32.totalorder %s25, 1
      %p320 = por %p318, %p319
      %p321 = scmp.ne.s32.totalorder %s313, %s316
      %p322 = scmp.eq.s32.totalorder %s25, 0
      %p323 = por %p321, %p322
      %p324 = scmp.ne.s32.totalorder %s313, %s316
      %p325 = scmp.eq.s32.totalorder %s30, 1
      %p326 = por %p324, %p325
      %p327 = scmp.ne.s32.totalorder %s316, %s317
      %p328 = scmp.eq.s32.totalorder %s30, 0
      %p329 = por %p327, %p328
      %p330 = scmp.ne.s32.totalorder %s316, %s317
      %p331 = scmp.eq.s32.totalorder %s31, 1
      %p332 = por %p330, %p331
      %p334 = scmp.ne.s32.totalorder %s317, %s333
      %p335 = scmp.eq.s32.totalorder %s31, 0
      %p336 = por %p334, %p335
      %p337 = scmp.le.s32.totalorder 1, %s25
      %p338 = scmp.lt.s32.totalorder %s25, 3
      %p339 = pnand %p337, %p338
      %p340 = pneg %p339
      // Predicated region
      $region9: #{tpu_custom_call.1} parent=5 // pred_check
        _
      $region10: #{tpu_custom_call.1} parent=5 // pred_check_branch
        %342 = sbr.rel (%p339) target = $region12
      $region11: #{tpu_custom_call.1} parent=5 // pred_region
        %s343 = ssub.s32 %s25, 1
        // Predicated region
        $region13: #{tpu_custom_call.1} parent=11 // pred_check
          %p344 = pneg %p112
        $region14: #{tpu_custom_call.1} parent=11 // pred_check_branch
          %346 = sbr.rel (%p344) target = $region16
        $region15: #{tpu_custom_call.1} parent=11 // pred_region
          _
        $region16: #{tpu_custom_call.1} parent=11 // pred_fallthru
          _
        // Predicated region
        $region17: #{tpu_custom_call.1} parent=11 // pred_check
          %p347 = pneg %p133
        $region18: #{tpu_custom_call.1} parent=11 // pred_check_branch
          %349 = sbr.rel (%p347) target = $region20
        $region19: #{tpu_custom_call.1} parent=11 // pred_region
          _
        $region20: #{tpu_custom_call.1} parent=11 // pred_fallthru
          _
        // Predicated region
        $region21: #{tpu_custom_call.1} parent=11 // pred_check
          %p350 = pneg %p154
        $region22: #{tpu_custom_call.1} parent=11 // pred_check_branch
          %352 = sbr.rel (%p350) target = $region24
        $region23: #{tpu_custom_call.1} parent=11 // pred_region
          _
        $region24: #{tpu_custom_call.1} parent=11 // pred_fallthru
          _
        // Predicated region
        $region25: #{tpu_custom_call.1} parent=11 // pred_check
          %p353 = pneg %p175
        $region26: #{tpu_custom_call.1} parent=11 // pred_check_branch
          %355 = sbr.rel (%p353) target = $region28
        $region27: #{tpu_custom_call.1} parent=11 // pred_region
          _
        $region28: #{tpu_custom_call.1} parent=11 // pred_fallthru
          _
        // Predicated region
        $region29: #{tpu_custom_call.1} parent=11 // pred_check
          %p356 = pneg %p196
        $region30: #{tpu_custom_call.1} parent=11 // pred_check_branch
          %358 = sbr.rel (%p356) target = $region32
        $region31: #{tpu_custom_call.1} parent=11 // pred_region
          %360 = vsyncadd [#allocation8], 0
          %s361 = sshll.u32 %s6, 4
          %s362 = int_to_ptr.hbm [resolvable:$true] %s361
          %s363 = sshll.u32 [#allocation7], 4
          %s364 = int_to_ptr.vmem [resolvable:$true] %s363
          %369 = dma.hbm_to_vmem [thread:$0]  %s362, 256, %s364, [#allocation8], 64, 64, 4
        $region32: #{tpu_custom_call.1} parent=11 // pred_fallthru
          _
        // Predicated region
        $region33: #{tpu_custom_call.1} parent=11 // pred_check
          %p370 = pneg %p217
        $region34: #{tpu_custom_call.1} parent=11 // pred_check_branch
          %372 = sbr.rel (%p370) target = $region36
        $region35: #{tpu_custom_call.1} parent=11 // pred_region
          _
        $region36: #{tpu_custom_call.1} parent=11 // pred_fallthru
          _
        // Predicated region
        $region37: #{tpu_custom_call.1} parent=11 // pred_check
          %p373 = pneg %p238
        $region38: #{tpu_custom_call.1} parent=11 // pred_check_branch
          %375 = sbr.rel (%p373) target = $region40
        $region39: #{tpu_custom_call.1} parent=11 // pred_region
          _
        $region40: #{tpu_custom_call.1} parent=11 // pred_fallthru
          _
        // Predicated region
        $region41: #{tpu_custom_call.1} parent=11 // pred_check
          %p376 = pneg %p259
        $region42: #{tpu_custom_call.1} parent=11 // pred_check_branch
          %378 = sbr.rel (%p376) target = $region44
        $region43: #{tpu_custom_call.1} parent=11 // pred_region
          _
        $region44: #{tpu_custom_call.1} parent=11 // pred_fallthru
          _
        // Predicated region
        $region45: #{tpu_custom_call.1} parent=11 // pred_check
          %p379 = pneg %p280
        $region46: #{tpu_custom_call.1} parent=11 // pred_check_branch
          %381 = sbr.rel (%p379) target = $region48
        $region47: #{tpu_custom_call.1} parent=11 // pred_region
          _
        $region48: #{tpu_custom_call.1} parent=11 // pred_fallthru
          _
        // Predicated region
        $region49: #{tpu_custom_call.1} parent=11 // pred_check
          %p382 = pneg %p301
        $region50: #{tpu_custom_call.1} parent=11 // pred_check_branch
          %384 = sbr.rel (%p382) target = $region52
        $region51: #{tpu_custom_call.1} parent=11 // pred_region
          _
        $region52: #{tpu_custom_call.1} parent=11 // pred_fallthru
          _
      $region12: #{tpu_custom_call.1} parent=5 // pred_fallthru
        _
      %p385 = scmp.lt.s32.totalorder %s25, 2
      // Predicated region
      $region53: #{tpu_custom_call.1} parent=5 // pred_check
        %p386 = pneg %p385
      $region54: #{tpu_custom_call.1} parent=5 // pred_check_branch
        %388 = sbr.rel (%p386) target = $region56
      $region55: #{tpu_custom_call.1} parent=5 // pred_region
        // Predicated region
        $region57: #{tpu_custom_call.1} parent=55 // pred_check
          %p389 = pneg %p59
        $region58: #{tpu_custom_call.1} parent=55 // pred_check_branch
          %391 = sbr.rel (%p389) target = $region60
        $region59: #{tpu_custom_call.1} parent=55 // pred_region
          %p392 = scmp.lt.s32.totalorder %s32, 1
          %s393 = scalar_select %p392, %s32, 1
          %p394 = scmp.lt.s32.totalorder %s33, 0
          %s395 = scalar_select %p394, %s33, 0
          %s396 = sadd.s32 %s395, %s393
          %s397 = smul.addr %s396, 8
          %s398 = scalar_lea.vmem %s0, %s397
        $region60: #{tpu_custom_call.1} parent=55 // pred_fallthru
          _
        // Predicated region
        $region61: #{tpu_custom_call.1} parent=55 // pred_check
          %p399 = pneg %p85
        $region62: #{tpu_custom_call.1} parent=55 // pred_check_branch
          %401 = sbr.rel (%p399) target = $region64
        $region63: #{tpu_custom_call.1} parent=55 // pred_region
          %s402 = sand.u32 %s75, 1
          %s403 = scalar_lea.sflag [#allocation5], %s402
          %s404 = sand.u32 %s75, 1
          %s405 = smul.addr %s404, 4
          %s406 = scalar_lea.vmem [#allocation4], %s405
          %408 = vsyncadd %s403, 0
          %s409 = smul.addr %s32, 4
          %s410 = scalar_lea.hbm %s1, %s409
          %s412 = sshll.u32 %s410, 4
          %s413 = int_to_ptr.hbm [resolvable:$true] %s412
          %s414 = sshll.u32 %s406, 4
          %s415 = int_to_ptr.vmem [resolvable:$true] %s414
          %417 = dma.hbm_to_vmem [thread:$0]  %s413, 64, %s415, %s403
        $region64: #{tpu_custom_call.1} parent=55 // pred_fallthru
          _
      $region56: #{tpu_custom_call.1} parent=5 // pred_fallthru
        _
      %p418 = scmp.le.s32.totalorder 1, %s25
      %p419 = scmp.lt.s32.totalorder %s25, 3
      %p420 = pnand %p418, %p419
      %p421 = pneg %p420
      // Predicated region
      $region65: #{tpu_custom_call.1} parent=5 // pred_check
        _
      $region66: #{tpu_custom_call.1} parent=5 // pred_check_branch
        %423 = sbr.rel (%p420) target = $region68
      $region67: #{tpu_custom_call.1} parent=5 // pred_region
        %s424 = ssub.s32 %s25, 1
        %s425 = sand.u32 %s78, 1
        %s426 = scalar_lea.sflag [#allocation5], %s425
        %s427 = sand.u32 %s78, 1
        %s428 = smul.addr %s427, 4
        %s429 = scalar_lea.vmem [#allocation4], %s428
        // Predicated region
        $region69: #{tpu_custom_call.1} parent=67 // pred_check
          %p430 = pneg %p91
        $region70: #{tpu_custom_call.1} parent=67 // pred_check_branch
          %432 = sbr.rel (%p430) target = $region72
        $region71: #{tpu_custom_call.1} parent=67 // pred_region
          %434 = dma.done %s426, 64
        $region72: #{tpu_custom_call.1} parent=67 // pred_fallthru
          _
        // Predicated region
        $region73: #{tpu_custom_call.1} parent=67 // pred_check
          %p435 = pneg %p196
        $region74: #{tpu_custom_call.1} parent=67 // pred_check_branch
          %437 = sbr.rel (%p435) target = $region76
        $region75: #{tpu_custom_call.1} parent=67 // pred_region
          %439 = dma.done [#allocation8], 256
        $region76: #{tpu_custom_call.1} parent=67 // pred_fallthru
          _
        %p440 = scmp.lt.s32.totalorder %s34, 1
        %s441 = scalar_select %p440, %s34, 1
        %p442 = scmp.lt.s32.totalorder %s35, 0
        %s443 = scalar_select %p442, %s35, 0
        %s444 = sadd.s32 %s443, %s441
        %s445 = smul.addr %s444, 8
        %s446 = scalar_lea.vmem %s0, %s445
        %p447 = pneg %p65
        %p448 = pneg %p62
        %s449 = sand.u32 %s78, 1
        %s450 = scalar_lea.sflag [#allocation5], %s449
        %s451 = sand.u32 %s78, 1
        %s452 = smul.addr %s451, 4
        %s453 = scalar_lea.vmem [#allocation4], %s452
        %p454 = pneg %p91
        %p455 = pneg %p88
        %p456 = pneg %p112
        %p457 = pneg %p109
        %p458 = pneg %p133
        %p459 = pneg %p130
        %p460 = pneg %p154
        %p461 = pneg %p151
        %p462 = pneg %p175
        %p463 = pneg %p172
        %p464 = pneg %p196
        %p465 = pneg %p193
        %p466 = pneg %p217
        %p467 = pneg %p214
        %p468 = pneg %p238
        %p469 = pneg %p235
        %p470 = pneg %p259
        %p471 = pneg %p256
        %p472 = pneg %p280
        %p473 = pneg %p277
        %p474 = pneg %p301
        %p475 = pneg %p298
        %p476 = pneg %p329
        %p477 = pneg %p326
        %s478 = sand.u32 %s316, 1
        %s479 = scalar_lea.sflag [#allocation6], %s478
        %s480 = sand.u32 %s316, 1
        %s481 = smul.addr %s480, 8
        %s482 = scalar_lea.vmem [#allocation9], %s481
        %p483 = scmp.lt.s32.totalorder %s34, 1
        %s484 = scalar_select %p483, %s34, 1
        %p485 = scmp.lt.s32.totalorder %s35, 0
        %s486 = scalar_select %p485, %s35, 0
        %s487 = sadd.s32 %s486, %s484
        %s488 = smul.addr %s487, 8
        %s489 = scalar_lea.vmem %s0, %s488
        %p491 = scmp.eq.s32.totalorder %s35, 0
        // Predicated region
        $region77: #{tpu_custom_call.1} parent=67 // pred_check
          %p492 = pneg %p491
        $region78: #{tpu_custom_call.1} parent=67 // pred_check_branch
          %494 = sbr.rel (%p492) target = $region80
        $region79: #{tpu_custom_call.1} parent=67 // pred_region
          %v495 = vld [vmem:[%s429] sm:$0xf]
          %v496 = vld [vmem:[%s4] sm:$0xf]
          %v497 = vld [vmem:[%s4 + $0x4] sm:$0xf]
          %v498 = vld [vmem:[%s4 + $0x8] sm:$0xf]
          %v499 = vld [vmem:[%s4 + $0xc] sm:$0xf]
          %v500 = vld [vmem:[%s5] sm:$0x1]
          %v502 = vperm.slane %v500, 0
          %v508 = vunpack.c.l.b16 %v496
          %v509 = vunpack.c.l.b16 %v497
          %v510 = vunpack.c.l.b16 %v498
          %v511 = vunpack.c.l.b16 %v499
          %v512 = vpack.c.b16 %v509, %v508
          %v513 = vpack.c.b16 %v511, %v510
          %vm516 = vcmask 261120
          %v518 = vsel %vm516, %v495, 0
          %520 = vmatpush.bf16.msra.mxu0 0
          %521 = vmatpush.bf16.msra.mxu0 0
          %522 = vmatpush.bf16.msra.mxu0 0
          %523 = vmatpush.bf16.msra.mxu0 0
          %524 = vmatpush.bf16.msra.mxu0 0
          %525 = vmatpush.bf16.msra.mxu0 0
          %526 = vmatpush.bf16.msra.mxu0 %v513
          %527 = vmatpush.bf16.msra.mxu0 %v512
          %528 = vmatmul.bf16.gmra.mxu0 %v518
          %v529 = vpop.f32.mrf.mxu0
          %v530 = vadd.f32 %v502, %v529
          %v531 = vpop.f32.mrf.mxu0
          %532 = vdwg.mxu0
          %v533 = vpack.c.bf16 %v530, %v530
          %vm534 = vcmask 60416
          %535 = vst.msk [vmem:[#allocation2] sm:$0xf] %vm534, %v533
          %537 = vrot.lane.b32.xlu0 %v533, 96
          %v538 = vpop.permute.xlu0 %537
          %540 = vst.msk [vmem:[#allocation3] sm:$0xf] %vm534, %v538
          %541 = vrot.lane.b32.xlu0 %v533, 120
          %v542 = vpop.permute.xlu0 %541
          %s544 = scalar_lea.vmem [#allocation2], 4
          %545 = vst.msk [vmem:[%s544] sm:$0xf] %vm534, %v542
          %546 = vrot.lane.b32.xlu0 %v533, 88
          %v547 = vpop.permute.xlu0 %546
          %s549 = scalar_lea.vmem [#allocation3], 4
          %550 = vst.msk [vmem:[%s549] sm:$0xf] %vm534, %v547
          %551 = vrot.lane.b32.xlu0 %v533, 112
          %v552 = vpop.permute.xlu0 %551
          %s554 = scalar_lea.vmem [#allocation2], 8
          %555 = vst.msk [vmem:[%s554] sm:$0xf] %vm534, %v552
          %556 = vrot.lane.b32.xlu0 %v533, 80
          %v557 = vpop.permute.xlu0 %556
          %s559 = scalar_lea.vmem [#allocation3], 8
          %560 = vst.msk [vmem:[%s559] sm:$0xf] %vm534, %v557
          %561 = vrot.lane.b32.xlu0 %v533, 104
          %v562 = vpop.permute.xlu0 %561
          %s564 = scalar_lea.vmem [#allocation2], 12
          %565 = vst.msk [vmem:[%s564] sm:$0xf] %vm534, %v562
          %566 = vrot.lane.b32.xlu0 %v533, 72
          %v567 = vpop.permute.xlu0 %566
          %s569 = scalar_lea.vmem [#allocation3], 12
          %570 = vst.msk [vmem:[%s569] sm:$0xf] %vm534, %v567
        $region80: #{tpu_custom_call.1} parent=67 // pred_fallthru
          _
        %v571 = vld [vmem:[%s489] sm:$0xff]
        %v572 = vpack.c.bf16 %v571, %v571
        %v573 = vld [vmem:[%s2] sm:$0xf]
        %v574 = vld [vmem:[%s2 + $0x4] sm:$0xf]
        %v575 = vld [vmem:[%s2 + $0x8] sm:$0xf]
        %v576 = vld [vmem:[%s2 + $0xc] sm:$0xf]
        %v577 = vld [vmem:[%s3] sm:$0x1]
        %v579 = vperm.slane %v577, 0
        %v585 = vunpack.c.l.b16 %v573
        %v586 = vunpack.c.l.b16 %v574
        %v587 = vunpack.c.l.b16 %v575
        %v588 = vunpack.c.l.b16 %v576
        %v589 = vpack.c.b16 %v586, %v585
        %v590 = vpack.c.b16 %v588, %v587
        %vm593 = vcmask 261120
        %v595 = vsel %vm593, %v572, 0
        %597 = vmatpush.bf16.msra.mxu0 0
        %598 = vmatpush.bf16.msra.mxu0 0
        %599 = vmatpush.bf16.msra.mxu0 0
        %600 = vmatpush.bf16.msra.mxu0 0
        %601 = vmatpush.bf16.msra.mxu0 0
        %602 = vmatpush.bf16.msra.mxu0 0
        %603 = vmatpush.bf16.msra.mxu0 %v590
        %604 = vmatpush.bf16.msra.mxu0 %v589
        %605 = vmatmul.bf16.gmra.mxu0 %v595
        %v606 = vpop.f32.mrf.mxu0
        %v607 = vadd.f32 %v579, %v606
        %v608 = vpop.f32.mrf.mxu0
        %609 = vdwg.mxu0
        %611 = vrot.lane.b32.xlu0 %v607, 120
        %v612 = vpop.permute.xlu0 %611
        %614 = vrot.lane.b32.xlu0 %v607, 112
        %v615 = vpop.permute.xlu0 %614
        %617 = vrot.lane.b32.xlu0 %v607, 104
        %v618 = vpop.permute.xlu0 %617
        %v620 = vpack.c.bf16 %v607, %v607
        %v621 = vpack.c.bf16 %v612, %v612
        %v622 = vpack.c.bf16 %v615, %v615
        %v623 = vpack.c.bf16 %v618, %v618
        %v624 = vld [vmem:[#allocation2] sm:$0xf]
        %v625 = vld [vmem:[#allocation2 + $0x4] sm:$0xf]
        %v626 = vld [vmem:[#allocation2 + $0x8] sm:$0xf]
        %v627 = vld [vmem:[#allocation2 + $0xc] sm:$0xf]
        %v628 = vld [vmem:[#allocation3] sm:$0xf]
        %v629 = vld [vmem:[#allocation3 + $0x4] sm:$0xf]
        %v630 = vld [vmem:[#allocation3 + $0x8] sm:$0xf]
        %v631 = vld [vmem:[#allocation3 + $0xc] sm:$0xf]
        %vm632 = vcmask 64512
        %v634 = vsel %vm632, %v620, 0
        %v637 = vsel %vm632, %v624, 0
        %639 = vmatpush.bf16.xpose.msra.mxu0 0
        %640 = vmatpush.bf16.xpose.msra.mxu0 0
        %641 = vmatpush.bf16.xpose.msra.mxu0 0
        %642 = vmatpush.bf16.xpose.msra.mxu0 0
        %643 = vmatpush.bf16.xpose.msra.mxu0 0
        %644 = vmatpush.bf16.xpose.msra.mxu0 0
        %645 = vmatpush.bf16.xpose.msra.mxu0 0
        %646 = vmatpush.bf16.xpose.msra.mxu0 %v637
        %647 = vmatmul.bf16.gmra.mxu0 %v634
        %v648 = vpop.f32.mrf.mxu0
        %v649 = vadd.f32 0.0, %v648
        %v650 = vpop.f32.mrf.mxu0
        %651 = vdwg.mxu0
        %v653 = vsel %vm632, %v621, 0
        %v656 = vsel %vm632, %v625, 0
        %658 = vmatpush.bf16.xpose.msra.mxu0 0
        %659 = vmatpush.bf16.xpose.msra.mxu0 0
        %660 = vmatpush.bf16.xpose.msra.mxu0 0
        %661 = vmatpush.bf16.xpose.msra.mxu0 0
        %662 = vmatpush.bf16.xpose.msra.mxu0 0
        %663 = vmatpush.bf16.xpose.msra.mxu0 0
        %664 = vmatpush.bf16.xpose.msra.mxu0 0
        %665 = vmatpush.bf16.xpose.msra.mxu0 %v656
        %666 = vmatmul.bf16.gmra.mxu0 %v653
        %v667 = vpop.f32.mrf.mxu0
        %v668 = vadd.f32 0.0, %v667
        %v669 = vpop.f32.mrf.mxu0
        %670 = vdwg.mxu0
        %v672 = vsel %vm632, %v622, 0
        %v675 = vsel %vm632, %v626, 0
        %677 = vmatpush.bf16.xpose.msra.mxu0 0
        %678 = vmatpush.bf16.xpose.msra.mxu0 0
        %679 = vmatpush.bf16.xpose.msra.mxu0 0
        %680 = vmatpush.bf16.xpose.msra.mxu0 0
        %681 = vmatpush.bf16.xpose.msra.mxu0 0
        %682 = vmatpush.bf16.xpose.msra.mxu0 0
        %683 = vmatpush.bf16.xpose.msra.mxu0 0
        %684 = vmatpush.bf16.xpose.msra.mxu0 %v675
        %685 = vmatmul.bf16.gmra.mxu0 %v672
        %v686 = vpop.f32.mrf.mxu0
        %v687 = vadd.f32 0.0, %v686
        %v688 = vpop.f32.mrf.mxu0
        %689 = vdwg.mxu0
        %v691 = vsel %vm632, %v623, 0
        %v694 = vsel %vm632, %v627, 0
        %696 = vmatpush.bf16.xpose.msra.mxu0 0
        %697 = vmatpush.bf16.xpose.msra.mxu0 0
        %698 = vmatpush.bf16.xpose.msra.mxu0 0
        %699 = vmatpush.bf16.xpose.msra.mxu0 0
        %700 = vmatpush.bf16.xpose.msra.mxu0 0
        %701 = vmatpush.bf16.xpose.msra.mxu0 0
        %702 = vmatpush.bf16.xpose.msra.mxu0 0
        %703 = vmatpush.bf16.xpose.msra.mxu0 %v694
        %704 = vmatmul.bf16.gmra.mxu0 %v691
        %v705 = vpop.f32.mrf.mxu0
        %v706 = vadd.f32 0.0, %v705
        %v707 = vpop.f32.mrf.mxu0
        %708 = vdwg.mxu0
        %v709 = vsel %vm632, %v649, -inf
        %710 = vmax.xlane.f32.xlu0 %v709
        %v711 = vpop.xlane.xlu0 %710
        %v712 = vsel %vm632, %v668, -inf
        %713 = vmax.xlane.f32.xlu0 %v712
        %v714 = vpop.xlane.xlu0 %713
        %v715 = vsel %vm632, %v687, -inf
        %716 = vmax.xlane.f32.xlu0 %v715
        %v717 = vpop.xlane.xlu0 %716
        %v718 = vsel %vm632, %v706, -inf
        %719 = vmax.xlane.f32.xlu0 %v718
        %v720 = vpop.xlane.xlu0 %719
        %v721 = vsub.f32 -inf, %v711
        %v722 = vsub.f32 -inf, %v714
        %v723 = vsub.f32 -inf, %v717
        %v724 = vsub.f32 -inf, %v720
        %v725 = vmul.f32 %v721, 1.442695
        %v726 = vpow.pop %v725
        %v727 = vmul.f32 %v722, 1.442695
        %v728 = vpow.pop %v727
        %v729 = vmul.f32 %v723, 1.442695
        %v730 = vpow.pop %v729
        %v731 = vmul.f32 %v724, 1.442695
        %v732 = vpow.pop %v731
        %v733 = vsub.f32 %v649, %v711
        %v734 = vsub.f32 %v668, %v714
        %v735 = vsub.f32 %v687, %v717
        %v736 = vsub.f32 %v706, %v720
        %v737 = vmul.f32 %v733, 1.442695
        %v738 = vpow.pop %v737
        %v739 = vmul.f32 %v734, 1.442695
        %v740 = vpow.pop %v739
        %v741 = vmul.f32 %v735, 1.442695
        %v742 = vpow.pop %v741
        %v743 = vmul.f32 %v736, 1.442695
        %v744 = vpow.pop %v743
        %v745 = vmul.f32 %v726, 0.0
        %v746 = vmul.f32 %v728, 0.0
        %v747 = vmul.f32 %v730, 0.0
        %v748 = vmul.f32 %v732, 0.0
        %v749 = vsel %vm632, %v738, 0.0
        %750 = vadd.xlane.f32.xlu0 %v749
        %v751 = vpop.xlane.xlu0 %750
        %v752 = vsel %vm632, %v740, 0.0
        %753 = vadd.xlane.f32.xlu0 %v752
        %v754 = vpop.xlane.xlu0 %753
        %v755 = vsel %vm632, %v742, 0.0
        %756 = vadd.xlane.f32.xlu0 %v755
        %v757 = vpop.xlane.xlu0 %756
        %v758 = vsel %vm632, %v744, 0.0
        %759 = vadd.xlane.f32.xlu0 %v758
        %v760 = vpop.xlane.xlu0 %759
        %v761 = vadd.f32 %v745, %v751
        %v762 = vadd.f32 %v746, %v754
        %v763 = vadd.f32 %v747, %v757
        %v764 = vadd.f32 %v748, %v760
        %v765 = vpack.c.bf16 %v738, %v738
        %v766 = vpack.c.bf16 %v740, %v740
        %v767 = vpack.c.bf16 %v742, %v742
        %v768 = vpack.c.bf16 %v744, %v744
        %v770 = vsel %vm632, %v765, 0
        %vm772 = vcmask 1043456
        %v774 = vsel %vm772, %v628, 0
        %776 = vmatpush.bf16.msra.mxu0 0
        %777 = vmatpush.bf16.msra.mxu0 0
        %778 = vmatpush.bf16.msra.mxu0 0
        %779 = vmatpush.bf16.msra.mxu0 0
        %780 = vmatpush.bf16.msra.mxu0 0
        %781 = vmatpush.bf16.msra.mxu0 0
        %782 = vmatpush.bf16.msra.mxu0 0
        %783 = vmatpush.bf16.msra.mxu0 %v774
        %784 = vmatmul.bf16.gmra.mxu0 %v770
        %v785 = vpop.f32.mrf.mxu0
        %v786 = vadd.f32 0.0, %v785
        %v787 = vpop.f32.mrf.mxu0
        %788 = vdwg.mxu0
        %v790 = vsel %vm632, %v766, 0
        %v793 = vsel %vm772, %v629, 0
        %795 = vmatpush.bf16.msra.mxu0 0
        %796 = vmatpush.bf16.msra.mxu0 0
        %797 = vmatpush.bf16.msra.mxu0 0
        %798 = vmatpush.bf16.msra.mxu0 0
        %799 = vmatpush.bf16.msra.mxu0 0
        %800 = vmatpush.bf16.msra.mxu0 0
        %801 = vmatpush.bf16.msra.mxu0 0
        %802 = vmatpush.bf16.msra.mxu0 %v793
        %803 = vmatmul.bf16.gmra.mxu0 %v790
        %v804 = vpop.f32.mrf.mxu0
        %v805 = vadd.f32 0.0, %v804
        %v806 = vpop.f32.mrf.mxu0
        %807 = vdwg.mxu0
        %v809 = vsel %vm632, %v767, 0
        %v812 = vsel %vm772, %v630, 0
        %814 = vmatpush.bf16.msra.mxu0 0
        %815 = vmatpush.bf16.msra.mxu0 0
        %816 = vmatpush.bf16.msra.mxu0 0
        %817 = vmatpush.bf16.msra.mxu0 0
        %818 = vmatpush.bf16.msra.mxu0 0
        %819 = vmatpush.bf16.msra.mxu0 0
        %820 = vmatpush.bf16.msra.mxu0 0
        %821 = vmatpush.bf16.msra.mxu0 %v812
        %822 = vmatmul.bf16.gmra.mxu0 %v809
        %v823 = vpop.f32.mrf.mxu0
        %v824 = vadd.f32 0.0, %v823
        %v825 = vpop.f32.mrf.mxu0
        %826 = vdwg.mxu0
        %v828 = vsel %vm632, %v768, 0
        %v831 = vsel %vm772, %v631, 0
        %833 = vmatpush.bf16.msra.mxu0 0
        %834 = vmatpush.bf16.msra.mxu0 0
        %835 = vmatpush.bf16.msra.mxu0 0
        %836 = vmatpush.bf16.msra.mxu0 0
        %837 = vmatpush.bf16.msra.mxu0 0
        %838 = vmatpush.bf16.msra.mxu0 0
        %839 = vmatpush.bf16.msra.mxu0 0
        %840 = vmatpush.bf16.msra.mxu0 %v831
        %841 = vmatmul.bf16.gmra.mxu0 %v828
        %v842 = vpop.f32.mrf.mxu0
        %v843 = vadd.f32 0.0, %v842
        %v844 = vpop.f32.mrf.mxu0
        %845 = vdwg.mxu0
        %v846 = vadd.f32 %v745, %v786
        %v847 = vadd.f32 %v746, %v805
        %v848 = vadd.f32 %v747, %v824
        %v849 = vadd.f32 %v748, %v843
        %v850 = vrcp.pop %v761
        %v851 = vrcp.pop %v762
        %v852 = vrcp.pop %v763
        %v853 = vrcp.pop %v764
        %v854 = vmul.f32 %v846, %v850
        %v855 = vmul.f32 %v847, %v851
        %v856 = vmul.f32 %v848, %v852
        %v857 = vmul.f32 %v849, %v853
        %859 = vrot.lane.b32.xlu0 %v855, 8
        %v860 = vpop.permute.xlu0 %859
        %863 = vrot.lane.b32.xlu0 %v856, 16
        %v864 = vpop.permute.xlu0 %863
        %867 = vrot.lane.b32.xlu0 %v857, 24
        %v868 = vpop.permute.xlu0 %867
        %v870 = vsel %vm632, %v854, %v860
        %vm871 = vcmask 130048
        %v872 = vsel %vm871, %v870, %v864
        %vm873 = vcmask 195584
        %v874 = vsel %vm873, %v872, %v868
        %v875 = vpack.c.bf16 %v874, %v874
        %v876 = vld [vmem:[#allocation7] sm:$0xf]
        %v877 = vld [vmem:[#allocation7 + $0x4] sm:$0xf]
        %v878 = vld [vmem:[#allocation7 + $0x8] sm:$0xf]
        %v879 = vld [vmem:[#allocation7 + $0xc] sm:$0xf]
        %v880 = vld [vmem:[%s7] sm:$0x1]
        %v882 = vperm.slane %v880, 0
        %v888 = vunpack.c.l.b16 %v876
        %v889 = vunpack.c.l.b16 %v877
        %v890 = vunpack.c.l.b16 %v878
        %v891 = vunpack.c.l.b16 %v879
        %v892 = vpack.c.b16 %v889, %v888
        %v893 = vpack.c.b16 %v891, %v890
        %v897 = vsel %vm593, %v875, 0
        %899 = vmatpush.bf16.msra.mxu0 0
        %900 = vmatpush.bf16.msra.mxu0 0
        %901 = vmatpush.bf16.msra.mxu0 0
        %902 = vmatpush.bf16.msra.mxu0 0
        %903 = vmatpush.bf16.msra.mxu0 0
        %904 = vmatpush.bf16.msra.mxu0 0
        %905 = vmatpush.bf16.msra.mxu0 %v893
        %906 = vmatpush.bf16.msra.mxu0 %v892
        %907 = vmatmul.bf16.gmra.mxu0 %v897
        %v908 = vpop.f32.mrf.mxu0
        %v909 = vadd.f32 %v882, %v908
        %v910 = vpop.f32.mrf.mxu0
        %911 = vdwg.mxu0
        %v912 = vadd.f32 %v571, %v909
        %v913 = vld [vmem:[%s8] sm:$0x1]
        %v914 = vmul.f32 %v912, %v912
        %v915 = vsel %vm593, %v914, 0.0
        %916 = vadd.xlane.f32.xlu0 %v915
        %v917 = vpop.xlane.xlu0 %916
        %v918 = vrcp.pop 32.0
        %v919 = vmul.f32 32.0, %v918
        %v920 = vsub.f32 1.0, %v919
        %v921 = vmul.f32 %v918, %v920
        %v922 = vadd.f32 %v918, %v921
        %vm923 = vweird.f32 %v918
        %v924 = vsel %vm923, %v918, %v922
        %v925 = vmul.f32 %v917, %v924
        %v926 = vadd.f32 %v925, 1e-05
        %v927 = vrsqrt.pop %v926
        %v928 = vmul.f32 %v927, %v926
        %v929 = vmul.f32 %v928, %v927
        %v930 = vmul.f32 0.5, %v929
        %v931 = vsub.f32 1.5, %v930
        %v932 = vmul.f32 %v927, %v931
        %vm933 = vweird.f32 %v926
        %vm934 = vweird.f32 %v927
        %vm935 = vmor %vm933, %vm934
        %v936 = vsel %vm935, %v927, %v932
        %v937 = vmul.f32 %v912, %v936
        %v939 = vperm.slane %v913, 0
        %v941 = vmul.f32 %v939, %v937
        %v942 = vpack.c.bf16 %v941, %v941
        %v943 = vld [vmem:[%s9] sm:$0xff]
        %v944 = vld [vmem:[%s9 + $0x8] sm:$0xff]
        %v945 = vld [vmem:[%s9 + $0x10] sm:$0xff]
        %v946 = vld [vmem:[%s9 + $0x18] sm:$0xff]
        %v951 = vunpack.c.l.b16 %v943
        %v952 = vunpack.c.h.b16 %v943
        %v953 = vunpack.c.l.b16 %v944
        %v954 = vunpack.c.h.b16 %v944
        %v955 = vunpack.c.l.b16 %v945
        %v956 = vunpack.c.h.b16 %v945
        %v957 = vunpack.c.l.b16 %v946
        %v958 = vunpack.c.h.b16 %v946
        %v959 = vpack.c.b16 %v953, %v951
        %v960 = vpack.c.b16 %v954, %v952
        %v961 = vpack.c.b16 %v957, %v955
        %v962 = vpack.c.b16 %v958, %v956
        %v968 = vsel %vm593, %v942, 0
        %970 = vmatpush.bf16.msra.mxu0 0
        %971 = vmatpush.bf16.msra.mxu0 0
        %972 = vmatpush.bf16.msra.mxu0 0
        %973 = vmatpush.bf16.msra.mxu0 0
        %974 = vmatpush.bf16.msra.mxu0 0
        %975 = vmatpush.bf16.msra.mxu0 0
        %976 = vmatpush.bf16.msra.mxu0 %v961
        %977 = vmatpush.bf16.msra.mxu0 %v959
        %978 = vmatmul.bf16.gmra.mxu0 %v968
        %v979 = vpop.f32.mrf.mxu0
        %v980 = vadd.f32 0.0, %v979
        %v981 = vpop.f32.mrf.mxu0
        %982 = vdwg.mxu0
        %983 = vmatpush.bf16.msra.mxu0 0
        %984 = vmatpush.bf16.msra.mxu0 0
        %985 = vmatpush.bf16.msra.mxu0 0
        %986 = vmatpush.bf16.msra.mxu0 0
        %987 = vmatpush.bf16.msra.mxu0 0
        %988 = vmatpush.bf16.msra.mxu0 0
        %989 = vmatpush.bf16.msra.mxu0 %v962
        %990 = vmatpush.bf16.msra.mxu0 %v960
        %991 = vmatmul.bf16.gmra.mxu0 %v968
        %v992 = vpop.f32.mrf.mxu0
        %v993 = vadd.f32 0.0, %v992
        %v994 = vpop.f32.mrf.mxu0
        %995 = vdwg.mxu0
        %v996 = vxor.u32 %v980, 2147483648
        %v997 = vmul.f32 %v996, 1.442695
        %v998 = vpow.pop %v997
        %v999 = vadd.f32 %v998, 1.0
        %v1000 = vrcp.pop %v999
        %v1001 = vmul.f32 %v999, %v1000
        %v1002 = vsub.f32 1.0, %v1001
        %v1003 = vmul.f32 %v1000, %v1002
        %v1004 = vadd.f32 %v1000, %v1003
        %vm1005 = vweird.f32 %v999
        %vm1006 = vweird.f32 %v1000
        %vm1007 = vmor %vm1005, %vm1006
        %v1008 = vsel %vm1007, %v1000, %v1004
        %v1009 = vand.u32 2147483647, %v999
        %vm1010 = vcmp.eq.f32.partialorder %v1009, 8.507059e+37
        %v1011 = vand.u32 %v999, 2147483648
        %v1012 = vor.u32 1.1754944e-38, %v1011
        %v1013 = vsel %vm1010, %v1012, %v1008
        %v1014 = vmul.f32 1.0, %v1013
        %v1015 = vmul.f32 %v980, %v1014
        %v1016 = vmul.f32 %v1015, %v993
        %v1017 = vpack.c.bf16 %v1016, %v1016
        %v1018 = vld [vmem:[%s10] sm:$0xf]
        %v1019 = vld [vmem:[%s10 + $0x4] sm:$0xf]
        %v1020 = vld [vmem:[%s10 + $0x8] sm:$0xf]
        %v1021 = vld [vmem:[%s10 + $0xc] sm:$0xf]
        %v1022 = vld [vmem:[%s10 + $0x10] sm:$0xf]
        %v1023 = vld [vmem:[%s10 + $0x14] sm:$0xf]
        %v1024 = vld [vmem:[%s10 + $0x18] sm:$0xf]
        %v1025 = vld [vmem:[%s10 + $0x1c] sm:$0xf]
        %v1026 = vld [vmem:[%s10 + $0x20] sm:$0xf]
        %v1027 = vld [vmem:[%s10 + $0x24] sm:$0xf]
        %v1028 = vld [vmem:[%s10 + $0x28] sm:$0xf]
        %v1029 = vld [vmem:[%s10 + $0x2c] sm:$0xf]
        %v1030 = vld [vmem:[%s10 + $0x30] sm:$0xf]
        %v1031 = vld [vmem:[%s10 + $0x34] sm:$0xf]
        %v1032 = vld [vmem:[%s10 + $0x38] sm:$0xf]
        %v1033 = vld [vmem:[%s10 + $0x3c] sm:$0xf]
        %v1050 = vunpack.c.l.b16 %v1018
        %v1051 = vunpack.c.l.b16 %v1019
        %v1052 = vunpack.c.l.b16 %v1020
        %v1053 = vunpack.c.l.b16 %v1021
        %v1054 = vunpack.c.l.b16 %v1022
        %v1055 = vunpack.c.l.b16 %v1023
        %v1056 = vunpack.c.l.b16 %v1024
        %v1057 = vunpack.c.l.b16 %v1025
        %v1058 = vunpack.c.l.b16 %v1026
        %v1059 = vunpack.c.l.b16 %v1027
        %v1060 = vunpack.c.l.b16 %v1028
        %v1061 = vunpack.c.l.b16 %v1029
        %v1062 = vunpack.c.l.b16 %v1030
        %v1063 = vunpack.c.l.b16 %v1031
        %v1064 = vunpack.c.l.b16 %v1032
        %v1065 = vunpack.c.l.b16 %v1033
        %v1066 = vpack.c.b16 %v1051, %v1050
        %v1067 = vpack.c.b16 %v1053, %v1052
        %v1068 = vpack.c.b16 %v1055, %v1054
        %v1069 = vpack.c.b16 %v1057, %v1056
        %v1070 = vpack.c.b16 %v1059, %v1058
        %v1071 = vpack.c.b16 %v1061, %v1060
        %v1072 = vpack.c.b16 %v1063, %v1062
        %v1073 = vpack.c.b16 %v1065, %v1064
        %1082 = vmatpush.bf16.msra.mxu0 %v1073
        %1083 = vmatpush.bf16.msra.mxu0 %v1072
        %1084 = vmatpush.bf16.msra.mxu0 %v1071
        %1085 = vmatpush.bf16.msra.mxu0 %v1070
        %1086 = vmatpush.bf16.msra.mxu0 %v1069
        %1087 = vmatpush.bf16.msra.mxu0 %v1068
        %1088 = vmatpush.bf16.msra.mxu0 %v1067
        %1089 = vmatpush.bf16.msra.mxu0 %v1066
        %1090 = vmatmul.bf16.gmra.mxu0 %v1017
        %v1091 = vpop.f32.mrf.mxu0
        %v1092 = vadd.f32 0.0, %v1091
        %v1093 = vpop.f32.mrf.mxu0
        %1094 = vdwg.mxu0
        %v1095 = vadd.f32 %v941, %v1092
        %v1096 = vld [vmem:[%s11] sm:$0x1]
        %v1097 = vmul.f32 %v1095, %v1095
        %v1098 = vsel %vm593, %v1097, 0.0
        %1099 = vadd.xlane.f32.xlu0 %v1098
        %v1100 = vpop.xlane.xlu0 %1099
        %v1101 = vmul.f32 %v1100, %v924
        %v1102 = vadd.f32 %v1101, 1e-05
        %v1103 = vrsqrt.pop %v1102
        %v1104 = vmul.f32 %v1103, %v1102
        %v1105 = vmul.f32 %v1104, %v1103
        %v1106 = vmul.f32 0.5, %v1105
        %v1107 = vsub.f32 1.5, %v1106
        %v1108 = vmul.f32 %v1103, %v1107
        %vm1109 = vweird.f32 %v1102
        %vm1110 = vweird.f32 %v1103
        %vm1111 = vmor %vm1109, %vm1110
        %v1112 = vsel %vm1111, %v1103, %v1108
        %v1113 = vmul.f32 %v1095, %v1112
        %v1115 = vperm.slane %v1096, 0
        %v1117 = vmul.f32 %v1115, %v1113
        %1118 = vst.msk [vmem:[%s482] sm:$0xff] %vm593, %v1117
        %s1119 = sand.u32 %s316, 1
        %s1120 = scalar_lea.sflag [#allocation6], %s1119
        %s1121 = sand.u32 %s316, 1
        %s1122 = smul.addr %s1121, 8
        %s1123 = scalar_lea.vmem [#allocation9], %s1122
        // Predicated region
        $region81: #{tpu_custom_call.1} parent=67 // pred_check
          %p1124 = pneg %p326
        $region82: #{tpu_custom_call.1} parent=67 // pred_check_branch
          %1126 = sbr.rel (%p1124) target = $region84
        $region83: #{tpu_custom_call.1} parent=67 // pred_region
          %1128 = vsyncadd %s1120, 0
          %s1129 = sadd.s32 %s35, %s34
          %s1130 = smul.addr %s1129, 8
          %s1131 = scalar_lea.hbm %s12, %s1130
          %s1133 = sshll.u32 %s1123, 4
          %s1134 = int_to_ptr.vmem [resolvable:$true] %s1133
          %s1135 = sshll.u32 %s1131, 4
          %s1136 = int_to_ptr.hbm [resolvable:$true] %s1135
          %1138 = dma.vmem_to_hbm [thread:$0]  %s1134, 128, %s1136, %s1120
        $region84: #{tpu_custom_call.1} parent=67 // pred_fallthru
          _
      $region68: #{tpu_custom_call.1} parent=5 // pred_fallthru
        _
      %p1139 = scmp.le.s32.totalorder 2, %s25
      // Predicated region
      $region85: #{tpu_custom_call.1} parent=5 // pred_check
        %p1140 = pneg %p1139
      $region86: #{tpu_custom_call.1} parent=5 // pred_check_branch
        %1142 = sbr.rel (%p1140) target = $region88
      $region87: #{tpu_custom_call.1} parent=5 // pred_region
        %s1143 = ssub.s32 %s25, 2
        // Predicated region
        $region89: #{tpu_custom_call.1} parent=87 // pred_check
          %p1144 = pneg %p332
        $region90: #{tpu_custom_call.1} parent=87 // pred_check_branch
          %1146 = sbr.rel (%p1144) target = $region92
        $region91: #{tpu_custom_call.1} parent=87 // pred_region
          %s1147 = sand.u32 %s317, 1
          %s1148 = scalar_lea.sflag [#allocation6], %s1147
          %s1149 = sand.u32 %s317, 1
          %s1150 = smul.addr %s1149, 8
          %s1151 = scalar_lea.vmem [#allocation9], %s1150
          %1153 = dma.done %s1148, 128
        $region92: #{tpu_custom_call.1} parent=87 // pred_fallthru
          _
      $region88: #{tpu_custom_call.1} parent=5 // pred_fallthru
        _
    $region6: #{tpu_custom_call.1} parent=1 // loop_footer
      %s29 = sadd.s32 1, %s25
    $region7: #{tpu_custom_call.1} parent=1 // loop_footer_branch
      %24 = sbr.rel target = $region3
    $region8: #{tpu_custom_call.1} parent=1 // loop_exit
      _
    %1154 = vsyncpa [#allocation5], 1
    %s1155 = scalar_lea.sflag [#allocation5], 1
    %1156 = vsyncpa %s1155, 1
    %1157 = vsyncpa [#allocation8], 1
    %1158 = vsyncpa [#allocation6], 1
    %s1159 = scalar_lea.sflag [#allocation6], 1
    %1160 = vsyncpa %s1159, 1

// kernel: tpu_custom_call.1
$region0: #{tpu_custom_call.1}
  #allocation0 [shape = 'u32[]', space=smem, size = 0x4, offset = 0x4, fixed_abs, tag = 'smem constant byte address 0x4 - core index']
  #allocation1 [shape = 'u32[72,128]{1,0:T(1,128)}', space=vmem, size = 0x9000, scoped, tag = 'internal scratch']
  #allocation2 [shape = 'bf16[4,8,8]{2,1,0:T(8,128)(2,1)}', space=vmem, size = 0x2000, scoped, tag = 'scratch operand']
  #allocation3 [shape = 'bf16[4,8,8]{2,1,0:T(8,128)(2,1)}', space=vmem, size = 0x2000, scoped, tag = 'scratch operand']
  %s0 = inlined_call_operand.vmem [shape: f32[2,8,32], index: 0, kind: input, shape index: {}]
  %s1 = inlined_call_operand.hbm [shape: bf16[2,8,32], index: 1, kind: input, shape index: {}]
  %s2 = inlined_call_operand.vmem [shape: bf16[32,32], index: 2, kind: input, shape index: {}]
  %s3 = inlined_call_operand.vmem [shape: f32[1,32], index: 3, kind: input, shape index: {}]
  %s4 = inlined_call_operand.vmem [shape: bf16[32,64], index: 4, kind: input, shape index: {}]
  %s5 = inlined_call_operand.vmem [shape: f32[1,64], index: 5, kind: input, shape index: {}]
  %s6 = inlined_call_operand.hbm [shape: bf16[32,32], index: 6, kind: input, shape index: {}]
  %s7 = inlined_call_operand.vmem [shape: f32[1,32], index: 7, kind: input, shape index: {}]
  %s8 = inlined_call_operand.vmem [shape: f32[1,32], index: 8, kind: input, shape index: {}]
  %s9 = inlined_call_operand.vmem [shape: bf16[32,256], index: 9, kind: input, shape index: {}]
  %s10 = inlined_call_operand.vmem [shape: bf16[128,32], index: 10, kind: input, shape index: {}]
  %s11 = inlined_call_operand.vmem [shape: f32[1,32], index: 11, kind: input, shape index: {}]
  %s12 = inlined_call_operand.hbm [shape: f32[2,8,32], index: 12, kind: output, shape index: {}]
  %s13 = sld [smem:[#allocation0]]
  $region93: #{tpu_custom_call.1} parent=0
    _
  %s15 = ssub.s32 1, %s13
  %s16 = scalar_select 0, %s15, %s13
  $region1: #{tpu_custom_call.1} parent=0
    #allocation4 [shape = 'u8[4096]{0}', space=vmem, size = 0x1000, scoped, tag = 'input window, operand 1']
    #allocation5 [shape = 's32[2]{0}', space=sflag, size = 0x8, scoped, tag = 'scoped memory for tpu_custom_call.1']
    #allocation6 [shape = 's32[2]{0}', space=sflag, size = 0x8, scoped, tag = 'scoped memory for tpu_custom_call.1']
    #allocation7 [shape = 'u8[8192]{0}', space=vmem, size = 0x2000, scoped, tag = 'input window, operand 6, single buffered']
    #allocation8 [shape = 's32[1]{0}', space=sflag, size = 0x4, scoped, tag = 'scoped memory for tpu_custom_call.1']
    #allocation9 [shape = 'u8[8192]{0}', space=vmem, size = 0x2000, scoped, tag = 'output window, operand 0']
    %17 = vsyncpa [#allocation5], 0
    %s18 = scalar_lea.sflag [#allocation5], 1
    %19 = vsyncpa %s18, 0
    %20 = vsyncpa [#allocation8], 0
    %21 = vsyncpa [#allocation6], 0
    %s22 = scalar_lea.sflag [#allocation6], 1
    %23 = vsyncpa %s22, 0
    loop: start=0, step=1, limit=4
    $region2: #{tpu_custom_call.1} parent=1 // loop_pre_header
      _
    $region3: #{tpu_custom_call.1} parent=1 // loop_header
      %s25 = sphi 0, %s29
      %p26 = scmp.ge.s32.totalorder %s25, 4
      %s32 = sphi 0, %s44
      %s33 = sphi 0, %s40
      %s34 = sphi 0, %s32
      %s35 = sphi 0, %s33
      %s36 = sphi 0, %s34
      %s37 = sphi 0, %s35
      %s49 = sphi 0, %s51
      %s52 = sphi 0, %s49
      %s53 = sphi 0, %s52
      %s69 = sphi 0, %s53
      %s75 = sphi 0, %s77
      %s78 = sphi 0, %s75
      %s79 = sphi 0, %s78
      %s95 = sphi 0, %s79
      %s99 = sphi 0, %s99
      %s101 = sphi 0, %s99
      %s102 = sphi 0, %s101
      %s116 = sphi 0, %s102
      %s120 = sphi 0, %s120
      %s122 = sphi 0, %s120
      %s123 = sphi 0, %s122
      %s137 = sphi 0, %s123
      %s141 = sphi 0, %s141
      %s143 = sphi 0, %s141
      %s144 = sphi 0, %s143
      %s158 = sphi 0, %s144
      %s162 = sphi 0, %s162
      %s164 = sphi 0, %s162
      %s165 = sphi 0, %s164
      %s179 = sphi 0, %s165
      %s183 = sphi 0, %s183
      %s185 = sphi 0, %s183
      %s186 = sphi 0, %s185
      %s200 = sphi 0, %s186
      %s204 = sphi 0, %s204
      %s206 = sphi 0, %s204
      %s207 = sphi 0, %s206
      %s221 = sphi 0, %s207
      %s225 = sphi 0, %s225
      %s227 = sphi 0, %s225
      %s228 = sphi 0, %s227
      %s242 = sphi 0, %s228
      %s246 = sphi 0, %s246
      %s248 = sphi 0, %s246
      %s249 = sphi 0, %s248
      %s263 = sphi 0, %s249
      %s267 = sphi 0, %s267
      %s269 = sphi 0, %s267
      %s270 = sphi 0, %s269
      %s284 = sphi 0, %s270
      %s288 = sphi 0, %s288
      %s290 = sphi 0, %s288
      %s291 = sphi 0, %s290
      %s305 = sphi 0, %s291
      %s313 = sphi 0, %s315
      %s316 = sphi 0, %s313
      %s317 = sphi 0, %s316
      %s333 = sphi 0, %s317
    $region4: #{tpu_custom_call.1} parent=1 // loop_header_branch
      %28 = sbr.rel (%p26) target = $region8
    $region5: #{tpu_custom_call.1} parent=1 // loop_body
      %s30 = ssub.s32 %s25, 1
      %s31 = ssub.s32 %s25, 2
      %s38 = sadd.s32 1, %s33
      %p39 = scmp.ge.s32.totalorder %s38, 1
      %s40 = scalar_select %p39, 0, %s38
      %s41 = sadd.s32 1, %s32
      %s42 = scalar_select %p39, %s41, %s32
      %p43 = scmp.ge.s32.totalorder %s42, 2
      %s44 = scalar_select %p43, 0, %s42
      %s45 = ssub.s32 %s32, %s44
      %s46 = ssub.s32 %s33, %s40
      %s47 = sor.u32 %s45, %s46
      %p48 = scmp.eq.s32.totalorder %s47, 0
      %s50 = sadd.s32 %s49, 1
      %s51 = scalar_select %p48, %s49, %s50
      %p54 = pneg %p48
      %p55 = scmp.eq.s32.totalorder %s25, 1
      %p56 = por %p54, %p55
      %p57 = scmp.ne.s32.totalorder %s49, %s52
      %p58 = scmp.eq.s32.totalorder %s25, 0
      %p59 = por %p57, %p58
      %p60 = scmp.ne.s32.totalorder %s49, %s52
      %p61 = scmp.eq.s32.totalorder %s30, 1
      %p62 = por %p60, %p61
      %p63 = scmp.ne.s32.totalorder %s52, %s53
      %p64 = scmp.eq.s32.totalorder %s30, 0
      %p65 = por %p63, %p64
      %p66 = scmp.ne.s32.totalorder %s52, %s53
      %p67 = scmp.eq.s32.totalorder %s31, 1
      %p68 = por %p66, %p67
      %p70 = scmp.ne.s32.totalorder %s53, %s69
      %p71 = scmp.eq.s32.totalorder %s31, 0
      %p72 = por %p70, %p71
      %s73 = ssub.s32 %s32, %s44
      %p74 = scmp.eq.s32.totalorder %s73, 0
      %s76 = sadd.s32 %s75, 1
      %s77 = scalar_select %p74, %s75, %s76
      %p80 = pneg %p74
      %p81 = scmp.eq.s32.totalorder %s25, 1
      %p82 = por %p80, %p81
      %p83 = scmp.ne.s32.totalorder %s75, %s78
      %p84 = scmp.eq.s32.totalorder %s25, 0
      %p85 = por %p83, %p84
      %p86 = scmp.ne.s32.totalorder %s75, %s78
      %p87 = scmp.eq.s32.totalorder %s30, 1
      %p88 = por %p86, %p87
      %p89 = scmp.ne.s32.totalorder %s78, %s79
      %p90 = scmp.eq.s32.totalorder %s30, 0
      %p91 = por %p89, %p90
      %p92 = scmp.ne.s32.totalorder %s78, %s79
      %p93 = scmp.eq.s32.totalorder %s31, 1
      %p94 = por %p92, %p93
      %p96 = scmp.ne.s32.totalorder %s79, %s95
      %p97 = scmp.eq.s32.totalorder %s31, 0
      %p98 = por %p96, %p97
      %s100 = sadd.s32 %s99, 1
      %p103 = scmp.eq.s32.totalorder %s25, 1
      %p104 = scmp.ne.s32.totalorder %s99, %s101
      %p105 = scmp.eq.s32.totalorder %s25, 0
      %p106 = por %p104, %p105
      %p107 = scmp.ne.s32.totalorder %s99, %s101
      %p108 = scmp.eq.s32.totalorder %s30, 1
      %p109 = por %p107, %p108
      %p110 = scmp.ne.s32.totalorder %s101, %s102
      %p111 = scmp.eq.s32.totalorder %s30, 0
      %p112 = por %p110, %p111
      %p113 = scmp.ne.s32.totalorder %s101, %s102
      %p114 = scmp.eq.s32.totalorder %s31, 1
      %p115 = por %p113, %p114
      %p117 = scmp.ne.s32.totalorder %s102, %s116
      %p118 = scmp.eq.s32.totalorder %s31, 0
      %p119 = por %p117, %p118
      %s121 = sadd.s32 %s120, 1
      %p124 = scmp.eq.s32.totalorder %s25, 1
      %p125 = scmp.ne.s32.totalorder %s120, %s122
      %p126 = scmp.eq.s32.totalorder %s25, 0
      %p127 = por %p125, %p126
      %p128 = scmp.ne.s32.totalorder %s120, %s122
      %p129 = scmp.eq.s32.totalorder %s30, 1
      %p130 = por %p128, %p129
      %p131 = scmp.ne.s32.totalorder %s122, %s123
      %p132 = scmp.eq.s32.totalorder %s30, 0
      %p133 = por %p131, %p132
      %p134 = scmp.ne.s32.totalorder %s122, %s123
      %p135 = scmp.eq.s32.totalorder %s31, 1
      %p136 = por %p134, %p135
      %p138 = scmp.ne.s32.totalorder %s123, %s137
      %p139 = scmp.eq.s32.totalorder %s31, 0
      %p140 = por %p138, %p139
      %s142 = sadd.s32 %s141, 1
      %p145 = scmp.eq.s32.totalorder %s25, 1
      %p146 = scmp.ne.s32.totalorder %s141, %s143
      %p147 = scmp.eq.s32.totalorder %s25, 0
      %p148 = por %p146, %p147
      %p149 = scmp.ne.s32.totalorder %s141, %s143
      %p150 = scmp.eq.s32.totalorder %s30, 1
      %p151 = por %p149, %p150
      %p152 = scmp.ne.s32.totalorder %s143, %s144
      %p153 = scmp.eq.s32.totalorder %s30, 0
      %p154 = por %p152, %p153
      %p155 = scmp.ne.s32.totalorder %s143, %s144
      %p156 = scmp.eq.s32.totalorder %s31, 1
      %p157 = por %p155, %p156
      %p159 = scmp.ne.s32.totalorder %s144, %s158
      %p160 = scmp.eq.s32.totalorder %s31, 0
      %p161 = por %p159, %p160
      %s163 = sadd.s32 %s162, 1
      %p166 = scmp.eq.s32.totalorder %s25, 1
      %p167 = scmp.ne.s32.totalorder %s162, %s164
      %p168 = scmp.eq.s32.totalorder %s25, 0
      %p169 = por %p167, %p168
      %p170 = scmp.ne.s32.totalorder %s162, %s164
      %p171 = scmp.eq.s32.totalorder %s30, 1
      %p172 = por %p170, %p171
      %p173 = scmp.ne.s32.totalorder %s164, %s165
      %p174 = scmp.eq.s32.totalorder %s30, 0
      %p175 = por %p173, %p174
      %p176 = scmp.ne.s32.totalorder %s164, %s165
      %p177 = scmp.eq.s32.totalorder %s31, 1
      %p178 = por %p176, %p177
      %p180 = scmp.ne.s32.totalorder %s165, %s179
      %p181 = scmp.eq.s32.totalorder %s31, 0
      %p182 = por %p180, %p181
      %s184 = sadd.s32 %s183, 1
      %p187 = scmp.eq.s32.totalorder %s25, 1
      %p188 = scmp.ne.s32.totalorder %s183, %s185
      %p189 = scmp.eq.s32.totalorder %s25, 0
      %p190 = por %p188, %p189
      %p191 = scmp.ne.s32.totalorder %s183, %s185
      %p192 = scmp.eq.s32.totalorder %s30, 1
      %p193 = por %p191, %p192
      %p194 = scmp.ne.s32.totalorder %s185, %s186
      %p195 = scmp.eq.s32.totalorder %s30, 0
      %p196 = por %p194, %p195
      %p197 = scmp.ne.s32.totalorder %s185, %s186
      %p198 = scmp.eq.s32.totalorder %s31, 1
      %p199 = por %p197, %p198
      %p201 = scmp.ne.s32.totalorder %s186, %s200
      %p202 = scmp.eq.s32.totalorder %s31, 0
      %p203 = por %p201, %p202
      %s205 = sadd.s32 %s204, 1
      %p208 = scmp.eq.s32.totalorder %s25, 1
      %p209 = scmp.ne.s32.totalorder %s204, %s206
      %p210 = scmp.eq.s32.totalorder %s25, 0
      %p211 = por %p209, %p210
      %p212 = scmp.ne.s32.totalorder %s204, %s206
      %p213 = scmp.eq.s32.totalorder %s30, 1
      %p214 = por %p212, %p213
      %p215 = scmp.ne.s32.totalorder %s206, %s207
      %p216 = scmp.eq.s32.totalorder %s30, 0
      %p217 = por %p215, %p216
      %p218 = scmp.ne.s32.totalorder %s206, %s207
      %p219 = scmp.eq.s32.totalorder %s31, 1
      %p220 = por %p218, %p219
      %p222 = scmp.ne.s32.totalorder %s207, %s221
      %p223 = scmp.eq.s32.totalorder %s31, 0
      %p224 = por %p222, %p223
      %s226 = sadd.s32 %s225, 1
      %p229 = scmp.eq.s32.totalorder %s25, 1
      %p230 = scmp.ne.s32.totalorder %s225, %s227
      %p231 = scmp.eq.s32.totalorder %s25, 0
      %p232 = por %p230, %p231
      %p233 = scmp.ne.s32.totalorder %s225, %s227
      %p234 = scmp.eq.s32.totalorder %s30, 1
      %p235 = por %p233, %p234
      %p236 = scmp.ne.s32.totalorder %s227, %s228
      %p237 = scmp.eq.s32.totalorder %s30, 0
      %p238 = por %p236, %p237
      %p239 = scmp.ne.s32.totalorder %s227, %s228
      %p240 = scmp.eq.s32.totalorder %s31, 1
      %p241 = por %p239, %p240
      %p243 = scmp.ne.s32.totalorder %s228, %s242
      %p244 = scmp.eq.s32.totalorder %s31, 0
      %p245 = por %p243, %p244
      %s247 = sadd.s32 %s246, 1
      %p250 = scmp.eq.s32.totalorder %s25, 1
      %p251 = scmp.ne.s32.totalorder %s246, %s248
      %p252 = scmp.eq.s32.totalorder %s25, 0
      %p253 = por %p251, %p252
      %p254 = scmp.ne.s32.totalorder %s246, %s248
      %p255 = scmp.eq.s32.totalorder %s30, 1
      %p256 = por %p254, %p255
      %p257 = scmp.ne.s32.totalorder %s248, %s249
      %p258 = scmp.eq.s32.totalorder %s30, 0
      %p259 = por %p257, %p258
      %p260 = scmp.ne.s32.totalorder %s248, %s249
      %p261 = scmp.eq.s32.totalorder %s31, 1
      %p262 = por %p260, %p261
      %p264 = scmp.ne.s32.totalorder %s249, %s263
      %p265 = scmp.eq.s32.totalorder %s31, 0
      %p266 = por %p264, %p265
      %s268 = sadd.s32 %s267, 1
      %p271 = scmp.eq.s32.totalorder %s25, 1
      %p272 = scmp.ne.s32.totalorder %s267, %s269
      %p273 = scmp.eq.s32.totalorder %s25, 0
      %p274 = por %p272, %p273
      %p275 = scmp.ne.s32.totalorder %s267, %s269
      %p276 = scmp.eq.s32.totalorder %s30, 1
      %p277 = por %p275, %p276
      %p278 = scmp.ne.s32.totalorder %s269, %s270
      %p279 = scmp.eq.s32.totalorder %s30, 0
      %p280 = por %p278, %p279
      %p281 = scmp.ne.s32.totalorder %s269, %s270
      %p282 = scmp.eq.s32.totalorder %s31, 1
      %p283 = por %p281, %p282
      %p285 = scmp.ne.s32.totalorder %s270, %s284
      %p286 = scmp.eq.s32.totalorder %s31, 0
      %p287 = por %p285, %p286
      %s289 = sadd.s32 %s288, 1
      %p292 = scmp.eq.s32.totalorder %s25, 1
      %p293 = scmp.ne.s32.totalorder %s288, %s290
      %p294 = scmp.eq.s32.totalorder %s25, 0
      %p295 = por %p293, %p294
      %p296 = scmp.ne.s32.totalorder %s288, %s290
      %p297 = scmp.eq.s32.totalorder %s30, 1
      %p298 = por %p296, %p297
      %p299 = scmp.ne.s32.totalorder %s290, %s291
      %p300 = scmp.eq.s32.totalorder %s30, 0
      %p301 = por %p299, %p300
      %p302 = scmp.ne.s32.totalorder %s290, %s291
      %p303 = scmp.eq.s32.totalorder %s31, 1
      %p304 = por %p302, %p303
      %p306 = scmp.ne.s32.totalorder %s291, %s305
      %p307 = scmp.eq.s32.totalorder %s31, 0
      %p308 = por %p306, %p307
      %s309 = ssub.s32 %s32, %s44
      %s310 = ssub.s32 %s33, %s40
      %s311 = sor.u32 %s309, %s310
      %p312 = scmp.eq.s32.totalorder %s311, 0
      %s314 = sadd.s32 %s313, 1
      %s315 = scalar_select %p312, %s313, %s314
      %p318 = pneg %p312
      %p319 = scmp.eq.s32.totalorder %s25, 1
      %p320 = por %p318, %p319
      %p321 = scmp.ne.s32.totalorder %s313, %s316
      %p322 = scmp.eq.s32.totalorder %s25, 0
      %p323 = por %p321, %p322
      %p324 = scmp.ne.s32.totalorder %s313, %s316
      %p325 = scmp.eq.s32.totalorder %s30, 1
      %p326 = por %p324, %p325
      %p327 = scmp.ne.s32.totalorder %s316, %s317
      %p328 = scmp.eq.s32.totalorder %s30, 0
      %p329 = por %p327, %p328
      %p330 = scmp.ne.s32.totalorder %s316, %s317
      %p331 = scmp.eq.s32.totalorder %s31, 1
      %p332 = por %p330, %p331
      %p334 = scmp.ne.s32.totalorder %s317, %s333
      %p335 = scmp.eq.s32.totalorder %s31, 0
      %p336 = por %p334, %p335
      %p337 = scmp.le.s32.totalorder 1, %s25
      %p338 = scmp.lt.s32.totalorder %s25, 3
      %p339 = pnand %p337, %p338
      %p340 = pneg %p339
      // Predicated region
      $region9: #{tpu_custom_call.1} parent=5 // pred_check
        _
      $region10: #{tpu_custom_call.1} parent=5 // pred_check_branch
        %342 = sbr.rel (%p339) target = $region12
      $region11: #{tpu_custom_call.1} parent=5 // pred_region
        %s343 = ssub.s32 %s25, 1
        // Predicated region
        $region13: #{tpu_custom_call.1} parent=11 // pred_check
          %p344 = pneg %p112
        $region14: #{tpu_custom_call.1} parent=11 // pred_check_branch
          %346 = sbr.rel (%p344) target = $region16
        $region15: #{tpu_custom_call.1} parent=11 // pred_region
          _
        $region16: #{tpu_custom_call.1} parent=11 // pred_fallthru
          _
        // Predicated region
        $region17: #{tpu_custom_call.1} parent=11 // pred_check
          %p347 = pneg %p133
        $region18: #{tpu_custom_call.1} parent=11 // pred_check_branch
          %349 = sbr.rel (%p347) target = $region20
        $region19: #{tpu_custom_call.1} parent=11 // pred_region
          _
        $region20: #{tpu_custom_call.1} parent=11 // pred_fallthru
          _
        // Predicated region
        $region21: #{tpu_custom_call.1} parent=11 // pred_check
          %p350 = pneg %p154
        $region22: #{tpu_custom_call.1} parent=11 // pred_check_branch
          %352 = sbr.rel (%p350) target = $region24
        $region23: #{tpu_custom_call.1} parent=11 // pred_region
          _
        $region24: #{tpu_custom_call.1} parent=11 // pred_fallthru
          _
        // Predicated region
        $region25: #{tpu_custom_call.1} parent=11 // pred_check
          %p353 = pneg %p175
        $region26: #{tpu_custom_call.1} parent=11 // pred_check_branch
          %355 = sbr.rel (%p353) target = $region28
        $region27: #{tpu_custom_call.1} parent=11 // pred_region
          _
        $region28: #{tpu_custom_call.1} parent=11 // pred_fallthru
          _
        // Predicated region
        $region29: #{tpu_custom_call.1} parent=11 // pred_check
          %p356 = pneg %p196
        $region30: #{tpu_custom_call.1} parent=11 // pred_check_branch
          %358 = sbr.rel (%p356) target = $region32
        $region31: #{tpu_custom_call.1} parent=11 // pred_region
          %360 = vsyncadd [#allocation8], 0
          %s361 = sshll.u32 %s6, 4
          %s362 = int_to_ptr.hbm [resolvable:$true] %s361
          %s363 = sshll.u32 [#allocation7], 4
          %s364 = int_to_ptr.vmem [resolvable:$true] %s363
          %369 = dma.hbm_to_vmem [thread:$0]  %s362, 256, %s364, [#allocation8], 64, 64, 4
        $region32: #{tpu_custom_call.1} parent=11 // pred_fallthru
          _
        // Predicated region
        $region33: #{tpu_custom_call.1} parent=11 // pred_check
          %p370 = pneg %p217
        $region34: #{tpu_custom_call.1} parent=11 // pred_check_branch
          %372 = sbr.rel (%p370) target = $region36
        $region35: #{tpu_custom_call.1} parent=11 // pred_region
          _
        $region36: #{tpu_custom_call.1} parent=11 // pred_fallthru
          _
        // Predicated region
        $region37: #{tpu_custom_call.1} parent=11 // pred_check
          %p373 = pneg %p238
        $region38: #{tpu_custom_call.1} parent=11 // pred_check_branch
          %375 = sbr.rel (%p373) target = $region40
        $region39: #{tpu_custom_call.1} parent=11 // pred_region
          _
        $region40: #{tpu_custom_call.1} parent=11 // pred_fallthru
          _
        // Predicated region
        $region41: #{tpu_custom_call.1} parent=11 // pred_check
          %p376 = pneg %p259
        $region42: #{tpu_custom_call.1} parent=11 // pred_check_branch
          %378 = sbr.rel (%p376) target = $region44
        $region43: #{tpu_custom_call.1} parent=11 // pred_region
          _
        $region44: #{tpu_custom_call.1} parent=11 // pred_fallthru
          _
        // Predicated region
        $region45: #{tpu_custom_call.1} parent=11 // pred_check
          %p379 = pneg %p280
        $region46: #{tpu_custom_call.1} parent=11 // pred_check_branch
          %381 = sbr.rel (%p379) target = $region48
        $region47: #{tpu_custom_call.1} parent=11 // pred_region
          _
        $region48: #{tpu_custom_call.1} parent=11 // pred_fallthru
          _
        // Predicated region
        $region49: #{tpu_custom_call.1} parent=11 // pred_check
          %p382 = pneg %p301
        $region50: #{tpu_custom_call.1} parent=11 // pred_check_branch
          %384 = sbr.rel (%p382) target = $region52
        $region51: #{tpu_custom_call.1} parent=11 // pred_region
          _
        $region52: #{tpu_custom_call.1} parent=11 // pred_fallthru
          _
      $region12: #{tpu_custom_call.1} parent=5 // pred_fallthru
        _
      %p385 = scmp.lt.s32.totalorder %s25, 2
      // Predicated region
      $region53: #{tpu_custom_call.1} parent=5 // pred_check
        %p386 = pneg %p385
      $region54: #{tpu_custom_call.1} parent=5 // pred_check_branch
        %388 = sbr.rel (%p386) target = $region56
      $region55: #{tpu_custom_call.1} parent=5 // pred_region
        // Predicated region
        $region57: #{tpu_custom_call.1} parent=55 // pred_check
          %p389 = pneg %p59
        $region58: #{tpu_custom_call.1} parent=55 // pred_check_branch
          %391 = sbr.rel (%p389) target = $region60
        $region59: #{tpu_custom_call.1} parent=55 // pred_region
          %p392 = scmp.lt.s32.totalorder %s32, 1
          %s393 = scalar_select %p392, %s32, 1
          %p394 = scmp.lt.s32.totalorder %s33, 0
          %s395 = scalar_select %p394, %s33, 0
          %s396 = sadd.s32 %s395, %s393
          %s397 = smul.addr %s396, 8
          %s398 = scalar_lea.vmem %s0, %s397
        $region60: #{tpu_custom_call.1} parent=55 // pred_fallthru
          _
        // Predicated region
        $region61: #{tpu_custom_call.1} parent=55 // pred_check
          %p399 = pneg %p85
        $region62: #{tpu_custom_call.1} parent=55 // pred_check_branch
          %401 = sbr.rel (%p399) target = $region64
        $region63: #{tpu_custom_call.1} parent=55 // pred_region
          %s402 = sand.u32 %s75, 1
          %s403 = scalar_lea.sflag [#allocation5], %s402
          %s404 = sand.u32 %s75, 1
          %s405 = smul.addr %s404, 4
          %s406 = scalar_lea.vmem [#allocation4], %s405
          %408 = vsyncadd %s403, 0
          %s409 = smul.addr %s32, 4
          %s410 = scalar_lea.hbm %s1, %s409
          %s412 = sshll.u32 %s410, 4
          %s413 = int_to_ptr.hbm [resolvable:$true] %s412
          %s414 = sshll.u32 %s406, 4
          %s415 = int_to_ptr.vmem [resolvable:$true] %s414
          %417 = dma.hbm_to_vmem [thread:$0]  %s413, 64, %s415, %s403
        $region64: #{tpu_custom_call.1} parent=55 // pred_fallthru
          _
      $region56: #{tpu_custom_call.1} parent=5 // pred_fallthru
        _
      %p418 = scmp.le.s32.totalorder 1, %s25
      %p419 = scmp.lt.s32.totalorder %s25, 3
      %p420 = pnand %p418, %p419
      %p421 = pneg %p420
      // Predicated region
      $region65: #{tpu_custom_call.1} parent=5 // pred_check
        _
      $region66: #{tpu_custom_call.1} parent=5 // pred_check_branch
        %423 = sbr.rel (%p420) target = $region68
      $region67: #{tpu_custom_call.1} parent=5 // pred_region
        %s424 = ssub.s32 %s25, 1
        %s425 = sand.u32 %s78, 1
        %s426 = scalar_lea.sflag [#allocation5], %s425
        %s427 = sand.u32 %s78, 1
        %s428 = smul.addr %s427, 4
        %s429 = scalar_lea.vmem [#allocation4], %s428
        // Predicated region
        $region69: #{tpu_custom_call.1} parent=67 // pred_check
          %p430 = pneg %p91
        $region70: #{tpu_custom_call.1} parent=67 // pred_check_branch
          %432 = sbr.rel (%p430) target = $region72
        $region71: #{tpu_custom_call.1} parent=67 // pred_region
          %434 = dma.done %s426, 64
        $region72: #{tpu_custom_call.1} parent=67 // pred_fallthru
          _
        // Predicated region
        $region73: #{tpu_custom_call.1} parent=67 // pred_check
          %p435 = pneg %p196
        $region74: #{tpu_custom_call.1} parent=67 // pred_check_branch
          %437 = sbr.rel (%p435) target = $region76
        $region75: #{tpu_custom_call.1} parent=67 // pred_region
          %439 = dma.done [#allocation8], 256
        $region76: #{tpu_custom_call.1} parent=67 // pred_fallthru
          _
        %p440 = scmp.lt.s32.totalorder %s34, 1
        %s441 = scalar_select %p440, %s34, 1
        %p442 = scmp.lt.s32.totalorder %s35, 0
        %s443 = scalar_select %p442, %s35, 0
        %s444 = sadd.s32 %s443, %s441
        %s445 = smul.addr %s444, 8
        %s446 = scalar_lea.vmem %s0, %s445
        %p447 = pneg %p65
        %p448 = pneg %p62
        %s449 = sand.u32 %s78, 1
        %s450 = scalar_lea.sflag [#allocation5], %s449
        %s451 = sand.u32 %s78, 1
        %s452 = smul.addr %s451, 4
        %s453 = scalar_lea.vmem [#allocation4], %s452
        %p454 = pneg %p91
        %p455 = pneg %p88
        %p456 = pneg %p112
        %p457 = pneg %p109
        %p458 = pneg %p133
        %p459 = pneg %p130
        %p460 = pneg %p154
        %p461 = pneg %p151
        %p462 = pneg %p175
        %p463 = pneg %p172
        %p464 = pneg %p196
        %p465 = pneg %p193
        %p466 = pneg %p217
        %p467 = pneg %p214
        %p468 = pneg %p238
        %p469 = pneg %p235
        %p470 = pneg %p259
        %p471 = pneg %p256
        %p472 = pneg %p280
        %p473 = pneg %p277
        %p474 = pneg %p301
        %p475 = pneg %p298
        %p476 = pneg %p329
        %p477 = pneg %p326
        %s478 = sand.u32 %s316, 1
        %s479 = scalar_lea.sflag [#allocation6], %s478
        %s480 = sand.u32 %s316, 1
        %s481 = smul.addr %s480, 8
        %s482 = scalar_lea.vmem [#allocation9], %s481
        %p483 = scmp.lt.s32.totalorder %s34, 1
        %s484 = scalar_select %p483, %s34, 1
        %p485 = scmp.lt.s32.totalorder %s35, 0
        %s486 = scalar_select %p485, %s35, 0
        %s487 = sadd.s32 %s486, %s484
        %s488 = smul.addr %s487, 8
        %s489 = scalar_lea.vmem %s0, %s488
        %p491 = scmp.eq.s32.totalorder %s35, 0
        // Predicated region
        $region77: #{tpu_custom_call.1} parent=67 // pred_check
          %p492 = pneg %p491
        $region78: #{tpu_custom_call.1} parent=67 // pred_check_branch
          %494 = sbr.rel (%p492) target = $region80
        $region79: #{tpu_custom_call.1} parent=67 // pred_region
          %v495 = vld [vmem:[%s429] sm:$0xf]
          %v496 = vld [vmem:[%s4] sm:$0xf]
          %v497 = vld [vmem:[%s4 + $0x4] sm:$0xf]
          %v498 = vld [vmem:[%s4 + $0x8] sm:$0xf]
          %v499 = vld [vmem:[%s4 + $0xc] sm:$0xf]
          %v500 = vld [vmem:[%s5] sm:$0x1]
          %v502 = vperm.slane %v500, 0
          %v508 = vunpack.c.l.b16 %v496
          %v509 = vunpack.c.l.b16 %v497
          %v510 = vunpack.c.l.b16 %v498
          %v511 = vunpack.c.l.b16 %v499
          %v512 = vpack.c.b16 %v509, %v508
          %v513 = vpack.c.b16 %v511, %v510
          %vm516 = vcmask 261120
          %v518 = vsel %vm516, %v495, 0
          %520 = vmatpush.bf16.msra.mxu0 0
          %521 = vmatpush.bf16.msra.mxu0 0
          %522 = vmatpush.bf16.msra.mxu0 0
          %523 = vmatpush.bf16.msra.mxu0 0
          %524 = vmatpush.bf16.msra.mxu0 0
          %525 = vmatpush.bf16.msra.mxu0 0
          %526 = vmatpush.bf16.msra.mxu0 %v513
          %527 = vmatpush.bf16.msra.mxu0 %v512
          %528 = vmatmul.bf16.gmra.mxu0 %v518
          %v529 = vpop.f32.mrf.mxu0
          %v530 = vadd.f32 %v502, %v529
          %v531 = vpop.f32.mrf.mxu0
          %532 = vdwg.mxu0
          %v533 = vpack.c.bf16 %v530, %v530
          %vm534 = vcmask 60416
          %535 = vst.msk [vmem:[#allocation2] sm:$0xf] %vm534, %v533
          %537 = vrot.lane.b32.xlu0 %v533, 96
          %v538 = vpop.permute.xlu0 %537
          %540 = vst.msk [vmem:[#allocation3] sm:$0xf] %vm534, %v538
          %541 = vrot.lane.b32.xlu0 %v533, 120
          %v542 = vpop.permute.xlu0 %541
          %s544 = scalar_lea.vmem [#allocation2], 4
          %545 = vst.msk [vmem:[%s544] sm:$0xf] %vm534, %v542
          %546 = vrot.lane.b32.xlu0 %v533, 88
          %v547 = vpop.permute.xlu0 %546
          %s549 = scalar_lea.vmem [#allocation3], 4
          %550 = vst.msk [vmem:[%s549] sm:$0xf] %vm534, %v547
          %551 = vrot.lane.b32.xlu0 %v533, 112
          %v552 = vpop.permute.xlu0 %551
          %s554 = scalar_lea.vmem [#allocation2], 8
          %555 = vst.msk [vmem:[%s554] sm:$0xf] %vm534, %v552
          %556 = vrot.lane.b32.xlu0 %v533, 80
          %v557 = vpop.permute.xlu0 %556
          %s559 = scalar_lea.vmem [#allocation3], 8
          %560 = vst.msk [vmem:[%s559] sm:$0xf] %vm534, %v557
          %561 = vrot.lane.b32.xlu0 %v533, 104
          %v562 = vpop.permute.xlu0 %561
          %s564 = scalar_lea.vmem [#allocation2], 12
          %565 = vst.msk [vmem:[%s564] sm:$0xf] %vm534, %v562
          %566 = vrot.lane.b32.xlu0 %v533, 72
          %v567 = vpop.permute.xlu0 %566
          %s569 = scalar_lea.vmem [#allocation3], 12
          %570 = vst.msk [vmem:[%s569] sm:$0xf] %vm534, %v567
        $region80: #{tpu_custom_call.1} parent=67 // pred_fallthru
          _
        %v571 = vld [vmem:[%s489] sm:$0xff]
        %v572 = vpack.c.bf16 %v571, %v571
        %v573 = vld [vmem:[%s2] sm:$0xf]
        %v574 = vld [vmem:[%s2 + $0x4] sm:$0xf]
        %v575 = vld [vmem:[%s2 + $0x8] sm:$0xf]
        %v576 = vld [vmem:[%s2 + $0xc] sm:$0xf]
        %v577 = vld [vmem:[%s3] sm:$0x1]
        %v579 = vperm.slane %v577, 0
        %v585 = vunpack.c.l.b16 %v573
        %v586 = vunpack.c.l.b16 %v574
        %v587 = vunpack.c.l.b16 %v575
        %v588 = vunpack.c.l.b16 %v576
        %v589 = vpack.c.b16 %v586, %v585
        %v590 = vpack.c.b16 %v588, %v587
        %vm593 = vcmask 261120
        %v595 = vsel %vm593, %v572, 0
        %597 = vmatpush.bf16.msra.mxu0 0
        %598 = vmatpush.bf16.msra.mxu0 0
        %599 = vmatpush.bf16.msra.mxu0 0
        %600 = vmatpush.bf16.msra.mxu0 0
        %601 = vmatpush.bf16.msra.mxu0 0
        %602 = vmatpush.bf16.msra.mxu0 0
        %603 = vmatpush.bf16.msra.mxu0 %v590
        %604 = vmatpush.bf16.msra.mxu0 %v589
        %605 = vmatmul.bf16.gmra.mxu0 %v595
        %v606 = vpop.f32.mrf.mxu0
        %v607 = vadd.f32 %v579, %v606
        %v608 = vpop.f32.mrf.mxu0
        %609 = vdwg.mxu0
        %611 = vrot.lane.b32.xlu0 %v607, 120
        %v612 = vpop.permute.xlu0 %611
        %614 = vrot.lane.b32.xlu0 %v607, 112
        %v615 = vpop.permute.xlu0 %614
        %617 = vrot.lane.b32.xlu0 %v607, 104
        %v618 = vpop.permute.xlu0 %617
        %v620 = vpack.c.bf16 %v607, %v607
        %v621 = vpack.c.bf16 %v612, %v612
        %v622 = vpack.c.bf16 %v615, %v615
        %v623 = vpack.c.bf16 %v618, %v618
        %v624 = vld [vmem:[#allocation2] sm:$0xf]
        %v625 = vld [vmem:[#allocation2 + $0x4] sm:$0xf]
        %v626 = vld [vmem:[#allocation2 + $0x8] sm:$0xf]
        %v627 = vld [vmem:[#allocation2 + $0xc] sm:$0xf]
        %v628 = vld [vmem:[#allocation3] sm:$0xf]
        %v629 = vld [vmem:[#allocation3 + $0x4] sm:$0xf]
        %v630 = vld [vmem:[#allocation3 + $0x8] sm:$0xf]
        %v631 = vld [vmem:[#allocation3 + $0xc] sm:$0xf]
        %vm632 = vcmask 64512
        %v634 = vsel %vm632, %v620, 0
        %v637 = vsel %vm632, %v624, 0
        %639 = vmatpush.bf16.xpose.msra.mxu0 0
        %640 = vmatpush.bf16.xpose.msra.mxu0 0
        %641 = vmatpush.bf16.xpose.msra.mxu0 0
        %642 = vmatpush.bf16.xpose.msra.mxu0 0
        %643 = vmatpush.bf16.xpose.msra.mxu0 0
        %644 = vmatpush.bf16.xpose.msra.mxu0 0
        %645 = vmatpush.bf16.xpose.msra.mxu0 0
        %646 = vmatpush.bf16.xpose.msra.mxu0 %v637
        %647 = vmatmul.bf16.gmra.mxu0 %v634
        %v648 = vpop.f32.mrf.mxu0
        %v649 = vadd.f32 0.0, %v648
        %v650 = vpop.f32.mrf.mxu0
        %651 = vdwg.mxu0
        %v653 = vsel %vm632, %v621, 0
        %v656 = vsel %vm632, %v625, 0
        %658 = vmatpush.bf16.xpose.msra.mxu0 0
        %659 = vmatpush.bf16.xpose.msra.mxu0 0
        %660 = vmatpush.bf16.xpose.msra.mxu0 0
        %661 = vmatpush.bf16.xpose.msra.mxu0 0
        %662 = vmatpush.bf16.xpose.msra.mxu0 0
        %663 = vmatpush.bf16.xpose.msra.mxu0 0
        %664 = vmatpush.bf16.xpose.msra.mxu0 0
        %665 = vmatpush.bf16.xpose.msra.mxu0 %v656
        %666 = vmatmul.bf16.gmra.mxu0 %v653
        %v667 = vpop.f32.mrf.mxu0
        %v668 = vadd.f32 0.0, %v667
        %v669 = vpop.f32.mrf.mxu0
        %670 = vdwg.mxu0
        %v672 = vsel %vm632, %v622, 0
        %v675 = vsel %vm632, %v626, 0
        %677 = vmatpush.bf16.xpose.msra.mxu0 0
        %678 = vmatpush.bf16.xpose.msra.mxu0 0
        %679 = vmatpush.bf16.xpose.msra.mxu0 0
        %680 = vmatpush.bf16.xpose.msra.mxu0 0
        %681 = vmatpush.bf16.xpose.msra.mxu0 0
        %682 = vmatpush.bf16.xpose.msra.mxu0 0
        %683 = vmatpush.bf16.xpose.msra.mxu0 0
        %684 = vmatpush.bf16.xpose.msra.mxu0 %v675
        %685 = vmatmul.bf16.gmra.mxu0 %v672
        %v686 = vpop.f32.mrf.mxu0
        %v687 = vadd.f32 0.0, %v686
        %v688 = vpop.f32.mrf.mxu0
        %689 = vdwg.mxu0
        %v691 = vsel %vm632, %v623, 0
        %v694 = vsel %vm632, %v627, 0
        %696 = vmatpush.bf16.xpose.msra.mxu0 0
        %697 = vmatpush.bf16.xpose.msra.mxu0 0
        %698 = vmatpush.bf16.xpose.msra.mxu0 0
        %699 = vmatpush.bf16.xpose.msra.mxu0 0
        %700 = vmatpush.bf16.xpose.msra.mxu0 0
        %701 = vmatpush.bf16.xpose.msra.mxu0 0
        %702 = vmatpush.bf16.xpose.msra.mxu0 0
        %703 = vmatpush.bf16.xpose.msra.mxu0 %v694
        %704 = vmatmul.bf16.gmra.mxu0 %v691
        %v705 = vpop.f32.mrf.mxu0
        %v706 = vadd.f32 0.0, %v705
        %v707 = vpop.f32.mrf.mxu0
        %708 = vdwg.mxu0
        %v709 = vsel %vm632, %v649, -inf
        %710 = vmax.xlane.f32.xlu0 %v709
        %v711 = vpop.xlane.xlu0 %710
        %v712 = vsel %vm632, %v668, -inf
        %713 = vmax.xlane.f32.xlu0 %v712
        %v714 = vpop.xlane.xlu0 %713
        %v715 = vsel %vm632, %v687, -inf
        %716 = vmax.xlane.f32.xlu0 %v715
        %v717 = vpop.xlane.xlu0 %716
        %v718 = vsel %vm632, %v706, -inf
        %719 = vmax.xlane.f32.xlu0 %v718
        %v720 = vpop.xlane.xlu0 %719
        %v721 = vsub.f32 -inf, %v711
        %v722 = vsub.f32 -inf, %v714
        %v723 = vsub.f32 -inf, %v717
        %v724 = vsub.f32 -inf, %v720
        %v725 = vmul.f32 %v721, 1.442695
        %v726 = vpow.pop %v725
        %v727 = vmul.f32 %v722, 1.442695
        %v728 = vpow.pop %v727
        %v729 = vmul.f32 %v723, 1.442695
        %v730 = vpow.pop %v729
        %v731 = vmul.f32 %v724, 1.442695
        %v732 = vpow.pop %v731
        %v733 = vsub.f32 %v649, %v711
        %v734 = vsub.f32 %v668, %v714
        %v735 = vsub.f32 %v687, %v717
        %v736 = vsub.f32 %v706, %v720
        %v737 = vmul.f32 %v733, 1.442695
        %v738 = vpow.pop %v737
        %v739 = vmul.f32 %v734, 1.442695
        %v740 = vpow.pop %v739
        %v741 = vmul.f32 %v735, 1.442695
        %v742 = vpow.pop %v741
        %v743 = vmul.f32 %v736, 1.442695
        %v744 = vpow.pop %v743
        %v745 = vmul.f32 %v726, 0.0
        %v746 = vmul.f32 %v728, 0.0
        %v747 = vmul.f32 %v730, 0.0
        %v748 = vmul.f32 %v732, 0.0
        %v749 = vsel %vm632, %v738, 0.0
        %750 = vadd.xlane.f32.xlu0 %v749
        %v751 = vpop.xlane.xlu0 %750
        %v752 = vsel %vm632, %v740, 0.0
        %753 = vadd.xlane.f32.xlu0 %v752
        %v754 = vpop.xlane.xlu0 %753
        %v755 = vsel %vm632, %v742, 0.0
        %756 = vadd.xlane.f32.xlu0 %v755
        %v757 = vpop.xlane.xlu0 %756
        %v758 = vsel %vm632, %v744, 0.0
        %759 = vadd.xlane.f32.xlu0 %v758
        %v760 = vpop.xlane.xlu0 %759
        %v761 = vadd.f32 %v745, %v751
        %v762 = vadd.f32 %v746, %v754
        %v763 = vadd.f32 %v747, %v757
        %v764 = vadd.f32 %v748, %v760
        %v765 = vpack.c.bf16 %v738, %v738
        %v766 = vpack.c.bf16 %v740, %v740
        %v767 = vpack.c.bf16 %v742, %v742
        %v768 = vpack.c.bf16 %v744, %v744
        %v770 = vsel %vm632, %v765, 0
        %vm772 = vcmask 1043456
        %v774 = vsel %vm772, %v628, 0
        %776 = vmatpush.bf16.msra.mxu0 0
        %777 = vmatpush.bf16.msra.mxu0 0
        %778 = vmatpush.bf16.msra.mxu0 0
        %779 = vmatpush.bf16.msra.mxu0 0
        %780 = vmatpush.bf16.msra.mxu0 0
        %781 = vmatpush.bf16.msra.mxu0 0
        %782 = vmatpush.bf16.msra.mxu0 0
        %783 = vmatpush.bf16.msra.mxu0 %v774
        %784 = vmatmul.bf16.gmra.mxu0 %v770
        %v785 = vpop.f32.mrf.mxu0
        %v786 = vadd.f32 0.0, %v785
        %v787 = vpop.f32.mrf.mxu0
        %788 = vdwg.mxu0
        %v790 = vsel %vm632, %v766, 0
        %v793 = vsel %vm772, %v629, 0
        %795 = vmatpush.bf16.msra.mxu0 0
        %796 = vmatpush.bf16.msra.mxu0 0
        %797 = vmatpush.bf16.msra.mxu0 0
        %798 = vmatpush.bf16.msra.mxu0 0
        %799 = vmatpush.bf16.msra.mxu0 0
        %800 = vmatpush.bf16.msra.mxu0 0
        %801 = vmatpush.bf16.msra.mxu0 0
        %802 = vmatpush.bf16.msra.mxu0 %v793
        %803 = vmatmul.bf16.gmra.mxu0 %v790
        %v804 = vpop.f32.mrf.mxu0
        %v805 = vadd.f32 0.0, %v804
        %v806 = vpop.f32.mrf.mxu0
        %807 = vdwg.mxu0
        %v809 = vsel %vm632, %v767, 0
        %v812 = vsel %vm772, %v630, 0
        %814 = vmatpush.bf16.msra.mxu0 0
        %815 = vmatpush.bf16.msra.mxu0 0
        %816 = vmatpush.bf16.msra.mxu0 0
        %817 = vmatpush.bf16.msra.mxu0 0
        %818 = vmatpush.bf16.msra.mxu0 0
        %819 = vmatpush.bf16.msra.mxu0 0
        %820 = vmatpush.bf16.msra.mxu0 0
        %821 = vmatpush.bf16.msra.mxu0 %v812
        %822 = vmatmul.bf16.gmra.mxu0 %v809
        %v823 = vpop.f32.mrf.mxu0
        %v824 = vadd.f32 0.0, %v823
        %v825 = vpop.f32.mrf.mxu0
        %826 = vdwg.mxu0
        %v828 = vsel %vm632, %v768, 0
        %v831 = vsel %vm772, %v631, 0
        %833 = vmatpush.bf16.msra.mxu0 0
        %834 = vmatpush.bf16.msra.mxu0 0
        %835 = vmatpush.bf16.msra.mxu0 0
        %836 = vmatpush.bf16.msra.mxu0 0
        %837 = vmatpush.bf16.msra.mxu0 0
        %838 = vmatpush.bf16.msra.mxu0 0
        %839 = vmatpush.bf16.msra.mxu0 0
        %840 = vmatpush.bf16.msra.mxu0 %v831
        %841 = vmatmul.bf16.gmra.mxu0 %v828
        %v842 = vpop.f32.mrf.mxu0
        %v843 = vadd.f32 0.0, %v842
        %v844 = vpop.f32.mrf.mxu0
        %845 = vdwg.mxu0
        %v846 = vadd.f32 %v745, %v786
        %v847 = vadd.f32 %v746, %v805
        %v848 = vadd.f32 %v747, %v824
        %v849 = vadd.f32 %v748, %v843
        %v850 = vrcp.pop %v761
        %v851 = vrcp.pop %v762
        %v852 = vrcp.pop %v763
        %v853 = vrcp.pop %v764
        %v854 = vmul.f32 %v846, %v850
        %v855 = vmul.f32 %v847, %v851
        %v856 = vmul.f32 %v848, %v852
        %v857 = vmul.f32 %v849, %v853
        %859 = vrot.lane.b32.xlu0 %v855, 8
        %v860 = vpop.permute.xlu0 %859
        %863 = vrot.lane.b32.xlu0 %v856, 16
        %v864 = vpop.permute.xlu0 %863
        %867 = vrot.lane.b32.xlu0 %v857, 24
        %v868 = vpop.permute.xlu0 %867
        %v870 = vsel %vm632, %v854, %v860
        %vm871 = vcmask 130048
        %v872 = vsel %vm871, %v870, %v864
        %vm873 = vcmask 195584
        %v874 = vsel %vm873, %v872, %v868
        %v875 = vpack.c.bf16 %v874, %v874
        %v876 = vld [vmem:[#allocation7] sm:$0xf]
        %v877 = vld [vmem:[#allocation7 + $0x4] sm:$0xf]
        %v878 = vld [vmem:[#allocation7 + $0x8] sm:$0xf]
        %v879 = vld [vmem:[#allocation7 + $0xc] sm:$0xf]
        %v880 = vld [vmem:[%s7] sm:$0x1]
        %v882 = vperm.slane %v880, 0
        %v888 = vunpack.c.l.b16 %v876
        %v889 = vunpack.c.l.b16 %v877
        %v890 = vunpack.c.l.b16 %v878
        %v891 = vunpack.c.l.b16 %v879
        %v892 = vpack.c.b16 %v889, %v888
        %v893 = vpack.c.b16 %v891, %v890
        %v897 = vsel %vm593, %v875, 0
        %899 = vmatpush.bf16.msra.mxu0 0
        %900 = vmatpush.bf16.msra.mxu0 0
        %901 = vmatpush.bf16.msra.mxu0 0
        %902 = vmatpush.bf16.msra.mxu0 0
        %903 = vmatpush.bf16.msra.mxu0 0
        %904 = vmatpush.bf16.msra.mxu0 0
        %905 = vmatpush.bf16.msra.mxu0 %v893
        %906 = vmatpush.bf16.msra.mxu0 %v892
        %907 = vmatmul.bf16.gmra.mxu0 %v897
        %v908 = vpop.f32.mrf.mxu0
        %v909 = vadd.f32 %v882, %v908
        %v910 = vpop.f32.mrf.mxu0
        %911 = vdwg.mxu0
        %v912 = vadd.f32 %v571, %v909
        %v913 = vld [vmem:[%s8] sm:$0x1]
        %v914 = vmul.f32 %v912, %v912
        %v915 = vsel %vm593, %v914, 0.0
        %916 = vadd.xlane.f32.xlu0 %v915
        %v917 = vpop.xlane.xlu0 %916
        %v918 = vrcp.pop 32.0
        %v919 = vmul.f32 32.0, %v918
        %v920 = vsub.f32 1.0, %v919
        %v921 = vmul.f32 %v918, %v920
        %v922 = vadd.f32 %v918, %v921
        %vm923 = vweird.f32 %v918
        %v924 = vsel %vm923, %v918, %v922
        %v925 = vmul.f32 %v917, %v924
        %v926 = vadd.f32 %v925, 1e-05
        %v927 = vrsqrt.pop %v926
        %v928 = vmul.f32 %v927, %v926
        %v929 = vmul.f32 %v928, %v927
        %v930 = vmul.f32 0.5, %v929
        %v931 = vsub.f32 1.5, %v930
        %v932 = vmul.f32 %v927, %v931
        %vm933 = vweird.f32 %v926
        %vm934 = vweird.f32 %v927
        %vm935 = vmor %vm933, %vm934
        %v936 = vsel %vm935, %v927, %v932
        %v937 = vmul.f32 %v912, %v936
        %v939 = vperm.slane %v913, 0
        %v941 = vmul.f32 %v939, %v937
        %v942 = vpack.c.bf16 %v941, %v941
        %v943 = vld [vmem:[%s9] sm:$0xff]
        %v944 = vld [vmem:[%s9 + $0x8] sm:$0xff]
        %v945 = vld [vmem:[%s9 + $0x10] sm:$0xff]
        %v946 = vld [vmem:[%s9 + $0x18] sm:$0xff]
        %v951 = vunpack.c.l.b16 %v943
        %v952 = vunpack.c.h.b16 %v943
        %v953 = vunpack.c.l.b16 %v944
        %v954 = vunpack.c.h.b16 %v944
        %v955 = vunpack.c.l.b16 %v945
        %v956 = vunpack.c.h.b16 %v945
        %v957 = vunpack.c.l.b16 %v946
        %v958 = vunpack.c.h.b16 %v946
        %v959 = vpack.c.b16 %v953, %v951
        %v960 = vpack.c.b16 %v954, %v952
        %v961 = vpack.c.b16 %v957, %v955
        %v962 = vpack.c.b16 %v958, %v956
        %v968 = vsel %vm593, %v942, 0
        %970 = vmatpush.bf16.msra.mxu0 0
        %971 = vmatpush.bf16.msra.mxu0 0
        %972 = vmatpush.bf16.msra.mxu0 0
        %973 = vmatpush.bf16.msra.mxu0 0
        %974 = vmatpush.bf16.msra.mxu0 0
        %975 = vmatpush.bf16.msra.mxu0 0
        %976 = vmatpush.bf16.msra.mxu0 %v961
        %977 = vmatpush.bf16.msra.mxu0 %v959
        %978 = vmatmul.bf16.gmra.mxu0 %v968
        %v979 = vpop.f32.mrf.mxu0
        %v980 = vadd.f32 0.0, %v979
        %v981 = vpop.f32.mrf.mxu0
        %982 = vdwg.mxu0
        %983 = vmatpush.bf16.msra.mxu0 0
        %984 = vmatpush.bf16.msra.mxu0 0
        %985 = vmatpush.bf16.msra.mxu0 0
        %986 = vmatpush.bf16.msra.mxu0 0
        %987 = vmatpush.bf16.msra.mxu0 0
        %988 = vmatpush.bf16.msra.mxu0 0
        %989 = vmatpush.bf16.msra.mxu0 %v962
        %990 = vmatpush.bf16.msra.mxu0 %v960
        %991 = vmatmul.bf16.gmra.mxu0 %v968
        %v992 = vpop.f32.mrf.mxu0
        %v993 = vadd.f32 0.0, %v992
        %v994 = vpop.f32.mrf.mxu0
        %995 = vdwg.mxu0
        %v996 = vxor.u32 %v980, 2147483648
        %v997 = vmul.f32 %v996, 1.442695
        %v998 = vpow.pop %v997
        %v999 = vadd.f32 %v998, 1.0
        %v1000 = vrcp.pop %v999
        %v1001 = vmul.f32 %v999, %v1000
        %v1002 = vsub.f32 1.0, %v1001
        %v1003 = vmul.f32 %v1000, %v1002
        %v1004 = vadd.f32 %v1000, %v1003
        %vm1005 = vweird.f32 %v999
        %vm1006 = vweird.f32 %v1000
        %vm1007 = vmor %vm1005, %vm1006
        %v1008 = vsel %vm1007, %v1000, %v1004
        %v1009 = vand.u32 2147483647, %v999
        %vm1010 = vcmp.eq.f32.partialorder %v1009, 8.507059e+37
        %v1011 = vand.u32 %v999, 2147483648
        %v1012 = vor.u32 1.1754944e-38, %v1011
        %v1013 = vsel %vm1010, %v1012, %v1008
        %v1014 = vmul.f32 1.0, %v1013
        %v1015 = vmul.f32 %v980, %v1014
        %v1016 = vmul.f32 %v1015, %v993
        %v1017 = vpack.c.bf16 %v1016, %v1016
        %v1018 = vld [vmem:[%s10] sm:$0xf]
        %v1019 = vld [vmem:[%s10 + $0x4] sm:$0xf]
        %v1020 = vld [vmem:[%s10 + $0x8] sm:$0xf]
        %v1021 = vld [vmem:[%s10 + $0xc] sm:$0xf]
        %v1022 = vld [vmem:[%s10 + $0x10] sm:$0xf]
        %v1023 = vld [vmem:[%s10 + $0x14] sm:$0xf]
        %v1024 = vld [vmem:[%s10 + $0x18] sm:$0xf]
        %v1025 = vld [vmem:[%s10 + $0x1c] sm:$0xf]
        %v1026 = vld [vmem:[%s10 + $0x20] sm:$0xf]
        %v1027 = vld [vmem:[%s10 + $0x24] sm:$0xf]
        %v1028 = vld [vmem:[%s10 + $0x28] sm:$0xf]
        %v1029 = vld [vmem:[%s10 + $0x2c] sm:$0xf]
        %v1030 = vld [vmem:[%s10 + $0x30] sm:$0xf]
        %v1031 = vld [vmem:[%s10 + $0x34] sm:$0xf]
        %v1032 = vld [vmem:[%s10 + $0x38] sm:$0xf]
        %v1033 = vld [vmem:[%s10 + $0x3c] sm:$0xf]
        %v1050 = vunpack.c.l.b16 %v1018
        %v1051 = vunpack.c.l.b16 %v1019
        %v1052 = vunpack.c.l.b16 %v1020
        %v1053 = vunpack.c.l.b16 %v1021
        %v1054 = vunpack.c.l.b16 %v1022
        %v1055 = vunpack.c.l.b16 %v1023
        %v1056 = vunpack.c.l.b16 %v1024
        %v1057 = vunpack.c.l.b16 %v1025
        %v1058 = vunpack.c.l.b16 %v1026
        %v1059 = vunpack.c.l.b16 %v1027
        %v1060 = vunpack.c.l.b16 %v1028
        %v1061 = vunpack.c.l.b16 %v1029
        %v1062 = vunpack.c.l.b16 %v1030
        %v1063 = vunpack.c.l.b16 %v1031
        %v1064 = vunpack.c.l.b16 %v1032
        %v1065 = vunpack.c.l.b16 %v1033
        %v1066 = vpack.c.b16 %v1051, %v1050
        %v1067 = vpack.c.b16 %v1053, %v1052
        %v1068 = vpack.c.b16 %v1055, %v1054
        %v1069 = vpack.c.b16 %v1057, %v1056
        %v1070 = vpack.c.b16 %v1059, %v1058
        %v1071 = vpack.c.b16 %v1061, %v1060
        %v1072 = vpack.c.b16 %v1063, %v1062
        %v1073 = vpack.c.b16 %v1065, %v1064
        %1082 = vmatpush.bf16.msra.mxu0 %v1073
        %1083 = vmatpush.bf16.msra.mxu0 %v1072
        %1084 = vmatpush.bf16.msra.mxu0 %v1071
        %1085 = vmatpush.bf16.msra.mxu0 %v1070
        %1086 = vmatpush.bf16.msra.mxu0 %v1069
        %1087 = vmatpush.bf16.msra.mxu0 %v1068
        %1088 = vmatpush.bf16.msra.mxu0 %v1067
        %1089 = vmatpush.bf16.msra.mxu0 %v1066
        %1090 = vmatmul.bf16.gmra.mxu0 %v1017
        %v1091 = vpop.f32.mrf.mxu0
        %v1092 = vadd.f32 0.0, %v1091
        %v1093 = vpop.f32.mrf.mxu0
        %1094 = vdwg.mxu0
        %v1095 = vadd.f32 %v941, %v1092
        %v1096 = vld [vmem:[%s11] sm:$0x1]
        %v1097 = vmul.f32 %v1095, %v1095
        %v1098 = vsel %vm593, %v1097, 0.0
        %1099 = vadd.xlane.f32.xlu0 %v1098
        %v1100 = vpop.xlane.xlu0 %1099
        %v1101 = vmul.f32 %v1100, %v924
        %v1102 = vadd.f32 %v1101, 1e-05
        %v1103 = vrsqrt.pop %v1102
        %v1104 = vmul.f32 %v1103, %v1102
        %v1105 = vmul.f32 %v1104, %v1103
        %v1106 = vmul.f32 0.5, %v1105
        %v1107 = vsub.f32 1.5, %v1106
        %v1108 = vmul.f32 %v1103, %v1107
        %vm1109 = vweird.f32 %v1102
        %vm1110 = vweird.f32 %v1103
        %vm1111 = vmor %vm1109, %vm1110
        %v1112 = vsel %vm1111, %v1103, %v1108
        %v1113 = vmul.f32 %v1095, %v1112
        %v1115 = vperm.slane %v1096, 0
        %v1117 = vmul.f32 %v1115, %v1113
        %1118 = vst.msk [vmem:[%s482] sm:$0xff] %vm593, %v1117
        %s1119 = sand.u32 %s316, 1
        %s1120 = scalar_lea.sflag [#allocation6], %s1119
        %s1121 = sand.u32 %s316, 1
        %s1122 = smul.addr %s1121, 8
        %s1123 = scalar_lea.vmem [#allocation9], %s1122
        // Predicated region
        $region81: #{tpu_custom_call.1} parent=67 // pred_check
          %p1124 = pneg %p326
        $region82: #{tpu_custom_call.1} parent=67 // pred_check_branch
          %1126 = sbr.rel (%p1124) target = $region84
        $region83: #{tpu_custom_call.1} parent=67 // pred_region
          %1128 = vsyncadd %s1120, 0
          %s1129 = sadd.s32 %s35, %s34
          %s1130 = smul.addr %s1129, 8
          %s1131 = scalar_lea.hbm %s12, %s1130
          %s1133 = sshll.u32 %s1123, 4
          %s1134 = int_to_ptr.vmem [resolvable:$true] %s1133
          %s1135 = sshll.u32 %s1131, 4
          %s1136 = int_to_ptr.hbm [resolvable:$true] %s1135
          %1138 = dma.vmem_to_hbm [thread:$0]  %s1134, 128, %s1136, %s1120
        $region84: #{tpu_custom_call.1} parent=67 // pred_fallthru
          _
      $region68: #{tpu_custom_call.1} parent=5 // pred_fallthru
        _
      %p1139 = scmp.le.s32.totalorder 2, %s25
      // Predicated region
      $region85: #{tpu_custom_call.1} parent=5 // pred_check
        %p1140 = pneg %p1139
      $region86: #{tpu_custom_call.1} parent=5 // pred_check_branch
        %1142 = sbr.rel (%p1140) target = $region88
      $region87: #{tpu_custom_call.1} parent=5 // pred_region
        %s1143 = ssub.s32 %s25, 2
        // Predicated region
        $region89: #{tpu_custom_call.1} parent=87 // pred_check
          %p1144 = pneg %p332
        $region90: #{tpu_custom_call.1} parent=87 // pred_check_branch
          %1146 = sbr.rel (%p1144) target = $region92
        $region91: #{tpu_custom_call.1} parent=87 // pred_region
          %s1147 = sand.u32 %s317, 1
          %s1148 = scalar_lea.sflag [#allocation6], %s1147
          %s1149 = sand.u32 %s317, 1
          %s1150 = smul.addr %s1149, 8
          %s1151 = scalar_lea.vmem [#allocation9], %s1150
          %1153 = dma.done %s1148, 128
        $region92: #{tpu_custom_call.1} parent=87 // pred_fallthru
          _
      $region88: #{tpu_custom_call.1} parent=5 // pred_fallthru
        _
    $region6: #{tpu_custom_call.1} parent=1 // loop_footer
      %s29 = sadd.s32 1, %s25
    $region7: #{tpu_custom_call.1} parent=1 // loop_footer_branch
      %24 = sbr.rel target = $region3
    $region8: #{tpu_custom_call.1} parent=1 // loop_exit
      _
    %1154 = vsyncpa [#allocation5], 1
    %s1155 = scalar_lea.sflag [#allocation5], 1
    %1156 = vsyncpa %s1155, 1
    %1157 = vsyncpa [#allocation8], 1
    %1158 = vsyncpa [#allocation6], 1
    %s1159 = scalar_lea.sflag [#allocation6], 1
    %1160 = vsyncpa %s1159, 1

</llo_original>
